<compile_context>
chip_gen: v7x
topology: tpu7x:2x2x1
jax: 0.10.0
libtpu: 0.0.40
codegen_flags: <defaults>
</compile_context>

<pallas_src>
import math

import jax
import jax.numpy as jnp
from jax import lax
from jax.experimental import pallas as pl
from jax.experimental.pallas import tpu as pltpu

_LANE = 128
_SUBLANE = 8


def _classifier_kernel(x_ref,                           # (T, TB, D)   bf16
                       wih_f_ref, whh_f_ref, b_f_ref,   # (D,4H) bf16, (H,4H) bf16, (1,4H) f32
                       wih_r_ref, whh_r_ref, b_r_ref,   # reverse direction
                       wfc_ref, bfc_ref,                 # (2H,Cp) bf16, (1,Cp) f32
                       out_ref,                          # (T, TB, Cp)  f32
                       gates_f, gates_r,                 # (T, TB, 4H)  bf16 scratch
                       h_seq):                           # (T, TB, 2H)  bf16 scratch
    T, TB, D = x_ref.shape
    H = whh_f_ref.shape[0]
    Cp = out_ref.shape[-1]

    # ---- (1) Hoisted input projection: two large bf16 MXU matmuls over all timesteps ----
    x2d = x_ref[...].reshape(T * TB, D)
    gates_f[...] = (
        jnp.dot(x2d, wih_f_ref[...], preferred_element_type=jnp.float32)
        + b_f_ref[...]).astype(jnp.bfloat16).reshape(T, TB, 4 * H)
    gates_r[...] = (
        jnp.dot(x2d, wih_r_ref[...], preferred_element_type=jnp.float32)
        + b_r_ref[...]).astype(jnp.bfloat16).reshape(T, TB, 4 * H)

    # Hoist recurrent weights (bf16) out of the loop.
    whh_f = whh_f_ref[...]
    whh_r = whh_r_ref[...]

    def cell(pre, h, c, whh):
        # Gate columns were pre-permuted offline to [i, f, o, g]:
        # one wide sigmoid over the first 3H columns, one tanh over the last H.
        g = pre.astype(jnp.float32) + jnp.dot(
            h.astype(jnp.bfloat16), whh, preferred_element_type=jnp.float32)   # (TB, 4H) f32
        sig = jax.nn.sigmoid(g[:, :3 * H])
        i = sig[:, 0 * H:1 * H]
        f = sig[:, 1 * H:2 * H]
        o = sig[:, 2 * H:3 * H]
        gg = jnp.tanh(g[:, 3 * H:])
        c_new = f * c + i * gg                    # f32 cell state
        h_new = o * jnp.tanh(c_new)               # f32 hidden state
        return h_new, c_new

    # ---- (2) Fused forward + reverse recurrence; state kept in the loop carry ----
    def body(t, carry):
        hf, cf, hr, cr = carry
        tr = T - 1 - t
        hf_new, cf_new = cell(gates_f[t], hf, cf, whh_f)
        hr_new, cr_new = cell(gates_r[tr], hr, cr, whh_r)
        h_seq[t, :, :H] = hf_new.astype(jnp.bfloat16)
        h_seq[tr, :, H:] = hr_new.astype(jnp.bfloat16)
        return hf_new, cf_new, hr_new, cr_new

    zeros = jnp.zeros((TB, H), jnp.float32)
    unroll = T if T <= 16 else 8                  # full unroll only for short sequences
    lax.fori_loop(0, T, body, (zeros, zeros, zeros, zeros), unroll=unroll)

    # ---- (3) Dropout (eval mode => identity) + single flattened final projection ----
    # TODO(synk): training-mode dropout mask.
    h2d = h_seq[...].reshape(T * TB, 2 * H)                                   # bf16
    out2d = (jnp.dot(h2d, wfc_ref[...], preferred_element_type=jnp.float32)
             + bfc_ref[...])                                                  # (T*TB, Cp) f32
    out_ref[...] = out2d.reshape(T, TB, Cp).astype(out_ref.dtype)


def _round_up(x, m):
    return ((x + m - 1) // m) * m


def _permute_gate_cols(w):
    """Reorder the 4H gate axis from PyTorch [i,f,g,o] to kernel order [i,f,o,g]."""
    h = w.shape[-1] // 4
    return jnp.concatenate([w[..., :2 * h], w[..., 3 * h:], w[..., 2 * h:3 * h]], axis=-1)


def _pick_batch_tile(B, T, D, H, Cp):
    """Largest sublane-aligned batch tile that fits a per-generation VMEM budget.

    Prefers >= 2 grid tiles so both TensorCores get work on v7x; returns (tile, vmem_limit).
    """
    try:
        vmem_cap = int(pltpu.get_tpu_info().vmem_capacity_bytes)
    except Exception:
        vmem_cap = 64 * 1024 * 1024            # conservative default (v7x per-TC)

    # Grid-invariant cost: weights (pipeline double-buffers them) + f32 biases.
    weight_bytes = 2 * 2 * (2 * (D * 4 * H + H * 4 * H) + 2 * H * Cp)   # bf16, 2 buffers
    weight_bytes += (2 * 4 * H + Cp) * 4

    def tile_bytes(tb):
        gates = 2 * T * tb * 4 * H * 2         # bf16 fwd + rev gate scratch
        hseq = T * tb * 2 * H * 2              # bf16 hidden-state scratch
        xbuf = 2 * T * tb * D * 2              # bf16 x tile, double-buffered
        obuf = 2 * T * tb * Cp * 4             # f32 out tile, double-buffered
        tmp = 2 * T * tb * 4 * H * 4           # f32 matmul results before bf16 cast
        return gates + hseq + xbuf + obuf + tmp

    budget = int(vmem_cap * 0.55) - weight_bytes
    cands = [tb for tb in range(_SUBLANE, B + 1, _SUBLANE) if B % tb == 0] or [B]
    fitting = [tb for tb in cands if tile_bytes(tb) <= budget] or [min(cands)]
    multi = [tb for tb in fitting if B // tb >= 2]      # keep both v7x cores busy
    tb = max(multi) if multi else max(fitting)
    vmem_limit = int(min(vmem_cap,
                         max(tile_bytes(tb) + weight_bytes + (4 << 20), 32 << 20)))
    return tb, vmem_limit


@jax.jit
def classifier_forward(x, params):
    """x: (B, T, D) float32; returns (B, T, n_classes) float32 (eval-mode dropout)."""
    B, T, D = x.shape
    H = params['whh_f'].shape[0]
    C = params['wfc'].shape[1]
    Cp = _round_up(C, _LANE)                   # pad classifier dim -> unmasked lane-dense stores

    TB, vmem_limit = _pick_batch_tile(B, T, D, H, Cp)
    num_tiles = B // TB

    bf16 = jnp.bfloat16
    # bf16 MXU inputs; gate columns pre-permuted to [i,f,o,g]; ih/hh biases pre-summed (f32).
    wih_f = _permute_gate_cols(params['wih_f']).astype(bf16)
    whh_f = _permute_gate_cols(params['whh_f']).astype(bf16)
    b_f = _permute_gate_cols(params['b_f'])
    wih_r = _permute_gate_cols(params['wih_r']).astype(bf16)
    whh_r = _permute_gate_cols(params['whh_r']).astype(bf16)
    b_r = _permute_gate_cols(params['b_r'])
    wfc = jnp.pad(params['wfc'], ((0, 0), (0, Cp - C))).astype(bf16)     # (2H, Cp)
    bfc = jnp.pad(params['bfc'], ((0, 0), (0, Cp - C)))                  # (1, Cp) f32

    # Time-major relayout fused with the bf16 cast (half the transpose HBM traffic).
    # TODO(synk): move this relayout into the kernel (pltpu.einshape on the VMEM tile).
    x_tbd = jnp.transpose(x.astype(bf16), (1, 0, 2))                     # (T, B, D) bf16

    def full(shape):
        # Whole-array block (weights/biases), same block at every grid step.
        # TODO(synk): pipeline_mode=pl.Buffered(1) to single-buffer these grid-invariant refs.
        return pl.BlockSpec(shape, lambda b: tuple(0 for _ in shape))

    out = pl.pallas_call(
        _classifier_kernel,
        out_shape=jax.ShapeDtypeStruct((T, B, Cp), jnp.float32),
        grid=(num_tiles,),
        in_specs=[
            pl.BlockSpec((T, TB, D), lambda b: (0, b, 0)),               # x tile
            full((D, 4 * H)), full((H, 4 * H)), full((1, 4 * H)),
            full((D, 4 * H)), full((H, 4 * H)), full((1, 4 * H)),
            full((2 * H, Cp)), full((1, Cp)),
        ],
        out_specs=pl.BlockSpec((T, TB, Cp), lambda b: (0, b, 0)),
        scratch_shapes=[
            pltpu.VMEM((T, TB, 4 * H), bf16),    # precomputed fwd gate pre-activations
            pltpu.VMEM((T, TB, 4 * H), bf16),    # precomputed rev gate pre-activations
            pltpu.VMEM((T, TB, 2 * H), bf16),    # [hf | hr] hidden-state sequence
        ],
        compiler_params=pltpu.CompilerParams(
            dimension_semantics=("parallel",),
            vmem_limit_bytes=vmem_limit),
    )(x_tbd,
      wih_f, whh_f, b_f,
      wih_r, whh_r, b_r,
      wfc, bfc)

    return jnp.transpose(out[:, :, :C], (1, 0, 2))                       # (B, T, C)


def init_params(key, input_size, hidden_size, n_classes):
    """Deterministic init mirroring PyTorch LSTM/Linear default U(-1/sqrt(fan), 1/sqrt(fan))."""
    H, D, C = hidden_size, input_size, n_classes
    k_lstm = 1.0 / math.sqrt(H)
    k_fc = 1.0 / math.sqrt(2 * H)
    keys = jax.random.split(key, 10)

    def u(k, shape, scale):
        return jax.random.uniform(k, shape, jnp.float32, -scale, scale)

    # PyTorch stores weight_ih as (4H, D), weight_hh as (4H, H); transpose for x @ W.
    wih_f = u(keys[0], (4 * H, D), k_lstm).T             # (D, 4H)
    whh_f = u(keys[1], (4 * H, H), k_lstm).T             # (H, 4H)
    b_f = (u(keys[2], (4 * H,), k_lstm) + u(keys[3], (4 * H,), k_lstm)).reshape(1, 4 * H)
    wih_r = u(keys[4], (4 * H, D), k_lstm).T
    whh_r = u(keys[5], (4 * H, H), k_lstm).T
    b_r = (u(keys[6], (4 * H,), k_lstm) + u(keys[7], (4 * H,), k_lstm)).reshape(1, 4 * H)
    wfc = u(keys[8], (C, 2 * H), k_fc).T                 # (2H, C)
    bfc = u(keys[9], (C,), k_fc).reshape(1, C)
    return dict(wih_f=wih_f, whh_f=whh_f, b_f=b_f,
                wih_r=wih_r, whh_r=whh_r, b_r=b_r,
                wfc=wfc, bfc=bfc)


def _reference_forward(x, params):
    """Pure-JAX f32 reference of the same BiLSTM + Linear (PyTorch gate order)."""
    H = params['whh_f'].shape[0]

    def run_dir(xs, wih, whh, b):
        def cell(carry, x_t):
            h, c = carry
            gates = x_t @ wih + h @ whh + b
            i = jax.nn.sigmoid(gates[:, 0 * H:1 * H])
            f = jax.nn.sigmoid(gates[:, 1 * H:2 * H])
            g = jnp.tanh(gates[:, 2 * H:3 * H])
            o = jax.nn.sigmoid(gates[:, 3 * H:4 * H])
            c_new = f * c + i * g
            h_new = o * jnp.tanh(c_new)
            return (h_new, c_new), h_new
        B = xs.shape[1]
        init = (jnp.zeros((B, H), jnp.float32), jnp.zeros((B, H), jnp.float32))
        _, hs = lax.scan(cell, init, xs)
        return hs                                        # (T, B, H)

    x_tbd = jnp.transpose(x, (1, 0, 2))
    hf = run_dir(x_tbd, params['wih_f'], params['whh_f'], params['b_f'])
    hr = run_dir(x_tbd[::-1], params['wih_r'], params['whh_r'], params['b_r'])[::-1]
    h = jnp.concatenate([hf, hr], axis=-1)               # (T, B, 2H)
    out = h @ params['wfc'] + params['bfc']
    return jnp.transpose(out, (1, 0, 2))


if __name__ == "__main__":
    # Small shapes consistent with the module's forward: x is (batch, seq, input_size).
    B, T, D, H, C = 16, 8, 64, 32, 2

    key = jax.random.PRNGKey(0)
    kx, kp = jax.random.split(key)
    x = jax.random.normal(kx, (B, T, D), jnp.float32)
    params = init_params(kp, input_size=D, hidden_size=H, n_classes=C)

    out = classifier_forward(x, params)
    out = jax.block_until_ready(out)
    assert out.shape == (B, T, C), out.shape

    # Reference computed in f32 on bf16-rounded inputs (kernel feeds the MXU in bf16).
    x_r = x.astype(jnp.bfloat16).astype(jnp.float32)
    params_r = jax.tree_util.tree_map(
        lambda p: p.astype(jnp.bfloat16).astype(jnp.float32), params)
    ref = _reference_forward(x_r, params_r)
    err = float(jnp.max(jnp.abs(out - ref)))
    assert jnp.allclose(out, ref, atol=5e-2, rtol=5e-2), err

    print("KERNEL_OK")
</pallas_src>

<mosaic_0001>
module attributes {stable_mosaic.version = 11 : i64} {
  func.func @_classifier_kernel(%arg0: i32, %arg1: memref<8x8x64xbf16, #tpu.memory_space<vmem>>, %arg2: memref<64x128xbf16, #tpu.memory_space<vmem>>, %arg3: memref<32x128xbf16, #tpu.memory_space<vmem>>, %arg4: memref<1x128xf32, #tpu.memory_space<vmem>>, %arg5: memref<64x128xbf16, #tpu.memory_space<vmem>>, %arg6: memref<32x128xbf16, #tpu.memory_space<vmem>>, %arg7: memref<1x128xf32, #tpu.memory_space<vmem>>, %arg8: memref<64x128xbf16, #tpu.memory_space<vmem>>, %arg9: memref<1x128xf32, #tpu.memory_space<vmem>>, %arg10: memref<8x8x128xf32, #tpu.memory_space<vmem>>, %arg11: memref<8x8x128xbf16, #tpu.memory_space<vmem>>, %arg12: memref<8x8x128xbf16, #tpu.memory_space<vmem>>, %arg13: memref<8x8x64xbf16, #tpu.memory_space<vmem>>) attributes {dimension_semantics = [#tpu.dimension_semantics<parallel>], iteration_bounds = array<i64: 2>, scalar_prefetch = 0 : i64, scratch_operands = 3 : i64, tpu.core_type = #tpu.core_type<tc>, window_params = [{transform_indices = @transform_0, window_bounds = array<i64: 8, 8, 64>}, {pipeline_mode = #tpu.pipeline_mode<synchronous>, transform_indices = @transform_1, window_bounds = array<i64: 64, 128>}, {pipeline_mode = #tpu.pipeline_mode<synchronous>, transform_indices = @transform_2, window_bounds = array<i64: 32, 128>}, {pipeline_mode = #tpu.pipeline_mode<synchronous>, transform_indices = @transform_3, window_bounds = array<i64: 1, 128>}, {pipeline_mode = #tpu.pipeline_mode<synchronous>, transform_indices = @transform_4, window_bounds = array<i64: 64, 128>}, {pipeline_mode = #tpu.pipeline_mode<synchronous>, transform_indices = @transform_5, window_bounds = array<i64: 32, 128>}, {pipeline_mode = #tpu.pipeline_mode<synchronous>, transform_indices = @transform_6, window_bounds = array<i64: 1, 128>}, {pipeline_mode = #tpu.pipeline_mode<synchronous>, transform_indices = @transform_7, window_bounds = array<i64: 64, 128>}, {pipeline_mode = #tpu.pipeline_mode<synchronous>, transform_indices = @transform_8, window_bounds = array<i64: 1, 128>}, {transform_indices = @transform_9, window_bounds = array<i64: 8, 8, 128>}]} {
    %c0 = arith.constant 0 : index
    %c0_0 = arith.constant 0 : index
    %c0_1 = arith.constant 0 : index
    %0 = vector.load %arg1[%c0, %c0_0, %c0_1] : memref<8x8x64xbf16, #tpu.memory_space<vmem>>, vector<8x8x64xbf16>
    %1 = vector.shape_cast %0 : vector<8x8x64xbf16> to vector<64x64xbf16>
    %c0_2 = arith.constant 0 : index
    %c0_3 = arith.constant 0 : index
    %2 = vector.load %arg2[%c0_2, %c0_3] : memref<64x128xbf16, #tpu.memory_space<vmem>>, vector<64x128xbf16>
    %cst = arith.constant dense<0.000000e+00> : vector<64x128xf32>
    %3 = tpu.matmul %1, %2, %cst {dimension_numbers = #tpu.dot_dimension_numbers<[1], [0], [0], [1], [0, 0, 1, 1], [], []>} : vector<64x64xbf16>, vector<64x128xbf16>, vector<64x128xf32> -> vector<64x128xf32>
    %c0_4 = arith.constant 0 : index
    %c0_5 = arith.constant 0 : index
    %4 = vector.load %arg4[%c0_4, %c0_5] : memref<1x128xf32, #tpu.memory_space<vmem>>, vector<1x128xf32>
    %5 = vector.broadcast %4 : vector<1x128xf32> to vector<64x128xf32>
    %6 = arith.addf %3, %5 : vector<64x128xf32>
    %7 = arith.truncf %6 : vector<64x128xf32> to vector<64x128xbf16>
    %8 = vector.shape_cast %7 : vector<64x128xbf16> to vector<8x8x128xbf16>
    %c0_6 = arith.constant 0 : index
    %c0_7 = arith.constant 0 : index
    %c0_8 = arith.constant 0 : index
    %9 = vector.load %arg11[%c0_6, %c0_7, %c0_8] : memref<8x8x128xbf16, #tpu.memory_space<vmem>>, vector<8x8x128xbf16>
    tpu.vector_store %arg11[%c0_6, %c0_7, %c0_8], %8 {strides = array<i32>} : memref<8x8x128xbf16, #tpu.memory_space<vmem>>, vector<8x8x128xbf16>,
    %c0_9 = arith.constant 0 : index
    %c0_10 = arith.constant 0 : index
    %10 = vector.load %arg5[%c0_9, %c0_10] : memref<64x128xbf16, #tpu.memory_space<vmem>>, vector<64x128xbf16>
    %cst_11 = arith.constant dense<0.000000e+00> : vector<64x128xf32>
    %11 = tpu.matmul %1, %10, %cst_11 {dimension_numbers = #tpu.dot_dimension_numbers<[1], [0], [0], [1], [0, 0, 1, 1], [], []>} : vector<64x64xbf16>, vector<64x128xbf16>, vector<64x128xf32> -> vector<64x128xf32>
    %c0_12 = arith.constant 0 : index
    %c0_13 = arith.constant 0 : index
    %12 = vector.load %arg7[%c0_12, %c0_13] : memref<1x128xf32, #tpu.memory_space<vmem>>, vector<1x128xf32>
    %13 = vector.broadcast %12 : vector<1x128xf32> to vector<64x128xf32>
    %14 = arith.addf %11, %13 : vector<64x128xf32>
    %15 = arith.truncf %14 : vector<64x128xf32> to vector<64x128xbf16>
    %16 = vector.shape_cast %15 : vector<64x128xbf16> to vector<8x8x128xbf16>
    %c0_14 = arith.constant 0 : index
    %c0_15 = arith.constant 0 : index
    %c0_16 = arith.constant 0 : index
    %17 = vector.load %arg12[%c0_14, %c0_15, %c0_16] : memref<8x8x128xbf16, #tpu.memory_space<vmem>>, vector<8x8x128xbf16>
    tpu.vector_store %arg12[%c0_14, %c0_15, %c0_16], %16 {strides = array<i32>} : memref<8x8x128xbf16, #tpu.memory_space<vmem>>, vector<8x8x128xbf16>,
    %c0_17 = arith.constant 0 : index
    %c0_18 = arith.constant 0 : index
    %18 = vector.load %arg3[%c0_17, %c0_18] : memref<32x128xbf16, #tpu.memory_space<vmem>>, vector<32x128xbf16>
    %c0_19 = arith.constant 0 : index
    %c0_20 = arith.constant 0 : index
    %19 = vector.load %arg6[%c0_19, %c0_20] : memref<32x128xbf16, #tpu.memory_space<vmem>>, vector<32x128xbf16>
    %cst_21 = arith.constant 0.000000e+00 : f32
    %20 = vector.broadcast %cst_21 : f32 to vector<8x32xf32>
    %c0_i32 = arith.constant 0 : i32
    %c7_i32 = arith.constant 7 : i32
    %21 = arith.subi %c7_i32, %c0_i32 : i32
    %22 = arith.index_cast %c0_i32 : i32 to index
    %c0_22 = arith.constant 0 : index
    %c0_23 = arith.constant 0 : index
    %23 = vector.load %arg11[%22, %c0_22, %c0_23] : memref<8x8x128xbf16, #tpu.memory_space<vmem>>, vector<1x8x128xbf16>
    %24 = vector.shape_cast %23 : vector<1x8x128xbf16> to vector<8x128xbf16>
    %25 = arith.extf %24 : vector<8x128xbf16> to vector<8x128xf32>
    %26 = arith.truncf %20 : vector<8x32xf32> to vector<8x32xbf16>
    %cst_24 = arith.constant dense<0.000000e+00> : vector<8x128xf32>
    %27 = tpu.matmul %26, %18, %cst_24 {dimension_numbers = #tpu.dot_dimension_numbers<[1], [0], [0], [1], [0, 0, 1, 1], [], []>} : vector<8x32xbf16>, vector<32x128xbf16>, vector<8x128xf32> -> vector<8x128xf32>
    %28 = arith.addf %25, %27 : vector<8x128xf32>
    %29 = vector.extract_strided_slice %28 {offsets = [0, 0], sizes = [8, 96], strides = [1, 1]} : vector<8x128xf32> to vector<8x96xf32>
    %30 = arith.negf %29 : vector<8x96xf32>
    %31 = math.exp %30 : vector<8x96xf32>
    %cst_25 = arith.constant 1.000000e+00 : f32
    %32 = vector.broadcast %cst_25 : f32 to vector<8x96xf32>
    %33 = arith.addf %32, %31 : vector<8x96xf32>
    %34 = arith.divf %32, %33 : vector<8x96xf32>
    %35 = vector.extract_strided_slice %34 {offsets = [0, 0], sizes = [8, 32], strides = [1, 1]} : vector<8x96xf32> to vector<8x32xf32>
    %36 = vector.extract_strided_slice %34 {offsets = [0, 32], sizes = [8, 32], strides = [1, 1]} : vector<8x96xf32> to vector<8x32xf32>
    %37 = vector.extract_strided_slice %34 {offsets = [0, 64], sizes = [8, 32], strides = [1, 1]} : vector<8x96xf32> to vector<8x32xf32>
    %38 = vector.extract_strided_slice %28 {offsets = [0, 96], sizes = [8, 32], strides = [1, 1]} : vector<8x128xf32> to vector<8x32xf32>
    %39 = math.tanh %38 : vector<8x32xf32>
    %40 = arith.mulf %36, %20 : vector<8x32xf32>
    %41 = arith.mulf %35, %39 : vector<8x32xf32>
    %42 = arith.addf %40, %41 : vector<8x32xf32>
    %43 = math.tanh %42 : vector<8x32xf32>
    %44 = arith.mulf %37, %43 : vector<8x32xf32>
    %45 = arith.index_cast %21 : i32 to index
    %c0_26 = arith.constant 0 : index
    %c0_27 = arith.constant 0 : index
    %46 = vector.load %arg12[%45, %c0_26, %c0_27] : memref<8x8x128xbf16, #tpu.memory_space<vmem>>, vector<1x8x128xbf16>
    %47 = vector.shape_cast %46 : vector<1x8x128xbf16> to vector<8x128xbf16>
    %48 = arith.extf %47 : vector<8x128xbf16> to vector<8x128xf32>
    %49 = arith.truncf %20 : vector<8x32xf32> to vector<8x32xbf16>
    %cst_28 = arith.constant dense<0.000000e+00> : vector<8x128xf32>
    %50 = tpu.matmul %49, %19, %cst_28 {dimension_numbers = #tpu.dot_dimension_numbers<[1], [0], [0], [1], [0, 0, 1, 1], [], []>} : vector<8x32xbf16>, vector<32x128xbf16>, vector<8x128xf32> -> vector<8x128xf32>
    %51 = arith.addf %48, %50 : vector<8x128xf32>
    %52 = vector.extract_strided_slice %51 {offsets = [0, 0], sizes = [8, 96], strides = [1, 1]} : vector<8x128xf32> to vector<8x96xf32>
    %53 = arith.negf %52 : vector<8x96xf32>
    %54 = math.exp %53 : vector<8x96xf32>
    %cst_29 = arith.constant 1.000000e+00 : f32
    %55 = vector.broadcast %cst_29 : f32 to vector<8x96xf32>
    %56 = arith.addf %55, %54 : vector<8x96xf32>
    %57 = arith.divf %55, %56 : vector<8x96xf32>
    %58 = vector.extract_strided_slice %57 {offsets = [0, 0], sizes = [8, 32], strides = [1, 1]} : vector<8x96xf32> to vector<8x32xf32>
    %59 = vector.extract_strided_slice %57 {offsets = [0, 32], sizes = [8, 32], strides = [1, 1]} : vector<8x96xf32> to vector<8x32xf32>
    %60 = vector.extract_strided_slice %57 {offsets = [0, 64], sizes = [8, 32], strides = [1, 1]} : vector<8x96xf32> to vector<8x32xf32>
    %61 = vector.extract_strided_slice %51 {offsets = [0, 96], sizes = [8, 32], strides = [1, 1]} : vector<8x128xf32> to vector<8x32xf32>
    %62 = math.tanh %61 : vector<8x32xf32>
    %63 = arith.mulf %59, %20 : vector<8x32xf32>
    %64 = arith.mulf %58, %62 : vector<8x32xf32>
    %65 = arith.addf %63, %64 : vector<8x32xf32>
    %66 = math.tanh %65 : vector<8x32xf32>
    %67 = arith.mulf %60, %66 : vector<8x32xf32>
    %68 = arith.truncf %44 : vector<8x32xf32> to vector<8x32xbf16>
    %69 = arith.index_cast %c0_i32 : i32 to index
    %c0_30 = arith.constant 0 : index
    %c0_31 = arith.constant 0 : index
    %70 = vector.load %arg13[%69, %c0_30, %c0_31] : memref<8x8x64xbf16, #tpu.memory_space<vmem>>, vector<1x8x32xbf16>
    %71 = vector.shape_cast %70 : vector<1x8x32xbf16> to vector<8x32xbf16>
    %72 = vector.shape_cast %68 : vector<8x32xbf16> to vector<1x8x32xbf16>
    tpu.vector_store %arg13[%69, %c0_30, %c0_31], %72 {strides = array<i32>} : memref<8x8x64xbf16, #tpu.memory_space<vmem>>, vector<1x8x32xbf16>,
    %73 = arith.truncf %67 : vector<8x32xf32> to vector<8x32xbf16>
    %74 = arith.index_cast %21 : i32 to index
    %c0_32 = arith.constant 0 : index
    %c32 = arith.constant 32 : index
    %75 = vector.load %arg13[%74, %c0_32, %c32] : memref<8x8x64xbf16, #tpu.memory_space<vmem>>, vector<1x8x32xbf16>
    %76 = vector.shape_cast %75 : vector<1x8x32xbf16> to vector<8x32xbf16>
    %77 = vector.shape_cast %73 : vector<8x32xbf16> to vector<1x8x32xbf16>
    tpu.vector_store %arg13[%74, %c0_32, %c32], %77 {strides = array<i32>} : memref<8x8x64xbf16, #tpu.memory_space<vmem>>, vector<1x8x32xbf16>,
    %c1_i32 = arith.constant 1 : i32
    %c7_i32_33 = arith.constant 7 : i32
    %78 = arith.subi %c7_i32_33, %c1_i32 : i32
    %79 = arith.index_cast %c1_i32 : i32 to index
    %c0_34 = arith.constant 0 : index
    %c0_35 = arith.constant 0 : index
    %80 = vector.load %arg11[%79, %c0_34, %c0_35] : memref<8x8x128xbf16, #tpu.memory_space<vmem>>, vector<1x8x128xbf16>
    %81 = vector.shape_cast %80 : vector<1x8x128xbf16> to vector<8x128xbf16>
    %82 = arith.extf %81 : vector<8x128xbf16> to vector<8x128xf32>
    %83 = arith.truncf %44 : vector<8x32xf32> to vector<8x32xbf16>
    %cst_36 = arith.constant dense<0.000000e+00> : vector<8x128xf32>
    %84 = tpu.matmul %83, %18, %cst_36 {dimension_numbers = #tpu.dot_dimension_numbers<[1], [0], [0], [1], [0, 0, 1, 1], [], []>} : vector<8x32xbf16>, vector<32x128xbf16>, vector<8x128xf32> -> vector<8x128xf32>
    %85 = arith.addf %82, %84 : vector<8x128xf32>
    %86 = vector.extract_strided_slice %85 {offsets = [0, 0], sizes = [8, 96], strides = [1, 1]} : vector<8x128xf32> to vector<8x96xf32>
    %87 = arith.negf %86 : vector<8x96xf32>
    %88 = math.exp %87 : vector<8x96xf32>
    %cst_37 = arith.constant 1.000000e+00 : f32
    %89 = vector.broadcast %cst_37 : f32 to vector<8x96xf32>
    %90 = arith.addf %89, %88 : vector<8x96xf32>
    %91 = arith.divf %89, %90 : vector<8x96xf32>
    %92 = vector.extract_strided_slice %91 {offsets = [0, 0], sizes = [8, 32], strides = [1, 1]} : vector<8x96xf32> to vector<8x32xf32>
    %93 = vector.extract_strided_slice %91 {offsets = [0, 32], sizes = [8, 32], strides = [1, 1]} : vector<8x96xf32> to vector<8x32xf32>
    %94 = vector.extract_strided_slice %91 {offsets = [0, 64], sizes = [8, 32], strides = [1, 1]} : vector<8x96xf32> to vector<8x32xf32>
    %95 = vector.extract_strided_slice %85 {offsets = [0, 96], sizes = [8, 32], strides = [1, 1]} : vector<8x128xf32> to vector<8x32xf32>
    %96 = math.tanh %95 : vector<8x32xf32>
    %97 = arith.mulf %93, %42 : vector<8x32xf32>
    %98 = arith.mulf %92, %96 : vector<8x32xf32>
    %99 = arith.addf %97, %98 : vector<8x32xf32>
    %100 = math.tanh %99 : vector<8x32xf32>
    %101 = arith.mulf %94, %100 : vector<8x32xf32>
    %102 = arith.index_cast %78 : i32 to index
    %c0_38 = arith.constant 0 : index
    %c0_39 = arith.constant 0 : index
    %103 = vector.load %arg12[%102, %c0_38, %c0_39] : memref<8x8x128xbf16, #tpu.memory_space<vmem>>, vector<1x8x128xbf16>
    %104 = vector.shape_cast %103 : vector<1x8x128xbf16> to vector<8x128xbf16>
    %105 = arith.extf %104 : vector<8x128xbf16> to vector<8x128xf32>
    %106 = arith.truncf %67 : vector<8x32xf32> to vector<8x32xbf16>
    %cst_40 = arith.constant dense<0.000000e+00> : vector<8x128xf32>
    %107 = tpu.matmul %106, %19, %cst_40 {dimension_numbers = #tpu.dot_dimension_numbers<[1], [0], [0], [1], [0, 0, 1, 1], [], []>} : vector<8x32xbf16>, vector<32x128xbf16>, vector<8x128xf32> -> vector<8x128xf32>
    %108 = arith.addf %105, %107 : vector<8x128xf32>
    %109 = vector.extract_strided_slice %108 {offsets = [0, 0], sizes = [8, 96], strides = [1, 1]} : vector<8x128xf32> to vector<8x96xf32>
    %110 = arith.negf %109 : vector<8x96xf32>
    %111 = math.exp %110 : vector<8x96xf32>
    %cst_41 = arith.constant 1.000000e+00 : f32
    %112 = vector.broadcast %cst_41 : f32 to vector<8x96xf32>
    %113 = arith.addf %112, %111 : vector<8x96xf32>
    %114 = arith.divf %112, %113 : vector<8x96xf32>
    %115 = vector.extract_strided_slice %114 {offsets = [0, 0], sizes = [8, 32], strides = [1, 1]} : vector<8x96xf32> to vector<8x32xf32>
    %116 = vector.extract_strided_slice %114 {offsets = [0, 32], sizes = [8, 32], strides = [1, 1]} : vector<8x96xf32> to vector<8x32xf32>
    %117 = vector.extract_strided_slice %114 {offsets = [0, 64], sizes = [8, 32], strides = [1, 1]} : vector<8x96xf32> to vector<8x32xf32>
    %118 = vector.extract_strided_slice %108 {offsets = [0, 96], sizes = [8, 32], strides = [1, 1]} : vector<8x128xf32> to vector<8x32xf32>
    %119 = math.tanh %118 : vector<8x32xf32>
    %120 = arith.mulf %116, %65 : vector<8x32xf32>
    %121 = arith.mulf %115, %119 : vector<8x32xf32>
    %122 = arith.addf %120, %121 : vector<8x32xf32>
    %123 = math.tanh %122 : vector<8x32xf32>
    %124 = arith.mulf %117, %123 : vector<8x32xf32>
    %125 = arith.truncf %101 : vector<8x32xf32> to vector<8x32xbf16>
    %126 = arith.index_cast %c1_i32 : i32 to index
    %c0_42 = arith.constant 0 : index
    %c0_43 = arith.constant 0 : index
    %127 = vector.load %arg13[%126, %c0_42, %c0_43] : memref<8x8x64xbf16, #tpu.memory_space<vmem>>, vector<1x8x32xbf16>
    %128 = vector.shape_cast %127 : vector<1x8x32xbf16> to vector<8x32xbf16>
    %129 = vector.shape_cast %125 : vector<8x32xbf16> to vector<1x8x32xbf16>
    tpu.vector_store %arg13[%126, %c0_42, %c0_43], %129 {strides = array<i32>} : memref<8x8x64xbf16, #tpu.memory_space<vmem>>, vector<1x8x32xbf16>,
    %130 = arith.truncf %124 : vector<8x32xf32> to vector<8x32xbf16>
    %131 = arith.index_cast %78 : i32 to index
    %c0_44 = arith.constant 0 : index
    %c32_45 = arith.constant 32 : index
    %132 = vector.load %arg13[%131, %c0_44, %c32_45] : memref<8x8x64xbf16, #tpu.memory_space<vmem>>, vector<1x8x32xbf16>
    %133 = vector.shape_cast %132 : vector<1x8x32xbf16> to vector<8x32xbf16>
    %134 = vector.shape_cast %130 : vector<8x32xbf16> to vector<1x8x32xbf16>
    tpu.vector_store %arg13[%131, %c0_44, %c32_45], %134 {strides = array<i32>} : memref<8x8x64xbf16, #tpu.memory_space<vmem>>, vector<1x8x32xbf16>,
    %c2_i32 = arith.constant 2 : i32
    %c7_i32_46 = arith.constant 7 : i32
    %135 = arith.subi %c7_i32_46, %c2_i32 : i32
    %136 = arith.index_cast %c2_i32 : i32 to index
    %c0_47 = arith.constant 0 : index
    %c0_48 = arith.constant 0 : index
    %137 = vector.load %arg11[%136, %c0_47, %c0_48] : memref<8x8x128xbf16, #tpu.memory_space<vmem>>, vector<1x8x128xbf16>
    %138 = vector.shape_cast %137 : vector<1x8x128xbf16> to vector<8x128xbf16>
    %139 = arith.extf %138 : vector<8x128xbf16> to vector<8x128xf32>
    %140 = arith.truncf %101 : vector<8x32xf32> to vector<8x32xbf16>
    %cst_49 = arith.constant dense<0.000000e+00> : vector<8x128xf32>
    %141 = tpu.matmul %140, %18, %cst_49 {dimension_numbers = #tpu.dot_dimension_numbers<[1], [0], [0], [1], [0, 0, 1, 1], [], []>} : vector<8x32xbf16>, vector<32x128xbf16>, vector<8x128xf32> -> vector<8x128xf32>
    %142 = arith.addf %139, %141 : vector<8x128xf32>
    %143 = vector.extract_strided_slice %142 {offsets = [0, 0], sizes = [8, 96], strides = [1, 1]} : vector<8x128xf32> to vector<8x96xf32>
    %144 = arith.negf %143 : vector<8x96xf32>
    %145 = math.exp %144 : vector<8x96xf32>
    %cst_50 = arith.constant 1.000000e+00 : f32
    %146 = vector.broadcast %cst_50 : f32 to vector<8x96xf32>
    %147 = arith.addf %146, %145 : vector<8x96xf32>
    %148 = arith.divf %146, %147 : vector<8x96xf32>
    %149 = vector.extract_strided_slice %148 {offsets = [0, 0], sizes = [8, 32], strides = [1, 1]} : vector<8x96xf32> to vector<8x32xf32>
    %150 = vector.extract_strided_slice %148 {offsets = [0, 32], sizes = [8, 32], strides = [1, 1]} : vector<8x96xf32> to vector<8x32xf32>
    %151 = vector.extract_strided_slice %148 {offsets = [0, 64], sizes = [8, 32], strides = [1, 1]} : vector<8x96xf32> to vector<8x32xf32>
    %152 = vector.extract_strided_slice %142 {offsets = [0, 96], sizes = [8, 32], strides = [1, 1]} : vector<8x128xf32> to vector<8x32xf32>
    %153 = math.tanh %152 : vector<8x32xf32>
    %154 = arith.mulf %150, %99 : vector<8x32xf32>
    %155 = arith.mulf %149, %153 : vector<8x32xf32>
    %156 = arith.addf %154, %155 : vector<8x32xf32>
    %157 = math.tanh %156 : vector<8x32xf32>
    %158 = arith.mulf %151, %157 : vector<8x32xf32>
    %159 = arith.index_cast %135 : i32 to index
    %c0_51 = arith.constant 0 : index
    %c0_52 = arith.constant 0 : index
    %160 = vector.load %arg12[%159, %c0_51, %c0_52] : memref<8x8x128xbf16, #tpu.memory_space<vmem>>, vector<1x8x128xbf16>
    %161 = vector.shape_cast %160 : vector<1x8x128xbf16> to vector<8x128xbf16>
    %162 = arith.extf %161 : vector<8x128xbf16> to vector<8x128xf32>
    %163 = arith.truncf %124 : vector<8x32xf32> to vector<8x32xbf16>
    %cst_53 = arith.constant dense<0.000000e+00> : vector<8x128xf32>
    %164 = tpu.matmul %163, %19, %cst_53 {dimension_numbers = #tpu.dot_dimension_numbers<[1], [0], [0], [1], [0, 0, 1, 1], [], []>} : vector<8x32xbf16>, vector<32x128xbf16>, vector<8x128xf32> -> vector<8x128xf32>
    %165 = arith.addf %162, %164 : vector<8x128xf32>
    %166 = vector.extract_strided_slice %165 {offsets = [0, 0], sizes = [8, 96], strides = [1, 1]} : vector<8x128xf32> to vector<8x96xf32>
    %167 = arith.negf %166 : vector<8x96xf32>
    %168 = math.exp %167 : vector<8x96xf32>
    %cst_54 = arith.constant 1.000000e+00 : f32
    %169 = vector.broadcast %cst_54 : f32 to vector<8x96xf32>
    %170 = arith.addf %169, %168 : vector<8x96xf32>
    %171 = arith.divf %169, %170 : vector<8x96xf32>
    %172 = vector.extract_strided_slice %171 {offsets = [0, 0], sizes = [8, 32], strides = [1, 1]} : vector<8x96xf32> to vector<8x32xf32>
    %173 = vector.extract_strided_slice %171 {offsets = [0, 32], sizes = [8, 32], strides = [1, 1]} : vector<8x96xf32> to vector<8x32xf32>
    %174 = vector.extract_strided_slice %171 {offsets = [0, 64], sizes = [8, 32], strides = [1, 1]} : vector<8x96xf32> to vector<8x32xf32>
    %175 = vector.extract_strided_slice %165 {offsets = [0, 96], sizes = [8, 32], strides = [1, 1]} : vector<8x128xf32> to vector<8x32xf32>
    %176 = math.tanh %175 : vector<8x32xf32>
    %177 = arith.mulf %173, %122 : vector<8x32xf32>
    %178 = arith.mulf %172, %176 : vector<8x32xf32>
    %179 = arith.addf %177, %178 : vector<8x32xf32>
    %180 = math.tanh %179 : vector<8x32xf32>
    %181 = arith.mulf %174, %180 : vector<8x32xf32>
    %182 = arith.truncf %158 : vector<8x32xf32> to vector<8x32xbf16>
    %183 = arith.index_cast %c2_i32 : i32 to index
    %c0_55 = arith.constant 0 : index
    %c0_56 = arith.constant 0 : index
    %184 = vector.load %arg13[%183, %c0_55, %c0_56] : memref<8x8x64xbf16, #tpu.memory_space<vmem>>, vector<1x8x32xbf16>
    %185 = vector.shape_cast %184 : vector<1x8x32xbf16> to vector<8x32xbf16>
    %186 = vector.shape_cast %182 : vector<8x32xbf16> to vector<1x8x32xbf16>
    tpu.vector_store %arg13[%183, %c0_55, %c0_56], %186 {strides = array<i32>} : memref<8x8x64xbf16, #tpu.memory_space<vmem>>, vector<1x8x32xbf16>,
    %187 = arith.truncf %181 : vector<8x32xf32> to vector<8x32xbf16>
    %188 = arith.index_cast %135 : i32 to index
    %c0_57 = arith.constant 0 : index
    %c32_58 = arith.constant 32 : index
    %189 = vector.load %arg13[%188, %c0_57, %c32_58] : memref<8x8x64xbf16, #tpu.memory_space<vmem>>, vector<1x8x32xbf16>
    %190 = vector.shape_cast %189 : vector<1x8x32xbf16> to vector<8x32xbf16>
    %191 = vector.shape_cast %187 : vector<8x32xbf16> to vector<1x8x32xbf16>
    tpu.vector_store %arg13[%188, %c0_57, %c32_58], %191 {strides = array<i32>} : memref<8x8x64xbf16, #tpu.memory_space<vmem>>, vector<1x8x32xbf16>,
    %c3_i32 = arith.constant 3 : i32
    %c7_i32_59 = arith.constant 7 : i32
    %192 = arith.subi %c7_i32_59, %c3_i32 : i32
    %193 = arith.index_cast %c3_i32 : i32 to index
    %c0_60 = arith.constant 0 : index
    %c0_61 = arith.constant 0 : index
    %194 = vector.load %arg11[%193, %c0_60, %c0_61] : memref<8x8x128xbf16, #tpu.memory_space<vmem>>, vector<1x8x128xbf16>
    %195 = vector.shape_cast %194 : vector<1x8x128xbf16> to vector<8x128xbf16>
    %196 = arith.extf %195 : vector<8x128xbf16> to vector<8x128xf32>
    %197 = arith.truncf %158 : vector<8x32xf32> to vector<8x32xbf16>
    %cst_62 = arith.constant dense<0.000000e+00> : vector<8x128xf32>
    %198 = tpu.matmul %197, %18, %cst_62 {dimension_numbers = #tpu.dot_dimension_numbers<[1], [0], [0], [1], [0, 0, 1, 1], [], []>} : vector<8x32xbf16>, vector<32x128xbf16>, vector<8x128xf32> -> vector<8x128xf32>
    %199 = arith.addf %196, %198 : vector<8x128xf32>
    %200 = vector.extract_strided_slice %199 {offsets = [0, 0], sizes = [8, 96], strides = [1, 1]} : vector<8x128xf32> to vector<8x96xf32>
    %201 = arith.negf %200 : vector<8x96xf32>
    %202 = math.exp %201 : vector<8x96xf32>
    %cst_63 = arith.constant 1.000000e+00 : f32
    %203 = vector.broadcast %cst_63 : f32 to vector<8x96xf32>
    %204 = arith.addf %203, %202 : vector<8x96xf32>
    %205 = arith.divf %203, %204 : vector<8x96xf32>
    %206 = vector.extract_strided_slice %205 {offsets = [0, 0], sizes = [8, 32], strides = [1, 1]} : vector<8x96xf32> to vector<8x32xf32>
    %207 = vector.extract_strided_slice %205 {offsets = [0, 32], sizes = [8, 32], strides = [1, 1]} : vector<8x96xf32> to vector<8x32xf32>
    %208 = vector.extract_strided_slice %205 {offsets = [0, 64], sizes = [8, 32], strides = [1, 1]} : vector<8x96xf32> to vector<8x32xf32>
    %209 = vector.extract_strided_slice %199 {offsets = [0, 96], sizes = [8, 32], strides = [1, 1]} : vector<8x128xf32> to vector<8x32xf32>
    %210 = math.tanh %209 : vector<8x32xf32>
    %211 = arith.mulf %207, %156 : vector<8x32xf32>
    %212 = arith.mulf %206, %210 : vector<8x32xf32>
    %213 = arith.addf %211, %212 : vector<8x32xf32>
    %214 = math.tanh %213 : vector<8x32xf32>
    %215 = arith.mulf %208, %214 : vector<8x32xf32>
    %216 = arith.index_cast %192 : i32 to index
    %c0_64 = arith.constant 0 : index
    %c0_65 = arith.constant 0 : index
    %217 = vector.load %arg12[%216, %c0_64, %c0_65] : memref<8x8x128xbf16, #tpu.memory_space<vmem>>, vector<1x8x128xbf16>
    %218 = vector.shape_cast %217 : vector<1x8x128xbf16> to vector<8x128xbf16>
    %219 = arith.extf %218 : vector<8x128xbf16> to vector<8x128xf32>
    %220 = arith.truncf %181 : vector<8x32xf32> to vector<8x32xbf16>
    %cst_66 = arith.constant dense<0.000000e+00> : vector<8x128xf32>
    %221 = tpu.matmul %220, %19, %cst_66 {dimension_numbers = #tpu.dot_dimension_numbers<[1], [0], [0], [1], [0, 0, 1, 1], [], []>} : vector<8x32xbf16>, vector<32x128xbf16>, vector<8x128xf32> -> vector<8x128xf32>
    %222 = arith.addf %219, %221 : vector<8x128xf32>
    %223 = vector.extract_strided_slice %222 {offsets = [0, 0], sizes = [8, 96], strides = [1, 1]} : vector<8x128xf32> to vector<8x96xf32>
    %224 = arith.negf %223 : vector<8x96xf32>
    %225 = math.exp %224 : vector<8x96xf32>
    %cst_67 = arith.constant 1.000000e+00 : f32
    %226 = vector.broadcast %cst_67 : f32 to vector<8x96xf32>
    %227 = arith.addf %226, %225 : vector<8x96xf32>
    %228 = arith.divf %226, %227 : vector<8x96xf32>
    %229 = vector.extract_strided_slice %228 {offsets = [0, 0], sizes = [8, 32], strides = [1, 1]} : vector<8x96xf32> to vector<8x32xf32>
    %230 = vector.extract_strided_slice %228 {offsets = [0, 32], sizes = [8, 32], strides = [1, 1]} : vector<8x96xf32> to vector<8x32xf32>
    %231 = vector.extract_strided_slice %228 {offsets = [0, 64], sizes = [8, 32], strides = [1, 1]} : vector<8x96xf32> to vector<8x32xf32>
    %232 = vector.extract_strided_slice %222 {offsets = [0, 96], sizes = [8, 32], strides = [1, 1]} : vector<8x128xf32> to vector<8x32xf32>
    %233 = math.tanh %232 : vector<8x32xf32>
    %234 = arith.mulf %230, %179 : vector<8x32xf32>
    %235 = arith.mulf %229, %233 : vector<8x32xf32>
    %236 = arith.addf %234, %235 : vector<8x32xf32>
    %237 = math.tanh %236 : vector<8x32xf32>
    %238 = arith.mulf %231, %237 : vector<8x32xf32>
    %239 = arith.truncf %215 : vector<8x32xf32> to vector<8x32xbf16>
    %240 = arith.index_cast %c3_i32 : i32 to index
    %c0_68 = arith.constant 0 : index
    %c0_69 = arith.constant 0 : index
    %241 = vector.load %arg13[%240, %c0_68, %c0_69] : memref<8x8x64xbf16, #tpu.memory_space<vmem>>, vector<1x8x32xbf16>
    %242 = vector.shape_cast %241 : vector<1x8x32xbf16> to vector<8x32xbf16>
    %243 = vector.shape_cast %239 : vector<8x32xbf16> to vector<1x8x32xbf16>
    tpu.vector_store %arg13[%240, %c0_68, %c0_69], %243 {strides = array<i32>} : memref<8x8x64xbf16, #tpu.memory_space<vmem>>, vector<1x8x32xbf16>,
    %244 = arith.truncf %238 : vector<8x32xf32> to vector<8x32xbf16>
    %245 = arith.index_cast %192 : i32 to index
    %c0_70 = arith.constant 0 : index
    %c32_71 = arith.constant 32 : index
    %246 = vector.load %arg13[%245, %c0_70, %c32_71] : memref<8x8x64xbf16, #tpu.memory_space<vmem>>, vector<1x8x32xbf16>
    %247 = vector.shape_cast %246 : vector<1x8x32xbf16> to vector<8x32xbf16>
    %248 = vector.shape_cast %244 : vector<8x32xbf16> to vector<1x8x32xbf16>
    tpu.vector_store %arg13[%245, %c0_70, %c32_71], %248 {strides = array<i32>} : memref<8x8x64xbf16, #tpu.memory_space<vmem>>, vector<1x8x32xbf16>,
    %c4_i32 = arith.constant 4 : i32
    %c7_i32_72 = arith.constant 7 : i32
    %249 = arith.subi %c7_i32_72, %c4_i32 : i32
    %250 = arith.index_cast %c4_i32 : i32 to index
    %c0_73 = arith.constant 0 : index
    %c0_74 = arith.constant 0 : index
    %251 = vector.load %arg11[%250, %c0_73, %c0_74] : memref<8x8x128xbf16, #tpu.memory_space<vmem>>, vector<1x8x128xbf16>
    %252 = vector.shape_cast %251 : vector<1x8x128xbf16> to vector<8x128xbf16>
    %253 = arith.extf %252 : vector<8x128xbf16> to vector<8x128xf32>
    %254 = arith.truncf %215 : vector<8x32xf32> to vector<8x32xbf16>
    %cst_75 = arith.constant dense<0.000000e+00> : vector<8x128xf32>
    %255 = tpu.matmul %254, %18, %cst_75 {dimension_numbers = #tpu.dot_dimension_numbers<[1], [0], [0], [1], [0, 0, 1, 1], [], []>} : vector<8x32xbf16>, vector<32x128xbf16>, vector<8x128xf32> -> vector<8x128xf32>
    %256 = arith.addf %253, %255 : vector<8x128xf32>
    %257 = vector.extract_strided_slice %256 {offsets = [0, 0], sizes = [8, 96], strides = [1, 1]} : vector<8x128xf32> to vector<8x96xf32>
    %258 = arith.negf %257 : vector<8x96xf32>
    %259 = math.exp %258 : vector<8x96xf32>
    %cst_76 = arith.constant 1.000000e+00 : f32
    %260 = vector.broadcast %cst_76 : f32 to vector<8x96xf32>
    %261 = arith.addf %260, %259 : vector<8x96xf32>
    %262 = arith.divf %260, %261 : vector<8x96xf32>
    %263 = vector.extract_strided_slice %262 {offsets = [0, 0], sizes = [8, 32], strides = [1, 1]} : vector<8x96xf32> to vector<8x32xf32>
    %264 = vector.extract_strided_slice %262 {offsets = [0, 32], sizes = [8, 32], strides = [1, 1]} : vector<8x96xf32> to vector<8x32xf32>
    %265 = vector.extract_strided_slice %262 {offsets = [0, 64], sizes = [8, 32], strides = [1, 1]} : vector<8x96xf32> to vector<8x32xf32>
    %266 = vector.extract_strided_slice %256 {offsets = [0, 96], sizes = [8, 32], strides = [1, 1]} : vector<8x128xf32> to vector<8x32xf32>
    %267 = math.tanh %266 : vector<8x32xf32>
    %268 = arith.mulf %264, %213 : vector<8x32xf32>
    %269 = arith.mulf %263, %267 : vector<8x32xf32>
    %270 = arith.addf %268, %269 : vector<8x32xf32>
    %271 = math.tanh %270 : vector<8x32xf32>
    %272 = arith.mulf %265, %271 : vector<8x32xf32>
    %273 = arith.index_cast %249 : i32 to index
    %c0_77 = arith.constant 0 : index
    %c0_78 = arith.constant 0 : index
    %274 = vector.load %arg12[%273, %c0_77, %c0_78] : memref<8x8x128xbf16, #tpu.memory_space<vmem>>, vector<1x8x128xbf16>
    %275 = vector.shape_cast %274 : vector<1x8x128xbf16> to vector<8x128xbf16>
    %276 = arith.extf %275 : vector<8x128xbf16> to vector<8x128xf32>
    %277 = arith.truncf %238 : vector<8x32xf32> to vector<8x32xbf16>
    %cst_79 = arith.constant dense<0.000000e+00> : vector<8x128xf32>
    %278 = tpu.matmul %277, %19, %cst_79 {dimension_numbers = #tpu.dot_dimension_numbers<[1], [0], [0], [1], [0, 0, 1, 1], [], []>} : vector<8x32xbf16>, vector<32x128xbf16>, vector<8x128xf32> -> vector<8x128xf32>
    %279 = arith.addf %276, %278 : vector<8x128xf32>
    %280 = vector.extract_strided_slice %279 {offsets = [0, 0], sizes = [8, 96], strides = [1, 1]} : vector<8x128xf32> to vector<8x96xf32>
    %281 = arith.negf %280 : vector<8x96xf32>
    %282 = math.exp %281 : vector<8x96xf32>
    %cst_80 = arith.constant 1.000000e+00 : f32
    %283 = vector.broadcast %cst_80 : f32 to vector<8x96xf32>
    %284 = arith.addf %283, %282 : vector<8x96xf32>
    %285 = arith.divf %283, %284 : vector<8x96xf32>
    %286 = vector.extract_strided_slice %285 {offsets = [0, 0], sizes = [8, 32], strides = [1, 1]} : vector<8x96xf32> to vector<8x32xf32>
    %287 = vector.extract_strided_slice %285 {offsets = [0, 32], sizes = [8, 32], strides = [1, 1]} : vector<8x96xf32> to vector<8x32xf32>
    %288 = vector.extract_strided_slice %285 {offsets = [0, 64], sizes = [8, 32], strides = [1, 1]} : vector<8x96xf32> to vector<8x32xf32>
    %289 = vector.extract_strided_slice %279 {offsets = [0, 96], sizes = [8, 32], strides = [1, 1]} : vector<8x128xf32> to vector<8x32xf32>
    %290 = math.tanh %289 : vector<8x32xf32>
    %291 = arith.mulf %287, %236 : vector<8x32xf32>
    %292 = arith.mulf %286, %290 : vector<8x32xf32>
    %293 = arith.addf %291, %292 : vector<8x32xf32>
    %294 = math.tanh %293 : vector<8x32xf32>
    %295 = arith.mulf %288, %294 : vector<8x32xf32>
    %296 = arith.truncf %272 : vector<8x32xf32> to vector<8x32xbf16>
    %297 = arith.index_cast %c4_i32 : i32 to index
    %c0_81 = arith.constant 0 : index
    %c0_82 = arith.constant 0 : index
    %298 = vector.load %arg13[%297, %c0_81, %c0_82] : memref<8x8x64xbf16, #tpu.memory_space<vmem>>, vector<1x8x32xbf16>
    %299 = vector.shape_cast %298 : vector<1x8x32xbf16> to vector<8x32xbf16>
    %300 = vector.shape_cast %296 : vector<8x32xbf16> to vector<1x8x32xbf16>
    tpu.vector_store %arg13[%297, %c0_81, %c0_82], %300 {strides = array<i32>} : memref<8x8x64xbf16, #tpu.memory_space<vmem>>, vector<1x8x32xbf16>,
    %301 = arith.truncf %295 : vector<8x32xf32> to vector<8x32xbf16>
    %302 = arith.index_cast %249 : i32 to index
    %c0_83 = arith.constant 0 : index
    %c32_84 = arith.constant 32 : index
    %303 = vector.load %arg13[%302, %c0_83, %c32_84] : memref<8x8x64xbf16, #tpu.memory_space<vmem>>, vector<1x8x32xbf16>
    %304 = vector.shape_cast %303 : vector<1x8x32xbf16> to vector<8x32xbf16>
    %305 = vector.shape_cast %301 : vector<8x32xbf16> to vector<1x8x32xbf16>
    tpu.vector_store %arg13[%302, %c0_83, %c32_84], %305 {strides = array<i32>} : memref<8x8x64xbf16, #tpu.memory_space<vmem>>, vector<1x8x32xbf16>,
    %c5_i32 = arith.constant 5 : i32
    %c7_i32_85 = arith.constant 7 : i32
    %306 = arith.subi %c7_i32_85, %c5_i32 : i32
    %307 = arith.index_cast %c5_i32 : i32 to index
    %c0_86 = arith.constant 0 : index
    %c0_87 = arith.constant 0 : index
    %308 = vector.load %arg11[%307, %c0_86, %c0_87] : memref<8x8x128xbf16, #tpu.memory_space<vmem>>, vector<1x8x128xbf16>
    %309 = vector.shape_cast %308 : vector<1x8x128xbf16> to vector<8x128xbf16>
    %310 = arith.extf %309 : vector<8x128xbf16> to vector<8x128xf32>
    %311 = arith.truncf %272 : vector<8x32xf32> to vector<8x32xbf16>
    %cst_88 = arith.constant dense<0.000000e+00> : vector<8x128xf32>
    %312 = tpu.matmul %311, %18, %cst_88 {dimension_numbers = #tpu.dot_dimension_numbers<[1], [0], [0], [1], [0, 0, 1, 1], [], []>} : vector<8x32xbf16>, vector<32x128xbf16>, vector<8x128xf32> -> vector<8x128xf32>
    %313 = arith.addf %310, %312 : vector<8x128xf32>
    %314 = vector.extract_strided_slice %313 {offsets = [0, 0], sizes = [8, 96], strides = [1, 1]} : vector<8x128xf32> to vector<8x96xf32>
    %315 = arith.negf %314 : vector<8x96xf32>
    %316 = math.exp %315 : vector<8x96xf32>
    %cst_89 = arith.constant 1.000000e+00 : f32
    %317 = vector.broadcast %cst_89 : f32 to vector<8x96xf32>
    %318 = arith.addf %317, %316 : vector<8x96xf32>
    %319 = arith.divf %317, %318 : vector<8x96xf32>
    %320 = vector.extract_strided_slice %319 {offsets = [0, 0], sizes = [8, 32], strides = [1, 1]} : vector<8x96xf32> to vector<8x32xf32>
    %321 = vector.extract_strided_slice %319 {offsets = [0, 32], sizes = [8, 32], strides = [1, 1]} : vector<8x96xf32> to vector<8x32xf32>
    %322 = vector.extract_strided_slice %319 {offsets = [0, 64], sizes = [8, 32], strides = [1, 1]} : vector<8x96xf32> to vector<8x32xf32>
    %323 = vector.extract_strided_slice %313 {offsets = [0, 96], sizes = [8, 32], strides = [1, 1]} : vector<8x128xf32> to vector<8x32xf32>
    %324 = math.tanh %323 : vector<8x32xf32>
    %325 = arith.mulf %321, %270 : vector<8x32xf32>
    %326 = arith.mulf %320, %324 : vector<8x32xf32>
    %327 = arith.addf %325, %326 : vector<8x32xf32>
    %328 = math.tanh %327 : vector<8x32xf32>
    %329 = arith.mulf %322, %328 : vector<8x32xf32>
    %330 = arith.index_cast %306 : i32 to index
    %c0_90 = arith.constant 0 : index
    %c0_91 = arith.constant 0 : index
    %331 = vector.load %arg12[%330, %c0_90, %c0_91] : memref<8x8x128xbf16, #tpu.memory_space<vmem>>, vector<1x8x128xbf16>
    %332 = vector.shape_cast %331 : vector<1x8x128xbf16> to vector<8x128xbf16>
    %333 = arith.extf %332 : vector<8x128xbf16> to vector<8x128xf32>
    %334 = arith.truncf %295 : vector<8x32xf32> to vector<8x32xbf16>
    %cst_92 = arith.constant dense<0.000000e+00> : vector<8x128xf32>
    %335 = tpu.matmul %334, %19, %cst_92 {dimension_numbers = #tpu.dot_dimension_numbers<[1], [0], [0], [1], [0, 0, 1, 1], [], []>} : vector<8x32xbf16>, vector<32x128xbf16>, vector<8x128xf32> -> vector<8x128xf32>
    %336 = arith.addf %333, %335 : vector<8x128xf32>
    %337 = vector.extract_strided_slice %336 {offsets = [0, 0], sizes = [8, 96], strides = [1, 1]} : vector<8x128xf32> to vector<8x96xf32>
    %338 = arith.negf %337 : vector<8x96xf32>
    %339 = math.exp %338 : vector<8x96xf32>
    %cst_93 = arith.constant 1.000000e+00 : f32
    %340 = vector.broadcast %cst_93 : f32 to vector<8x96xf32>
    %341 = arith.addf %340, %339 : vector<8x96xf32>
    %342 = arith.divf %340, %341 : vector<8x96xf32>
    %343 = vector.extract_strided_slice %342 {offsets = [0, 0], sizes = [8, 32], strides = [1, 1]} : vector<8x96xf32> to vector<8x32xf32>
    %344 = vector.extract_strided_slice %342 {offsets = [0, 32], sizes = [8, 32], strides = [1, 1]} : vector<8x96xf32> to vector<8x32xf32>
    %345 = vector.extract_strided_slice %342 {offsets = [0, 64], sizes = [8, 32], strides = [1, 1]} : vector<8x96xf32> to vector<8x32xf32>
    %346 = vector.extract_strided_slice %336 {offsets = [0, 96], sizes = [8, 32], strides = [1, 1]} : vector<8x128xf32> to vector<8x32xf32>
    %347 = math.tanh %346 : vector<8x32xf32>
    %348 = arith.mulf %344, %293 : vector<8x32xf32>
    %349 = arith.mulf %343, %347 : vector<8x32xf32>
    %350 = arith.addf %348, %349 : vector<8x32xf32>
    %351 = math.tanh %350 : vector<8x32xf32>
    %352 = arith.mulf %345, %351 : vector<8x32xf32>
    %353 = arith.truncf %329 : vector<8x32xf32> to vector<8x32xbf16>
    %354 = arith.index_cast %c5_i32 : i32 to index
    %c0_94 = arith.constant 0 : index
    %c0_95 = arith.constant 0 : index
    %355 = vector.load %arg13[%354, %c0_94, %c0_95] : memref<8x8x64xbf16, #tpu.memory_space<vmem>>, vector<1x8x32xbf16>
    %356 = vector.shape_cast %355 : vector<1x8x32xbf16> to vector<8x32xbf16>
    %357 = vector.shape_cast %353 : vector<8x32xbf16> to vector<1x8x32xbf16>
    tpu.vector_store %arg13[%354, %c0_94, %c0_95], %357 {strides = array<i32>} : memref<8x8x64xbf16, #tpu.memory_space<vmem>>, vector<1x8x32xbf16>,
    %358 = arith.truncf %352 : vector<8x32xf32> to vector<8x32xbf16>
    %359 = arith.index_cast %306 : i32 to index
    %c0_96 = arith.constant 0 : index
    %c32_97 = arith.constant 32 : index
    %360 = vector.load %arg13[%359, %c0_96, %c32_97] : memref<8x8x64xbf16, #tpu.memory_space<vmem>>, vector<1x8x32xbf16>
    %361 = vector.shape_cast %360 : vector<1x8x32xbf16> to vector<8x32xbf16>
    %362 = vector.shape_cast %358 : vector<8x32xbf16> to vector<1x8x32xbf16>
    tpu.vector_store %arg13[%359, %c0_96, %c32_97], %362 {strides = array<i32>} : memref<8x8x64xbf16, #tpu.memory_space<vmem>>, vector<1x8x32xbf16>,
    %c6_i32 = arith.constant 6 : i32
    %c7_i32_98 = arith.constant 7 : i32
    %363 = arith.subi %c7_i32_98, %c6_i32 : i32
    %364 = arith.index_cast %c6_i32 : i32 to index
    %c0_99 = arith.constant 0 : index
    %c0_100 = arith.constant 0 : index
    %365 = vector.load %arg11[%364, %c0_99, %c0_100] : memref<8x8x128xbf16, #tpu.memory_space<vmem>>, vector<1x8x128xbf16>
    %366 = vector.shape_cast %365 : vector<1x8x128xbf16> to vector<8x128xbf16>
    %367 = arith.extf %366 : vector<8x128xbf16> to vector<8x128xf32>
    %368 = arith.truncf %329 : vector<8x32xf32> to vector<8x32xbf16>
    %cst_101 = arith.constant dense<0.000000e+00> : vector<8x128xf32>
    %369 = tpu.matmul %368, %18, %cst_101 {dimension_numbers = #tpu.dot_dimension_numbers<[1], [0], [0], [1], [0, 0, 1, 1], [], []>} : vector<8x32xbf16>, vector<32x128xbf16>, vector<8x128xf32> -> vector<8x128xf32>
    %370 = arith.addf %367, %369 : vector<8x128xf32>
    %371 = vector.extract_strided_slice %370 {offsets = [0, 0], sizes = [8, 96], strides = [1, 1]} : vector<8x128xf32> to vector<8x96xf32>
    %372 = arith.negf %371 : vector<8x96xf32>
    %373 = math.exp %372 : vector<8x96xf32>
    %cst_102 = arith.constant 1.000000e+00 : f32
    %374 = vector.broadcast %cst_102 : f32 to vector<8x96xf32>
    %375 = arith.addf %374, %373 : vector<8x96xf32>
    %376 = arith.divf %374, %375 : vector<8x96xf32>
    %377 = vector.extract_strided_slice %376 {offsets = [0, 0], sizes = [8, 32], strides = [1, 1]} : vector<8x96xf32> to vector<8x32xf32>
    %378 = vector.extract_strided_slice %376 {offsets = [0, 32], sizes = [8, 32], strides = [1, 1]} : vector<8x96xf32> to vector<8x32xf32>
    %379 = vector.extract_strided_slice %376 {offsets = [0, 64], sizes = [8, 32], strides = [1, 1]} : vector<8x96xf32> to vector<8x32xf32>
    %380 = vector.extract_strided_slice %370 {offsets = [0, 96], sizes = [8, 32], strides = [1, 1]} : vector<8x128xf32> to vector<8x32xf32>
    %381 = math.tanh %380 : vector<8x32xf32>
    %382 = arith.mulf %378, %327 : vector<8x32xf32>
    %383 = arith.mulf %377, %381 : vector<8x32xf32>
    %384 = arith.addf %382, %383 : vector<8x32xf32>
    %385 = math.tanh %384 : vector<8x32xf32>
    %386 = arith.mulf %379, %385 : vector<8x32xf32>
    %387 = arith.index_cast %363 : i32 to index
    %c0_103 = arith.constant 0 : index
    %c0_104 = arith.constant 0 : index
    %388 = vector.load %arg12[%387, %c0_103, %c0_104] : memref<8x8x128xbf16, #tpu.memory_space<vmem>>, vector<1x8x128xbf16>
    %389 = vector.shape_cast %388 : vector<1x8x128xbf16> to vector<8x128xbf16>
    %390 = arith.extf %389 : vector<8x128xbf16> to vector<8x128xf32>
    %391 = arith.truncf %352 : vector<8x32xf32> to vector<8x32xbf16>
    %cst_105 = arith.constant dense<0.000000e+00> : vector<8x128xf32>
    %392 = tpu.matmul %391, %19, %cst_105 {dimension_numbers = #tpu.dot_dimension_numbers<[1], [0], [0], [1], [0, 0, 1, 1], [], []>} : vector<8x32xbf16>, vector<32x128xbf16>, vector<8x128xf32> -> vector<8x128xf32>
    %393 = arith.addf %390, %392 : vector<8x128xf32>
    %394 = vector.extract_strided_slice %393 {offsets = [0, 0], sizes = [8, 96], strides = [1, 1]} : vector<8x128xf32> to vector<8x96xf32>
    %395 = arith.negf %394 : vector<8x96xf32>
    %396 = math.exp %395 : vector<8x96xf32>
    %cst_106 = arith.constant 1.000000e+00 : f32
    %397 = vector.broadcast %cst_106 : f32 to vector<8x96xf32>
    %398 = arith.addf %397, %396 : vector<8x96xf32>
    %399 = arith.divf %397, %398 : vector<8x96xf32>
    %400 = vector.extract_strided_slice %399 {offsets = [0, 0], sizes = [8, 32], strides = [1, 1]} : vector<8x96xf32> to vector<8x32xf32>
    %401 = vector.extract_strided_slice %399 {offsets = [0, 32], sizes = [8, 32], strides = [1, 1]} : vector<8x96xf32> to vector<8x32xf32>
    %402 = vector.extract_strided_slice %399 {offsets = [0, 64], sizes = [8, 32], strides = [1, 1]} : vector<8x96xf32> to vector<8x32xf32>
    %403 = vector.extract_strided_slice %393 {offsets = [0, 96], sizes = [8, 32], strides = [1, 1]} : vector<8x128xf32> to vector<8x32xf32>
    %404 = math.tanh %403 : vector<8x32xf32>
    %405 = arith.mulf %401, %350 : vector<8x32xf32>
    %406 = arith.mulf %400, %404 : vector<8x32xf32>
    %407 = arith.addf %405, %406 : vector<8x32xf32>
    %408 = math.tanh %407 : vector<8x32xf32>
    %409 = arith.mulf %402, %408 : vector<8x32xf32>
    %410 = arith.truncf %386 : vector<8x32xf32> to vector<8x32xbf16>
    %411 = arith.index_cast %c6_i32 : i32 to index
    %c0_107 = arith.constant 0 : index
    %c0_108 = arith.constant 0 : index
    %412 = vector.load %arg13[%411, %c0_107, %c0_108] : memref<8x8x64xbf16, #tpu.memory_space<vmem>>, vector<1x8x32xbf16>
    %413 = vector.shape_cast %412 : vector<1x8x32xbf16> to vector<8x32xbf16>
    %414 = vector.shape_cast %410 : vector<8x32xbf16> to vector<1x8x32xbf16>
    tpu.vector_store %arg13[%411, %c0_107, %c0_108], %414 {strides = array<i32>} : memref<8x8x64xbf16, #tpu.memory_space<vmem>>, vector<1x8x32xbf16>,
    %415 = arith.truncf %409 : vector<8x32xf32> to vector<8x32xbf16>
    %416 = arith.index_cast %363 : i32 to index
    %c0_109 = arith.constant 0 : index
    %c32_110 = arith.constant 32 : index
    %417 = vector.load %arg13[%416, %c0_109, %c32_110] : memref<8x8x64xbf16, #tpu.memory_space<vmem>>, vector<1x8x32xbf16>
    %418 = vector.shape_cast %417 : vector<1x8x32xbf16> to vector<8x32xbf16>
    %419 = vector.shape_cast %415 : vector<8x32xbf16> to vector<1x8x32xbf16>
    tpu.vector_store %arg13[%416, %c0_109, %c32_110], %419 {strides = array<i32>} : memref<8x8x64xbf16, #tpu.memory_space<vmem>>, vector<1x8x32xbf16>,
    %c7_i32_111 = arith.constant 7 : i32
    %c7_i32_112 = arith.constant 7 : i32
    %420 = arith.subi %c7_i32_112, %c7_i32_111 : i32
    %421 = arith.index_cast %c7_i32_111 : i32 to index
    %c0_113 = arith.constant 0 : index
    %c0_114 = arith.constant 0 : index
    %422 = vector.load %arg11[%421, %c0_113, %c0_114] : memref<8x8x128xbf16, #tpu.memory_space<vmem>>, vector<1x8x128xbf16>
    %423 = vector.shape_cast %422 : vector<1x8x128xbf16> to vector<8x128xbf16>
    %424 = arith.extf %423 : vector<8x128xbf16> to vector<8x128xf32>
    %425 = arith.truncf %386 : vector<8x32xf32> to vector<8x32xbf16>
    %cst_115 = arith.constant dense<0.000000e+00> : vector<8x128xf32>
    %426 = tpu.matmul %425, %18, %cst_115 {dimension_numbers = #tpu.dot_dimension_numbers<[1], [0], [0], [1], [0, 0, 1, 1], [], []>} : vector<8x32xbf16>, vector<32x128xbf16>, vector<8x128xf32> -> vector<8x128xf32>
    %427 = arith.addf %424, %426 : vector<8x128xf32>
    %428 = vector.extract_strided_slice %427 {offsets = [0, 0], sizes = [8, 96], strides = [1, 1]} : vector<8x128xf32> to vector<8x96xf32>
    %429 = arith.negf %428 : vector<8x96xf32>
    %430 = math.exp %429 : vector<8x96xf32>
    %cst_116 = arith.constant 1.000000e+00 : f32
    %431 = vector.broadcast %cst_116 : f32 to vector<8x96xf32>
    %432 = arith.addf %431, %430 : vector<8x96xf32>
    %433 = arith.divf %431, %432 : vector<8x96xf32>
    %434 = vector.extract_strided_slice %433 {offsets = [0, 0], sizes = [8, 32], strides = [1, 1]} : vector<8x96xf32> to vector<8x32xf32>
    %435 = vector.extract_strided_slice %433 {offsets = [0, 32], sizes = [8, 32], strides = [1, 1]} : vector<8x96xf32> to vector<8x32xf32>
    %436 = vector.extract_strided_slice %433 {offsets = [0, 64], sizes = [8, 32], strides = [1, 1]} : vector<8x96xf32> to vector<8x32xf32>
    %437 = vector.extract_strided_slice %427 {offsets = [0, 96], sizes = [8, 32], strides = [1, 1]} : vector<8x128xf32> to vector<8x32xf32>
    %438 = math.tanh %437 : vector<8x32xf32>
    %439 = arith.mulf %435, %384 : vector<8x32xf32>
    %440 = arith.mulf %434, %438 : vector<8x32xf32>
    %441 = arith.addf %439, %440 : vector<8x32xf32>
    %442 = math.tanh %441 : vector<8x32xf32>
    %443 = arith.mulf %436, %442 : vector<8x32xf32>
    %444 = arith.index_cast %420 : i32 to index
    %c0_117 = arith.constant 0 : index
    %c0_118 = arith.constant 0 : index
    %445 = vector.load %arg12[%444, %c0_117, %c0_118] : memref<8x8x128xbf16, #tpu.memory_space<vmem>>, vector<1x8x128xbf16>
    %446 = vector.shape_cast %445 : vector<1x8x128xbf16> to vector<8x128xbf16>
    %447 = arith.extf %446 : vector<8x128xbf16> to vector<8x128xf32>
    %448 = arith.truncf %409 : vector<8x32xf32> to vector<8x32xbf16>
    %cst_119 = arith.constant dense<0.000000e+00> : vector<8x128xf32>
    %449 = tpu.matmul %448, %19, %cst_119 {dimension_numbers = #tpu.dot_dimension_numbers<[1], [0], [0], [1], [0, 0, 1, 1], [], []>} : vector<8x32xbf16>, vector<32x128xbf16>, vector<8x128xf32> -> vector<8x128xf32>
    %450 = arith.addf %447, %449 : vector<8x128xf32>
    %451 = vector.extract_strided_slice %450 {offsets = [0, 0], sizes = [8, 96], strides = [1, 1]} : vector<8x128xf32> to vector<8x96xf32>
    %452 = arith.negf %451 : vector<8x96xf32>
    %453 = math.exp %452 : vector<8x96xf32>
    %cst_120 = arith.constant 1.000000e+00 : f32
    %454 = vector.broadcast %cst_120 : f32 to vector<8x96xf32>
    %455 = arith.addf %454, %453 : vector<8x96xf32>
    %456 = arith.divf %454, %455 : vector<8x96xf32>
    %457 = vector.extract_strided_slice %456 {offsets = [0, 0], sizes = [8, 32], strides = [1, 1]} : vector<8x96xf32> to vector<8x32xf32>
    %458 = vector.extract_strided_slice %456 {offsets = [0, 32], sizes = [8, 32], strides = [1, 1]} : vector<8x96xf32> to vector<8x32xf32>
    %459 = vector.extract_strided_slice %456 {offsets = [0, 64], sizes = [8, 32], strides = [1, 1]} : vector<8x96xf32> to vector<8x32xf32>
    %460 = vector.extract_strided_slice %450 {offsets = [0, 96], sizes = [8, 32], strides = [1, 1]} : vector<8x128xf32> to vector<8x32xf32>
    %461 = math.tanh %460 : vector<8x32xf32>
    %462 = arith.mulf %458, %407 : vector<8x32xf32>
    %463 = arith.mulf %457, %461 : vector<8x32xf32>
    %464 = arith.addf %462, %463 : vector<8x32xf32>
    %465 = math.tanh %464 : vector<8x32xf32>
    %466 = arith.mulf %459, %465 : vector<8x32xf32>
    %467 = arith.truncf %443 : vector<8x32xf32> to vector<8x32xbf16>
    %468 = arith.index_cast %c7_i32_111 : i32 to index
    %c0_121 = arith.constant 0 : index
    %c0_122 = arith.constant 0 : index
    %469 = vector.load %arg13[%468, %c0_121, %c0_122] : memref<8x8x64xbf16, #tpu.memory_space<vmem>>, vector<1x8x32xbf16>
    %470 = vector.shape_cast %469 : vector<1x8x32xbf16> to vector<8x32xbf16>
    %471 = vector.shape_cast %467 : vector<8x32xbf16> to vector<1x8x32xbf16>
    tpu.vector_store %arg13[%468, %c0_121, %c0_122], %471 {strides = array<i32>} : memref<8x8x64xbf16, #tpu.memory_space<vmem>>, vector<1x8x32xbf16>,
    %472 = arith.truncf %466 : vector<8x32xf32> to vector<8x32xbf16>
    %473 = arith.index_cast %420 : i32 to index
    %c0_123 = arith.constant 0 : index
    %c32_124 = arith.constant 32 : index
    %474 = vector.load %arg13[%473, %c0_123, %c32_124] : memref<8x8x64xbf16, #tpu.memory_space<vmem>>, vector<1x8x32xbf16>
    %475 = vector.shape_cast %474 : vector<1x8x32xbf16> to vector<8x32xbf16>
    %476 = vector.shape_cast %472 : vector<8x32xbf16> to vector<1x8x32xbf16>
    tpu.vector_store %arg13[%473, %c0_123, %c32_124], %476 {strides = array<i32>} : memref<8x8x64xbf16, #tpu.memory_space<vmem>>, vector<1x8x32xbf16>,
    %c8_i32 = arith.constant 8 : i32
    %c0_125 = arith.constant 0 : index
    %c0_126 = arith.constant 0 : index
    %c0_127 = arith.constant 0 : index
    %477 = vector.load %arg13[%c0_125, %c0_126, %c0_127] : memref<8x8x64xbf16, #tpu.memory_space<vmem>>, vector<8x8x64xbf16>
    %478 = vector.shape_cast %477 : vector<8x8x64xbf16> to vector<64x64xbf16>
    %c0_128 = arith.constant 0 : index
    %c0_129 = arith.constant 0 : index
    %479 = vector.load %arg8[%c0_128, %c0_129] : memref<64x128xbf16, #tpu.memory_space<vmem>>, vector<64x128xbf16>
    %cst_130 = arith.constant dense<0.000000e+00> : vector<64x128xf32>
    %480 = tpu.matmul %478, %479, %cst_130 {dimension_numbers = #tpu.dot_dimension_numbers<[1], [0], [0], [1], [0, 0, 1, 1], [], []>} : vector<64x64xbf16>, vector<64x128xbf16>, vector<64x128xf32> -> vector<64x128xf32>
    %c0_131 = arith.constant 0 : index
    %c0_132 = arith.constant 0 : index
    %481 = vector.load %arg9[%c0_131, %c0_132] : memref<1x128xf32, #tpu.memory_space<vmem>>, vector<1x128xf32>
    %482 = vector.broadcast %481 : vector<1x128xf32> to vector<64x128xf32>
    %483 = arith.addf %480, %482 : vector<64x128xf32>
    %484 = vector.shape_cast %483 : vector<64x128xf32> to vector<8x8x128xf32>
    %c0_133 = arith.constant 0 : index
    %c0_134 = arith.constant 0 : index
    %c0_135 = arith.constant 0 : index
    %485 = vector.load %arg10[%c0_133, %c0_134, %c0_135] : memref<8x8x128xf32, #tpu.memory_space<vmem>>, vector<8x8x128xf32>
    tpu.vector_store %arg10[%c0_133, %c0_134, %c0_135], %484 {strides = array<i32>} : memref<8x8x128xf32, #tpu.memory_space<vmem>>, vector<8x8x128xf32>,
    return
  }
  func.func @transform_0(%arg0: i32) -> (i32, i32, i32) {
    %c0_i32 = arith.constant 0 : i32
    %c0_i32_0 = arith.constant 0 : i32
    %c0_i32_1 = arith.constant 0 : i32
    return %c0_i32, %arg0, %c0_i32_0 : i32, i32, i32
  }
  func.func @transform_1(%arg0: i32) -> (i32, i32) {
    %c0_i32 = arith.constant 0 : i32
    %c0_i32_0 = arith.constant 0 : i32
    %c0_i32_1 = arith.constant 0 : i32
    return %c0_i32, %c0_i32_0 : i32, i32
  }
  func.func @transform_2(%arg0: i32) -> (i32, i32) {
    %c0_i32 = arith.constant 0 : i32
    %c0_i32_0 = arith.constant 0 : i32
    %c0_i32_1 = arith.constant 0 : i32
    return %c0_i32, %c0_i32_0 : i32, i32
  }
  func.func @transform_3(%arg0: i32) -> (i32, i32) {
    %c0_i32 = arith.constant 0 : i32
    %c0_i32_0 = arith.constant 0 : i32
    %c0_i32_1 = arith.constant 0 : i32
    return %c0_i32, %c0_i32_0 : i32, i32
  }
  func.func @transform_4(%arg0: i32) -> (i32, i32) {
    %c0_i32 = arith.constant 0 : i32
    %c0_i32_0 = arith.constant 0 : i32
    %c0_i32_1 = arith.constant 0 : i32
    return %c0_i32, %c0_i32_0 : i32, i32
  }
  func.func @transform_5(%arg0: i32) -> (i32, i32) {
    %c0_i32 = arith.constant 0 : i32
    %c0_i32_0 = arith.constant 0 : i32
    %c0_i32_1 = arith.constant 0 : i32
    return %c0_i32, %c0_i32_0 : i32, i32
  }
  func.func @transform_6(%arg0: i32) -> (i32, i32) {
    %c0_i32 = arith.constant 0 : i32
    %c0_i32_0 = arith.constant 0 : i32
    %c0_i32_1 = arith.constant 0 : i32
    return %c0_i32, %c0_i32_0 : i32, i32
  }
  func.func @transform_7(%arg0: i32) -> (i32, i32) {
    %c0_i32 = arith.constant 0 : i32
    %c0_i32_0 = arith.constant 0 : i32
    %c0_i32_1 = arith.constant 0 : i32
    return %c0_i32, %c0_i32_0 : i32, i32
  }
  func.func @transform_8(%arg0: i32) -> (i32, i32) {
    %c0_i32 = arith.constant 0 : i32
    %c0_i32_0 = arith.constant 0 : i32
    %c0_i32_1 = arith.constant 0 : i32
    return %c0_i32, %c0_i32_0 : i32, i32
  }
  func.func @transform_9(%arg0: i32) -> (i32, i32, i32) {
    %c0_i32 = arith.constant 0 : i32
    %c0_i32_0 = arith.constant 0 : i32
    %c0_i32_1 = arith.constant 0 : i32
    return %c0_i32, %arg0, %c0_i32_0 : i32, i32, i32
  }
}

</mosaic_0001>

<llo_original>
// kernel: classifier_forward.1
$region0: #{classifier_forward.1}
  #allocation0 [shape = 'u32[]', space=smem, size = 0x4, offset = 0x4, fixed_abs, tag = 'smem constant byte address 0x4 - core index']
  #allocation1 [shape = 'u32[144,128]{1,0:T(1,128)}', space=vmem, size = 0x12000, scoped, tag = 'internal scratch']
  #allocation2 [shape = 'bf16[8,8,128]{2,1,0:T(8,128)(2,1)}', space=vmem, size = 0x4000, scoped, tag = 'scratch operand']
  #allocation3 [shape = 'bf16[8,8,128]{2,1,0:T(8,128)(2,1)}', space=vmem, size = 0x4000, scoped, tag = 'scratch operand']
  #allocation4 [shape = 'bf16[8,8,64]{2,1,0:T(8,128)(2,1)}', space=vmem, size = 0x4000, scoped, tag = 'scratch operand']
  %s0 = inlined_call_operand.vmem [shape: bf16[8,16,64], index: 0, kind: input, shape index: {}]
  %s1 = inlined_call_operand.vmem [shape: bf16[64,128], index: 1, kind: input, shape index: {}]
  %s2 = inlined_call_operand.vmem [shape: bf16[32,128], index: 2, kind: input, shape index: {}]
  %s3 = inlined_call_operand.vmem [shape: f32[1,128], index: 3, kind: input, shape index: {}]
  %s4 = inlined_call_operand.vmem [shape: bf16[64,128], index: 4, kind: input, shape index: {}]
  %s5 = inlined_call_operand.vmem [shape: bf16[32,128], index: 5, kind: input, shape index: {}]
  %s6 = inlined_call_operand.vmem [shape: f32[1,128], index: 6, kind: input, shape index: {}]
  %s7 = inlined_call_operand.vmem [shape: bf16[64,128], index: 7, kind: input, shape index: {}]
  %s8 = inlined_call_operand.vmem [shape: f32[1,128], index: 8, kind: input, shape index: {}]
  %s9 = inlined_call_operand.vmem [shape: f32[8,16,128], index: 9, kind: output, shape index: {}]
  %s10 = sld [smem:[#allocation0]]
  $region144: #{classifier_forward.1} parent=0
    _
  %s12 = ssub.s32 1, %s10
  %s13 = scalar_select 0, %s12, %s10
  $region1: #{classifier_forward.1} parent=0
    #allocation5 [shape = 'u8[32768]{0}', space=vmem, size = 0x8000, scoped, tag = 'input window, operand 0']
    #allocation6 [shape = 'u8[65536]{0}', space=vmem, size = 0x10000, scoped, tag = 'output window, operand 0']
    loop: start=0, step=1, limit=4
    $region2: #{classifier_forward.1} parent=1 // loop_pre_header
      _
    $region3: #{classifier_forward.1} parent=1 // loop_header
      %s15 = sphi 0, %s19
      %p16 = scmp.ge.s32.totalorder %s15, 4
      %s25 = sphi 0, %s27
      %s28 = sphi 0, %s25
      %s29 = sphi 0, %s28
      %s45 = sphi 0, %s29
      %s49 = sphi 0, %s49
      %s51 = sphi 0, %s49
      %s52 = sphi 0, %s51
      %s66 = sphi 0, %s52
      %s70 = sphi 0, %s70
      %s72 = sphi 0, %s70
      %s73 = sphi 0, %s72
      %s87 = sphi 0, %s73
      %s91 = sphi 0, %s91
      %s93 = sphi 0, %s91
      %s94 = sphi 0, %s93
      %s108 = sphi 0, %s94
      %s112 = sphi 0, %s112
      %s114 = sphi 0, %s112
      %s115 = sphi 0, %s114
      %s129 = sphi 0, %s115
      %s133 = sphi 0, %s133
      %s135 = sphi 0, %s133
      %s136 = sphi 0, %s135
      %s150 = sphi 0, %s136
      %s154 = sphi 0, %s154
      %s156 = sphi 0, %s154
      %s157 = sphi 0, %s156
      %s171 = sphi 0, %s157
      %s175 = sphi 0, %s175
      %s177 = sphi 0, %s175
      %s178 = sphi 0, %s177
      %s192 = sphi 0, %s178
      %s196 = sphi 0, %s196
      %s198 = sphi 0, %s196
      %s199 = sphi 0, %s198
      %s213 = sphi 0, %s199
      %s219 = sphi 0, %s221
      %s222 = sphi 0, %s219
      %s223 = sphi 0, %s222
      %s239 = sphi 0, %s223
    $region4: #{classifier_forward.1} parent=1 // loop_header_branch
      %18 = sbr.rel (%p16) target = $region8
    $region5: #{classifier_forward.1} parent=1 // loop_body
      %s20 = ssub.s32 %s15, 1
      %s21 = ssub.s32 %s15, 2
      %s22 = sadd.s32 %s15, 1
      %s23 = ssub.s32 %s15, %s22
      %p24 = scmp.eq.s32.totalorder %s23, 0
      %s26 = sadd.s32 %s25, 1
      %s27 = scalar_select %p24, %s25, %s26
      %p30 = pneg %p24
      %p31 = scmp.eq.s32.totalorder %s15, 1
      %p32 = por %p30, %p31
      %p33 = scmp.ne.s32.totalorder %s25, %s28
      %p34 = scmp.eq.s32.totalorder %s15, 0
      %p35 = por %p33, %p34
      %p36 = scmp.ne.s32.totalorder %s25, %s28
      %p37 = scmp.eq.s32.totalorder %s20, 1
      %p38 = por %p36, %p37
      %p39 = scmp.ne.s32.totalorder %s28, %s29
      %p40 = scmp.eq.s32.totalorder %s20, 0
      %p41 = por %p39, %p40
      %p42 = scmp.ne.s32.totalorder %s28, %s29
      %p43 = scmp.eq.s32.totalorder %s21, 1
      %p44 = por %p42, %p43
      %p46 = scmp.ne.s32.totalorder %s29, %s45
      %p47 = scmp.eq.s32.totalorder %s21, 0
      %p48 = por %p46, %p47
      %s50 = sadd.s32 %s49, 1
      %p53 = scmp.eq.s32.totalorder %s15, 1
      %p54 = scmp.ne.s32.totalorder %s49, %s51
      %p55 = scmp.eq.s32.totalorder %s15, 0
      %p56 = por %p54, %p55
      %p57 = scmp.ne.s32.totalorder %s49, %s51
      %p58 = scmp.eq.s32.totalorder %s20, 1
      %p59 = por %p57, %p58
      %p60 = scmp.ne.s32.totalorder %s51, %s52
      %p61 = scmp.eq.s32.totalorder %s20, 0
      %p62 = por %p60, %p61
      %p63 = scmp.ne.s32.totalorder %s51, %s52
      %p64 = scmp.eq.s32.totalorder %s21, 1
      %p65 = por %p63, %p64
      %p67 = scmp.ne.s32.totalorder %s52, %s66
      %p68 = scmp.eq.s32.totalorder %s21, 0
      %p69 = por %p67, %p68
      %s71 = sadd.s32 %s70, 1
      %p74 = scmp.eq.s32.totalorder %s15, 1
      %p75 = scmp.ne.s32.totalorder %s70, %s72
      %p76 = scmp.eq.s32.totalorder %s15, 0
      %p77 = por %p75, %p76
      %p78 = scmp.ne.s32.totalorder %s70, %s72
      %p79 = scmp.eq.s32.totalorder %s20, 1
      %p80 = por %p78, %p79
      %p81 = scmp.ne.s32.totalorder %s72, %s73
      %p82 = scmp.eq.s32.totalorder %s20, 0
      %p83 = por %p81, %p82
      %p84 = scmp.ne.s32.totalorder %s72, %s73
      %p85 = scmp.eq.s32.totalorder %s21, 1
      %p86 = por %p84, %p85
      %p88 = scmp.ne.s32.totalorder %s73, %s87
      %p89 = scmp.eq.s32.totalorder %s21, 0
      %p90 = por %p88, %p89
      %s92 = sadd.s32 %s91, 1
      %p95 = scmp.eq.s32.totalorder %s15, 1
      %p96 = scmp.ne.s32.totalorder %s91, %s93
      %p97 = scmp.eq.s32.totalorder %s15, 0
      %p98 = por %p96, %p97
      %p99 = scmp.ne.s32.totalorder %s91, %s93
      %p100 = scmp.eq.s32.totalorder %s20, 1
      %p101 = por %p99, %p100
      %p102 = scmp.ne.s32.totalorder %s93, %s94
      %p103 = scmp.eq.s32.totalorder %s20, 0
      %p104 = por %p102, %p103
      %p105 = scmp.ne.s32.totalorder %s93, %s94
      %p106 = scmp.eq.s32.totalorder %s21, 1
      %p107 = por %p105, %p106
      %p109 = scmp.ne.s32.totalorder %s94, %s108
      %p110 = scmp.eq.s32.totalorder %s21, 0
      %p111 = por %p109, %p110
      %s113 = sadd.s32 %s112, 1
      %p116 = scmp.eq.s32.totalorder %s15, 1
      %p117 = scmp.ne.s32.totalorder %s112, %s114
      %p118 = scmp.eq.s32.totalorder %s15, 0
      %p119 = por %p117, %p118
      %p120 = scmp.ne.s32.totalorder %s112, %s114
      %p121 = scmp.eq.s32.totalorder %s20, 1
      %p122 = por %p120, %p121
      %p123 = scmp.ne.s32.totalorder %s114, %s115
      %p124 = scmp.eq.s32.totalorder %s20, 0
      %p125 = por %p123, %p124
      %p126 = scmp.ne.s32.totalorder %s114, %s115
      %p127 = scmp.eq.s32.totalorder %s21, 1
      %p128 = por %p126, %p127
      %p130 = scmp.ne.s32.totalorder %s115, %s129
      %p131 = scmp.eq.s32.totalorder %s21, 0
      %p132 = por %p130, %p131
      %s134 = sadd.s32 %s133, 1
      %p137 = scmp.eq.s32.totalorder %s15, 1
      %p138 = scmp.ne.s32.totalorder %s133, %s135
      %p139 = scmp.eq.s32.totalorder %s15, 0
      %p140 = por %p138, %p139
      %p141 = scmp.ne.s32.totalorder %s133, %s135
      %p142 = scmp.eq.s32.totalorder %s20, 1
      %p143 = por %p141, %p142
      %p144 = scmp.ne.s32.totalorder %s135, %s136
      %p145 = scmp.eq.s32.totalorder %s20, 0
      %p146 = por %p144, %p145
      %p147 = scmp.ne.s32.totalorder %s135, %s136
      %p148 = scmp.eq.s32.totalorder %s21, 1
      %p149 = por %p147, %p148
      %p151 = scmp.ne.s32.totalorder %s136, %s150
      %p152 = scmp.eq.s32.totalorder %s21, 0
      %p153 = por %p151, %p152
      %s155 = sadd.s32 %s154, 1
      %p158 = scmp.eq.s32.totalorder %s15, 1
      %p159 = scmp.ne.s32.totalorder %s154, %s156
      %p160 = scmp.eq.s32.totalorder %s15, 0
      %p161 = por %p159, %p160
      %p162 = scmp.ne.s32.totalorder %s154, %s156
      %p163 = scmp.eq.s32.totalorder %s20, 1
      %p164 = por %p162, %p163
      %p165 = scmp.ne.s32.totalorder %s156, %s157
      %p166 = scmp.eq.s32.totalorder %s20, 0
      %p167 = por %p165, %p166
      %p168 = scmp.ne.s32.totalorder %s156, %s157
      %p169 = scmp.eq.s32.totalorder %s21, 1
      %p170 = por %p168, %p169
      %p172 = scmp.ne.s32.totalorder %s157, %s171
      %p173 = scmp.eq.s32.totalorder %s21, 0
      %p174 = por %p172, %p173
      %s176 = sadd.s32 %s175, 1
      %p179 = scmp.eq.s32.totalorder %s15, 1
      %p180 = scmp.ne.s32.totalorder %s175, %s177
      %p181 = scmp.eq.s32.totalorder %s15, 0
      %p182 = por %p180, %p181
      %p183 = scmp.ne.s32.totalorder %s175, %s177
      %p184 = scmp.eq.s32.totalorder %s20, 1
      %p185 = por %p183, %p184
      %p186 = scmp.ne.s32.totalorder %s177, %s178
      %p187 = scmp.eq.s32.totalorder %s20, 0
      %p188 = por %p186, %p187
      %p189 = scmp.ne.s32.totalorder %s177, %s178
      %p190 = scmp.eq.s32.totalorder %s21, 1
      %p191 = por %p189, %p190
      %p193 = scmp.ne.s32.totalorder %s178, %s192
      %p194 = scmp.eq.s32.totalorder %s21, 0
      %p195 = por %p193, %p194
      %s197 = sadd.s32 %s196, 1
      %p200 = scmp.eq.s32.totalorder %s15, 1
      %p201 = scmp.ne.s32.totalorder %s196, %s198
      %p202 = scmp.eq.s32.totalorder %s15, 0
      %p203 = por %p201, %p202
      %p204 = scmp.ne.s32.totalorder %s196, %s198
      %p205 = scmp.eq.s32.totalorder %s20, 1
      %p206 = por %p204, %p205
      %p207 = scmp.ne.s32.totalorder %s198, %s199
      %p208 = scmp.eq.s32.totalorder %s20, 0
      %p209 = por %p207, %p208
      %p210 = scmp.ne.s32.totalorder %s198, %s199
      %p211 = scmp.eq.s32.totalorder %s21, 1
      %p212 = por %p210, %p211
      %p214 = scmp.ne.s32.totalorder %s199, %s213
      %p215 = scmp.eq.s32.totalorder %s21, 0
      %p216 = por %p214, %p215
      %s217 = ssub.s32 %s15, %s22
      %p218 = scmp.eq.s32.totalorder %s217, 0
      %s220 = sadd.s32 %s219, 1
      %s221 = scalar_select %p218, %s219, %s220
      %p224 = pneg %p218
      %p225 = scmp.eq.s32.totalorder %s15, 1
      %p226 = por %p224, %p225
      %p227 = scmp.ne.s32.totalorder %s219, %s222
      %p228 = scmp.eq.s32.totalorder %s15, 0
      %p229 = por %p227, %p228
      %p230 = scmp.ne.s32.totalorder %s219, %s222
      %p231 = scmp.eq.s32.totalorder %s20, 1
      %p232 = por %p230, %p231
      %p233 = scmp.ne.s32.totalorder %s222, %s223
      %p234 = scmp.eq.s32.totalorder %s20, 0
      %p235 = por %p233, %p234
      %p236 = scmp.ne.s32.totalorder %s222, %s223
      %p237 = scmp.eq.s32.totalorder %s21, 1
      %p238 = por %p236, %p237
      %p240 = scmp.ne.s32.totalorder %s223, %s239
      %p241 = scmp.eq.s32.totalorder %s21, 0
      %p242 = por %p240, %p241
      %p243 = scmp.le.s32.totalorder 1, %s15
      %p244 = scmp.lt.s32.totalorder %s15, 3
      %p245 = pnand %p243, %p244
      %p246 = pneg %p245
      // Predicated region
      $region9: #{classifier_forward.1} parent=5 // pred_check
        _
      $region10: #{classifier_forward.1} parent=5 // pred_check_branch
        %248 = sbr.rel (%p245) target = $region12
      $region11: #{classifier_forward.1} parent=5 // pred_region
        %s249 = ssub.s32 %s15, 1
        // Predicated region
        $region13: #{classifier_forward.1} parent=11 // pred_check
          %p250 = pneg %p62
        $region14: #{classifier_forward.1} parent=11 // pred_check_branch
          %252 = sbr.rel (%p250) target = $region16
        $region15: #{classifier_forward.1} parent=11 // pred_region
          _
        $region16: #{classifier_forward.1} parent=11 // pred_fallthru
          _
        // Predicated region
        $region17: #{classifier_forward.1} parent=11 // pred_check
          %p253 = pneg %p83
        $region18: #{classifier_forward.1} parent=11 // pred_check_branch
          %255 = sbr.rel (%p253) target = $region20
        $region19: #{classifier_forward.1} parent=11 // pred_region
          _
        $region20: #{classifier_forward.1} parent=11 // pred_fallthru
          _
        // Predicated region
        $region21: #{classifier_forward.1} parent=11 // pred_check
          %p256 = pneg %p104
        $region22: #{classifier_forward.1} parent=11 // pred_check_branch
          %258 = sbr.rel (%p256) target = $region24
        $region23: #{classifier_forward.1} parent=11 // pred_region
          _
        $region24: #{classifier_forward.1} parent=11 // pred_fallthru
          _
        // Predicated region
        $region25: #{classifier_forward.1} parent=11 // pred_check
          %p259 = pneg %p125
        $region26: #{classifier_forward.1} parent=11 // pred_check_branch
          %261 = sbr.rel (%p259) target = $region28
        $region27: #{classifier_forward.1} parent=11 // pred_region
          _
        $region28: #{classifier_forward.1} parent=11 // pred_fallthru
          _
        // Predicated region
        $region29: #{classifier_forward.1} parent=11 // pred_check
          %p262 = pneg %p146
        $region30: #{classifier_forward.1} parent=11 // pred_check_branch
          %264 = sbr.rel (%p262) target = $region32
        $region31: #{classifier_forward.1} parent=11 // pred_region
          _
        $region32: #{classifier_forward.1} parent=11 // pred_fallthru
          _
        // Predicated region
        $region33: #{classifier_forward.1} parent=11 // pred_check
          %p265 = pneg %p167
        $region34: #{classifier_forward.1} parent=11 // pred_check_branch
          %267 = sbr.rel (%p265) target = $region36
        $region35: #{classifier_forward.1} parent=11 // pred_region
          _
        $region36: #{classifier_forward.1} parent=11 // pred_fallthru
          _
        // Predicated region
        $region37: #{classifier_forward.1} parent=11 // pred_check
          %p268 = pneg %p188
        $region38: #{classifier_forward.1} parent=11 // pred_check_branch
          %270 = sbr.rel (%p268) target = $region40
        $region39: #{classifier_forward.1} parent=11 // pred_region
          _
        $region40: #{classifier_forward.1} parent=11 // pred_fallthru
          _
        // Predicated region
        $region41: #{classifier_forward.1} parent=11 // pred_check
          %p271 = pneg %p209
        $region42: #{classifier_forward.1} parent=11 // pred_check_branch
          %273 = sbr.rel (%p271) target = $region44
        $region43: #{classifier_forward.1} parent=11 // pred_region
          _
        $region44: #{classifier_forward.1} parent=11 // pred_fallthru
          _
      $region12: #{classifier_forward.1} parent=5 // pred_fallthru
        _
      %p274 = scmp.lt.s32.totalorder %s15, 2
      // Predicated region
      $region45: #{classifier_forward.1} parent=5 // pred_check
        %p275 = pneg %p274
      $region46: #{classifier_forward.1} parent=5 // pred_check_branch
        %277 = sbr.rel (%p275) target = $region48
      $region47: #{classifier_forward.1} parent=5 // pred_region
        // Predicated region
        $region49: #{classifier_forward.1} parent=47 // pred_check
          %p278 = pneg %p35
        $region50: #{classifier_forward.1} parent=47 // pred_check_branch
          %280 = sbr.rel (%p278) target = $region52
        $region51: #{classifier_forward.1} parent=47 // pred_region
          %s281 = sand.u32 %s25, 1
          %s282 = sand.u32 %s25, 1
          %s283 = smul.addr %s282, 32
          %s284 = scalar_lea.vmem [#allocation5], %s283
          %s285 = smul.addr %s15, 4
          %s286 = scalar_lea.vmem %s0, %s285
          // Predicated region
          $region53: #{classifier_forward.1} parent=51 // pred_check
            _
          $region54: #{classifier_forward.1} parent=51 // pred_check_branch
            %288 = sbr.rel (0) target = $region56
          $region55: #{classifier_forward.1} parent=51 // pred_region
            // Predicated region
            $region57: #{classifier_forward.1} parent=55 // pred_check
              _
            $region58: #{classifier_forward.1} parent=55 // pred_check_branch
              %290 = sbr.rel target = $region60
            $region59: #{classifier_forward.1} parent=55 // pred_region
              // Predicated region
              $region72: #{classifier_forward.1} parent=59 // pred_check
                _
              $region73: #{classifier_forward.1} parent=59 // pred_check_branch
                %319 = sbr.rel (0) target = $region75
              $region74: #{classifier_forward.1} parent=59 // pred_region
                loop: start=0, step=1, limit=1
                $region76: #{classifier_forward.1} parent=74 // loop_pre_header
                  _
                $region77: #{classifier_forward.1} parent=74 // loop_header
                  %s321 = sphi 0, %s325
                  %p322 = scmp.ge.s32.totalorder %s321, 1
                  %s326 = sphi %s286, %s286
                  %s327 = sphi %s284, %s284
                $region78: #{classifier_forward.1} parent=74 // loop_header_branch
                  %324 = sbr.rel (%p322) target = $region82
                $region79: #{classifier_forward.1} parent=74 // loop_body
                  _
                $region80: #{classifier_forward.1} parent=74 // loop_footer
                  %s325 = sadd.s32 1, %s321
                $region81: #{classifier_forward.1} parent=74 // loop_footer_branch
                  %320 = sbr.rel target = $region77
                $region82: #{classifier_forward.1} parent=74 // loop_exit
                  _
                loop: start=0, step=1, limit=1
                $region83: #{classifier_forward.1} parent=74 // loop_pre_header
                  _
                $region84: #{classifier_forward.1} parent=74 // loop_header
                  %s330 = sphi 0, %s334
                  %p331 = scmp.ge.s32.totalorder %s330, 1
                  %s335 = sphi %s286, %s286
                  %s336 = sphi %s284, %s284
                $region85: #{classifier_forward.1} parent=74 // loop_header_branch
                  %333 = sbr.rel (%p331) target = $region89
                $region86: #{classifier_forward.1} parent=74 // loop_body
                  %v337 = vld [vmem:[%s335] sm:$0xf]
                  %338 = vst [vmem:[%s336] sm:$0xf] %v337
                  %v339 = vld [vmem:[%s335 + $0x8] sm:$0xf]
                  %340 = vst [vmem:[%s336 + $0x4] sm:$0xf] %v339
                  %v341 = vld [vmem:[%s335 + $0x10] sm:$0xf]
                  %342 = vst [vmem:[%s336 + $0x8] sm:$0xf] %v341
                  %v343 = vld [vmem:[%s335 + $0x18] sm:$0xf]
                  %344 = vst [vmem:[%s336 + $0xc] sm:$0xf] %v343
                  %v345 = vld [vmem:[%s335 + $0x20] sm:$0xf]
                  %346 = vst [vmem:[%s336 + $0x10] sm:$0xf] %v345
                  %v347 = vld [vmem:[%s335 + $0x28] sm:$0xf]
                  %348 = vst [vmem:[%s336 + $0x14] sm:$0xf] %v347
                  %v349 = vld [vmem:[%s335 + $0x30] sm:$0xf]
                  %350 = vst [vmem:[%s336 + $0x18] sm:$0xf] %v349
                  %v351 = vld [vmem:[%s335 + $0x38] sm:$0xf]
                  %352 = vst [vmem:[%s336 + $0x1c] sm:$0xf] %v351
                $region87: #{classifier_forward.1} parent=74 // loop_footer
                  %s334 = sadd.s32 1, %s330
                $region88: #{classifier_forward.1} parent=74 // loop_footer_branch
                  %329 = sbr.rel target = $region84
                $region89: #{classifier_forward.1} parent=74 // loop_exit
                  _
              $region75: #{classifier_forward.1} parent=59 // pred_fallthru
                _
            $region60: #{classifier_forward.1} parent=55 // pred_fallthru
              _
            // Predicated region
            $region61: #{classifier_forward.1} parent=55 // pred_check
              _
            $region62: #{classifier_forward.1} parent=55 // pred_check_branch
              %292 = sbr.rel (0) target = $region64
            $region63: #{classifier_forward.1} parent=55 // pred_region
              loop: start=0, step=1, limit=1
              $region65: #{classifier_forward.1} parent=63 // loop_pre_header
                _
              $region66: #{classifier_forward.1} parent=63 // loop_header
                %s295 = sphi 0, %s299
                %p296 = scmp.ge.s32.totalorder %s295, 1
                %s300 = sphi %s286, %s286
                %s301 = sphi %s284, %s284
              $region67: #{classifier_forward.1} parent=63 // loop_header_branch
                %298 = sbr.rel (%p296) target = $region71
              $region68: #{classifier_forward.1} parent=63 // loop_body
                %v302 = vld [vmem:[%s300] sm:$0xf]
                %303 = vst [vmem:[%s301] sm:$0xf] %v302
                %v304 = vld [vmem:[%s300 + $0x8] sm:$0xf]
                %305 = vst [vmem:[%s301 + $0x4] sm:$0xf] %v304
                %v306 = vld [vmem:[%s300 + $0x10] sm:$0xf]
                %307 = vst [vmem:[%s301 + $0x8] sm:$0xf] %v306
                %v308 = vld [vmem:[%s300 + $0x18] sm:$0xf]
                %309 = vst [vmem:[%s301 + $0xc] sm:$0xf] %v308
                %v310 = vld [vmem:[%s300 + $0x20] sm:$0xf]
                %311 = vst [vmem:[%s301 + $0x10] sm:$0xf] %v310
                %v312 = vld [vmem:[%s300 + $0x28] sm:$0xf]
                %313 = vst [vmem:[%s301 + $0x14] sm:$0xf] %v312
                %v314 = vld [vmem:[%s300 + $0x30] sm:$0xf]
                %315 = vst [vmem:[%s301 + $0x18] sm:$0xf] %v314
                %v316 = vld [vmem:[%s300 + $0x38] sm:$0xf]
                %317 = vst [vmem:[%s301 + $0x1c] sm:$0xf] %v316
              $region69: #{classifier_forward.1} parent=63 // loop_footer
                %s299 = sadd.s32 1, %s295
              $region70: #{classifier_forward.1} parent=63 // loop_footer_branch
                %294 = sbr.rel target = $region66
              $region71: #{classifier_forward.1} parent=63 // loop_exit
                _
            $region64: #{classifier_forward.1} parent=55 // pred_fallthru
              _
          $region56: #{classifier_forward.1} parent=51 // pred_fallthru
            _
          %353 = vnop
        $region52: #{classifier_forward.1} parent=47 // pred_fallthru
          _
      $region48: #{classifier_forward.1} parent=5 // pred_fallthru
        _
      %p354 = scmp.le.s32.totalorder 1, %s15
      %p355 = scmp.lt.s32.totalorder %s15, 3
      %p356 = pnand %p354, %p355
      %p357 = pneg %p356
      // Predicated region
      $region90: #{classifier_forward.1} parent=5 // pred_check
        _
      $region91: #{classifier_forward.1} parent=5 // pred_check_branch
        %359 = sbr.rel (%p356) target = $region93
      $region92: #{classifier_forward.1} parent=5 // pred_region
        %s360 = ssub.s32 %s15, 1
        %s361 = sand.u32 %s28, 1
        %s362 = sand.u32 %s28, 1
        %s363 = smul.addr %s362, 32
        %s364 = scalar_lea.vmem [#allocation5], %s363
        // Predicated region
        $region94: #{classifier_forward.1} parent=92 // pred_check
          %p365 = pneg %p41
        $region95: #{classifier_forward.1} parent=92 // pred_check_branch
          %367 = sbr.rel (%p365) target = $region97
        $region96: #{classifier_forward.1} parent=92 // pred_region
          _
        $region97: #{classifier_forward.1} parent=92 // pred_fallthru
          _
        %s368 = sand.u32 %s28, 1
        %s369 = sand.u32 %s28, 1
        %s370 = smul.addr %s369, 32
        %s371 = scalar_lea.vmem [#allocation5], %s370
        %p372 = pneg %p41
        %p373 = pneg %p38
        %p374 = pneg %p62
        %p375 = pneg %p59
        %p376 = pneg %p83
        %p377 = pneg %p80
        %p378 = pneg %p104
        %p379 = pneg %p101
        %p380 = pneg %p125
        %p381 = pneg %p122
        %p382 = pneg %p146
        %p383 = pneg %p143
        %p384 = pneg %p167
        %p385 = pneg %p164
        %p386 = pneg %p188
        %p387 = pneg %p185
        %p388 = pneg %p209
        %p389 = pneg %p206
        %p390 = pneg %p235
        %p391 = pneg %p232
        %s392 = sand.u32 %s222, 1
        %s393 = sand.u32 %s222, 1
        %s394 = smul.addr %s393, 64
        %s395 = scalar_lea.vmem [#allocation6], %s394
        %v397 = vld [vmem:[%s364] sm:$0xf]
        %v398 = vld [vmem:[%s364 + $0x4] sm:$0xf]
        %v399 = vld [vmem:[%s364 + $0x8] sm:$0xf]
        %v400 = vld [vmem:[%s364 + $0xc] sm:$0xf]
        %v401 = vld [vmem:[%s364 + $0x10] sm:$0xf]
        %v402 = vld [vmem:[%s364 + $0x14] sm:$0xf]
        %v403 = vld [vmem:[%s364 + $0x18] sm:$0xf]
        %v404 = vld [vmem:[%s364 + $0x1c] sm:$0xf]
        %v405 = vld [vmem:[%s1] sm:$0xf]
        %v406 = vld [vmem:[%s1 + $0x4] sm:$0xf]
        %v407 = vld [vmem:[%s1 + $0x8] sm:$0xf]
        %v408 = vld [vmem:[%s1 + $0xc] sm:$0xf]
        %v409 = vld [vmem:[%s1 + $0x10] sm:$0xf]
        %v410 = vld [vmem:[%s1 + $0x14] sm:$0xf]
        %v411 = vld [vmem:[%s1 + $0x18] sm:$0xf]
        %v412 = vld [vmem:[%s1 + $0x1c] sm:$0xf]
        %v413 = vld [vmem:[%s3] sm:$0x1]
        %v415 = vlaneseq
        %v416 = vshrl.u32 %v415, 7
        %v417 = vsub.s32 0, %v416
        %v418 = vrot.slane %v413, %v417
        %v428 = vunpack.c.l.b16 %v397
        %v429 = vunpack.c.l.b16 %v398
        %v430 = vunpack.c.l.b16 %v399
        %v431 = vunpack.c.l.b16 %v400
        %v432 = vunpack.c.l.b16 %v401
        %v433 = vunpack.c.l.b16 %v402
        %v434 = vunpack.c.l.b16 %v403
        %v435 = vunpack.c.l.b16 %v404
        %v436 = vpack.c.b16 %v429, %v428
        %v437 = vpack.c.b16 %v431, %v430
        %v438 = vpack.c.b16 %v433, %v432
        %v439 = vpack.c.b16 %v435, %v434
        %v448 = vunpack.c.l.b16 %v405
        %v449 = vunpack.c.l.b16 %v406
        %v450 = vunpack.c.l.b16 %v407
        %v451 = vunpack.c.l.b16 %v408
        %v452 = vunpack.c.l.b16 %v409
        %v453 = vunpack.c.l.b16 %v410
        %v454 = vunpack.c.l.b16 %v411
        %v455 = vunpack.c.l.b16 %v412
        %v456 = vpack.c.b16 %v449, %v448
        %v457 = vpack.c.b16 %v451, %v450
        %v458 = vpack.c.b16 %v453, %v452
        %v459 = vpack.c.b16 %v455, %v454
        %vm464 = vcmask 523264
        %v466 = vsel %vm464, %v436, 0
        %v469 = vsel %vm464, %v437, 0
        %v472 = vsel %vm464, %v438, 0
        %v475 = vsel %vm464, %v439, 0
        %477 = vmatprep.subr.bf16.mxu0 0
        %478 = vmatpush1.bf16.msra.mxu0 %v456
        %479 = vmatprep.subr.bf16.mxu0 0
        %480 = vmatpush1.bf16.msra.mxu0 %v457
        %481 = vmatprep.subr.bf16.mxu0 0
        %482 = vmatpush1.bf16.msra.mxu0 %v458
        %483 = vmatprep.subr.bf16.mxu0 0
        %484 = vmatpush1.bf16.msra.mxu0 %v459
        %485 = vmatprep.subr.bf16.mxu0 0
        %486 = vmatpush1.bf16.msra.mxu0 0
        %487 = vmatprep.subr.bf16.mxu0 0
        %488 = vmatpush1.bf16.msra.mxu0 0
        %489 = vmatprep.subr.bf16.mxu0 0
        %490 = vmatpush1.bf16.msra.mxu0 0
        %491 = vmatprep.subr.bf16.mxu0 0
        %492 = vmatpush1.bf16.msra.mxu0 0
        %493 = vmatprep.subr.bf16.mxu0 0
        %494 = vmatpush1.bf16.msra.mxu0 0
        %495 = vmatprep.subr.bf16.mxu0 0
        %496 = vmatpush1.bf16.msra.mxu0 0
        %497 = vmatprep.subr.bf16.mxu0 0
        %498 = vmatpush1.bf16.msra.mxu0 0
        %499 = vmatprep.subr.bf16.mxu0 0
        %500 = vmatpush1.bf16.msra.mxu0 0
        %501 = vmatprep.subr.bf16.mxu0 0
        %502 = vmatpush1.bf16.msra.mxu0 0
        %503 = vmatprep.subr.bf16.mxu0 0
        %504 = vmatpush1.bf16.msra.mxu0 0
        %505 = vmatprep.subr.bf16.mxu0 0
        %506 = vmatpush1.bf16.msra.mxu0 0
        %507 = vmatprep.subr.bf16.mxu0 0
        %508 = vmatpush1.bf16.msra.mxu0 0
        %509 = vmatprep.mubr.bf16.mxu0 0
        %510 = vmatmul.mubr.bf16.gmra.mrb[0].mxu0 %v466
        %v511 = vpop.f32.mrb[0].mxu0
        %v512 = vadd.f32 %v418, %v511
        %v513 = vpop.f32.mrb[0].mxu0
        %v514 = vpop.f32.mrb[0].mxu0
        %v515 = vadd.f32 %v418, %v514
        %v516 = vpop.f32.mrb[0].mxu0
        %517 = vmatprep.mubr.bf16.mxu0 0
        %518 = vmatmul.mubr.bf16.gmra.mrb[0].mxu0 %v469
        %v519 = vpop.f32.mrb[0].mxu0
        %v520 = vadd.f32 %v418, %v519
        %v521 = vpop.f32.mrb[0].mxu0
        %v522 = vpop.f32.mrb[0].mxu0
        %v523 = vadd.f32 %v418, %v522
        %v524 = vpop.f32.mrb[0].mxu0
        %525 = vmatprep.mubr.bf16.mxu0 0
        %526 = vmatmul.mubr.bf16.gmra.mrb[0].mxu0 %v472
        %v527 = vpop.f32.mrb[0].mxu0
        %v528 = vadd.f32 %v418, %v527
        %v529 = vpop.f32.mrb[0].mxu0
        %v530 = vpop.f32.mrb[0].mxu0
        %v531 = vadd.f32 %v418, %v530
        %v532 = vpop.f32.mrb[0].mxu0
        %533 = vmatprep.mubr.bf16.mxu0 0
        %534 = vmatmul.mubr.bf16.gmra.mrb[0].mxu0 %v475
        %v535 = vpop.f32.mrb[0].mxu0
        %v536 = vadd.f32 %v418, %v535
        %v537 = vpop.f32.mrb[0].mxu0
        %v538 = vpop.f32.mrb[0].mxu0
        %v539 = vadd.f32 %v418, %v538
        %v540 = vpop.f32.mrb[0].mxu0
        %541 = vdwg.mxu0
        %v542 = vpack.c.bf16 %v515, %v512
        %v543 = vpack.c.bf16 %v523, %v520
        %v544 = vpack.c.bf16 %v531, %v528
        %v545 = vpack.c.bf16 %v539, %v536
        %v550 = vunpack.c.l.b16 %v542
        %v551 = vunpack.c.h.b16 %v542
        %v552 = vunpack.c.l.b16 %v543
        %v553 = vunpack.c.h.b16 %v543
        %v554 = vunpack.c.l.b16 %v544
        %v555 = vunpack.c.h.b16 %v544
        %v556 = vunpack.c.l.b16 %v545
        %v557 = vunpack.c.h.b16 %v545
        %v558 = vpack.c.b16 %v550, %v550
        %v559 = vpack.c.b16 %v551, %v551
        %v560 = vpack.c.b16 %v552, %v552
        %v561 = vpack.c.b16 %v553, %v553
        %v562 = vpack.c.b16 %v554, %v554
        %v563 = vpack.c.b16 %v555, %v555
        %v564 = vpack.c.b16 %v556, %v556
        %v565 = vpack.c.b16 %v557, %v557
        %574 = vst [vmem:[#allocation2] sm:$0xf] %v558
        %575 = vst [vmem:[#allocation2 + $0x4] sm:$0xf] %v559
        %576 = vst [vmem:[#allocation2 + $0x8] sm:$0xf] %v560
        %577 = vst [vmem:[#allocation2 + $0xc] sm:$0xf] %v561
        %578 = vst [vmem:[#allocation2 + $0x10] sm:$0xf] %v562
        %579 = vst [vmem:[#allocation2 + $0x14] sm:$0xf] %v563
        %580 = vst [vmem:[#allocation2 + $0x18] sm:$0xf] %v564
        %581 = vst [vmem:[#allocation2 + $0x1c] sm:$0xf] %v565
        %v582 = vld [vmem:[%s4] sm:$0xf]
        %v583 = vld [vmem:[%s4 + $0x4] sm:$0xf]
        %v584 = vld [vmem:[%s4 + $0x8] sm:$0xf]
        %v585 = vld [vmem:[%s4 + $0xc] sm:$0xf]
        %v586 = vld [vmem:[%s4 + $0x10] sm:$0xf]
        %v587 = vld [vmem:[%s4 + $0x14] sm:$0xf]
        %v588 = vld [vmem:[%s4 + $0x18] sm:$0xf]
        %v589 = vld [vmem:[%s4 + $0x1c] sm:$0xf]
        %v590 = vld [vmem:[%s6] sm:$0x1]
        %v592 = vlaneseq
        %v593 = vshrl.u32 %v592, 7
        %v594 = vsub.s32 0, %v593
        %v595 = vrot.slane %v590, %v594
        %v605 = vunpack.c.l.b16 %v582
        %v606 = vunpack.c.l.b16 %v583
        %v607 = vunpack.c.l.b16 %v584
        %v608 = vunpack.c.l.b16 %v585
        %v609 = vunpack.c.l.b16 %v586
        %v610 = vunpack.c.l.b16 %v587
        %v611 = vunpack.c.l.b16 %v588
        %v612 = vunpack.c.l.b16 %v589
        %v613 = vpack.c.b16 %v606, %v605
        %v614 = vpack.c.b16 %v608, %v607
        %v615 = vpack.c.b16 %v610, %v609
        %v616 = vpack.c.b16 %v612, %v611
        %621 = vmatprep.subr.bf16.mxu0 0
        %622 = vmatpush1.bf16.msra.mxu0 %v613
        %623 = vmatprep.subr.bf16.mxu0 0
        %624 = vmatpush1.bf16.msra.mxu0 %v614
        %625 = vmatprep.subr.bf16.mxu0 0
        %626 = vmatpush1.bf16.msra.mxu0 %v615
        %627 = vmatprep.subr.bf16.mxu0 0
        %628 = vmatpush1.bf16.msra.mxu0 %v616
        %629 = vmatprep.subr.bf16.mxu0 0
        %630 = vmatpush1.bf16.msra.mxu0 0
        %631 = vmatprep.subr.bf16.mxu0 0
        %632 = vmatpush1.bf16.msra.mxu0 0
        %633 = vmatprep.subr.bf16.mxu0 0
        %634 = vmatpush1.bf16.msra.mxu0 0
        %635 = vmatprep.subr.bf16.mxu0 0
        %636 = vmatpush1.bf16.msra.mxu0 0
        %637 = vmatprep.subr.bf16.mxu0 0
        %638 = vmatpush1.bf16.msra.mxu0 0
        %639 = vmatprep.subr.bf16.mxu0 0
        %640 = vmatpush1.bf16.msra.mxu0 0
        %641 = vmatprep.subr.bf16.mxu0 0
        %642 = vmatpush1.bf16.msra.mxu0 0
        %643 = vmatprep.subr.bf16.mxu0 0
        %644 = vmatpush1.bf16.msra.mxu0 0
        %645 = vmatprep.subr.bf16.mxu0 0
        %646 = vmatpush1.bf16.msra.mxu0 0
        %647 = vmatprep.subr.bf16.mxu0 0
        %648 = vmatpush1.bf16.msra.mxu0 0
        %649 = vmatprep.subr.bf16.mxu0 0
        %650 = vmatpush1.bf16.msra.mxu0 0
        %651 = vmatprep.subr.bf16.mxu0 0
        %652 = vmatpush1.bf16.msra.mxu0 0
        %653 = vmatprep.mubr.bf16.mxu0 0
        %654 = vmatmul.mubr.bf16.gmra.mrb[0].mxu0 %v466
        %v655 = vpop.f32.mrb[0].mxu0
        %v656 = vadd.f32 %v595, %v655
        %v657 = vpop.f32.mrb[0].mxu0
        %v658 = vpop.f32.mrb[0].mxu0
        %v659 = vadd.f32 %v595, %v658
        %v660 = vpop.f32.mrb[0].mxu0
        %661 = vmatprep.mubr.bf16.mxu0 0
        %662 = vmatmul.mubr.bf16.gmra.mrb[0].mxu0 %v469
        %v663 = vpop.f32.mrb[0].mxu0
        %v664 = vadd.f32 %v595, %v663
        %v665 = vpop.f32.mrb[0].mxu0
        %v666 = vpop.f32.mrb[0].mxu0
        %v667 = vadd.f32 %v595, %v666
        %v668 = vpop.f32.mrb[0].mxu0
        %669 = vmatprep.mubr.bf16.mxu0 0
        %670 = vmatmul.mubr.bf16.gmra.mrb[0].mxu0 %v472
        %v671 = vpop.f32.mrb[0].mxu0
        %v672 = vadd.f32 %v595, %v671
        %v673 = vpop.f32.mrb[0].mxu0
        %v674 = vpop.f32.mrb[0].mxu0
        %v675 = vadd.f32 %v595, %v674
        %v676 = vpop.f32.mrb[0].mxu0
        %677 = vmatprep.mubr.bf16.mxu0 0
        %678 = vmatmul.mubr.bf16.gmra.mrb[0].mxu0 %v475
        %v679 = vpop.f32.mrb[0].mxu0
        %v680 = vadd.f32 %v595, %v679
        %v681 = vpop.f32.mrb[0].mxu0
        %v682 = vpop.f32.mrb[0].mxu0
        %v683 = vadd.f32 %v595, %v682
        %v684 = vpop.f32.mrb[0].mxu0
        %685 = vdwg.mxu0
        %v686 = vpack.c.bf16 %v659, %v656
        %v687 = vpack.c.bf16 %v667, %v664
        %v688 = vpack.c.bf16 %v675, %v672
        %v689 = vpack.c.bf16 %v683, %v680
        %v694 = vunpack.c.l.b16 %v686
        %v695 = vunpack.c.h.b16 %v686
        %v696 = vunpack.c.l.b16 %v687
        %v697 = vunpack.c.h.b16 %v687
        %v698 = vunpack.c.l.b16 %v688
        %v699 = vunpack.c.h.b16 %v688
        %v700 = vunpack.c.l.b16 %v689
        %v701 = vunpack.c.h.b16 %v689
        %v702 = vpack.c.b16 %v694, %v694
        %v703 = vpack.c.b16 %v695, %v695
        %v704 = vpack.c.b16 %v696, %v696
        %v705 = vpack.c.b16 %v697, %v697
        %v706 = vpack.c.b16 %v698, %v698
        %v707 = vpack.c.b16 %v699, %v699
        %v708 = vpack.c.b16 %v700, %v700
        %v709 = vpack.c.b16 %v701, %v701
        %718 = vst [vmem:[#allocation3] sm:$0xf] %v702
        %719 = vst [vmem:[#allocation3 + $0x4] sm:$0xf] %v703
        %720 = vst [vmem:[#allocation3 + $0x8] sm:$0xf] %v704
        %721 = vst [vmem:[#allocation3 + $0xc] sm:$0xf] %v705
        %722 = vst [vmem:[#allocation3 + $0x10] sm:$0xf] %v706
        %723 = vst [vmem:[#allocation3 + $0x14] sm:$0xf] %v707
        %724 = vst [vmem:[#allocation3 + $0x18] sm:$0xf] %v708
        %725 = vst [vmem:[#allocation3 + $0x1c] sm:$0xf] %v709
        %v726 = vld [vmem:[%s2] sm:$0xf]
        %v727 = vld [vmem:[%s2 + $0x4] sm:$0xf]
        %v728 = vld [vmem:[%s2 + $0x8] sm:$0xf]
        %v729 = vld [vmem:[%s2 + $0xc] sm:$0xf]
        %v730 = vld [vmem:[%s5] sm:$0xf]
        %v731 = vld [vmem:[%s5 + $0x4] sm:$0xf]
        %v732 = vld [vmem:[%s5 + $0x8] sm:$0xf]
        %v733 = vld [vmem:[%s5 + $0xc] sm:$0xf]
        %v734 = vld [vmem:[#allocation2] sm:$0xf]
        %v735 = vunpack.c.l.bf16 %v734
        %v740 = vunpack.c.l.b16 %v726
        %v741 = vunpack.c.l.b16 %v727
        %v742 = vunpack.c.l.b16 %v728
        %v743 = vunpack.c.l.b16 %v729
        %v744 = vpack.c.b16 %v741, %v740
        %v745 = vpack.c.b16 %v743, %v742
        %vm748 = vcmask 261120
        %v750 = vsel %vm748, 0, 0
        %752 = vmatprep.subr.bf16.mxu0 0
        %753 = vmatpush1.bf16.msra.mxu0 %v744
        %754 = vmatprep.subr.bf16.mxu0 0
        %755 = vmatpush1.bf16.msra.mxu0 %v745
        %756 = vmatprep.subr.bf16.mxu0 0
        %757 = vmatpush1.bf16.msra.mxu0 0
        %758 = vmatprep.subr.bf16.mxu0 0
        %759 = vmatpush1.bf16.msra.mxu0 0
        %760 = vmatprep.subr.bf16.mxu0 0
        %761 = vmatpush1.bf16.msra.mxu0 0
        %762 = vmatprep.subr.bf16.mxu0 0
        %763 = vmatpush1.bf16.msra.mxu0 0
        %764 = vmatprep.subr.bf16.mxu0 0
        %765 = vmatpush1.bf16.msra.mxu0 0
        %766 = vmatprep.subr.bf16.mxu0 0
        %767 = vmatpush1.bf16.msra.mxu0 0
        %768 = vmatprep.subr.bf16.mxu0 0
        %769 = vmatpush1.bf16.msra.mxu0 0
        %770 = vmatprep.subr.bf16.mxu0 0
        %771 = vmatpush1.bf16.msra.mxu0 0
        %772 = vmatprep.subr.bf16.mxu0 0
        %773 = vmatpush1.bf16.msra.mxu0 0
        %774 = vmatprep.subr.bf16.mxu0 0
        %775 = vmatpush1.bf16.msra.mxu0 0
        %776 = vmatprep.subr.bf16.mxu0 0
        %777 = vmatpush1.bf16.msra.mxu0 0
        %778 = vmatprep.subr.bf16.mxu0 0
        %779 = vmatpush1.bf16.msra.mxu0 0
        %780 = vmatprep.subr.bf16.mxu0 0
        %781 = vmatpush1.bf16.msra.mxu0 0
        %782 = vmatprep.subr.bf16.mxu0 0
        %783 = vmatpush1.bf16.msra.mxu0 0
        %784 = vmatprep.mubr.bf16.mxu0 0
        %785 = vmatmul.mubr.bf16.gmra.mrb[0].mxu0 %v750
        %v786 = vpop.f32.mrb[0].mxu0
        %v787 = vadd.f32 0.0, %v786
        %v788 = vpop.f32.mrb[0].mxu0
        %v789 = vpop.f32.mrb[0].mxu0
        %v790 = vpop.f32.mrb[0].mxu0
        %791 = vdwg.mxu0
        %v792 = vadd.f32 %v735, %v787
        %v793 = vxor.u32 %v792, 2147483648
        %v794 = vmul.f32 %v793, 1.442695
        %v795 = vpow.pop %v794
        %v796 = vadd.f32 %v795, 1.0
        %v797 = vrcp.pop %v796
        %v798 = vmul.f32 1.0, %v797
        %v799 = vtanh.pop %v792
        %v800 = vmul.f32 %v798, 0.0
        %802 = vrot.lane.b32.xlu0 %v799, 32
        %v803 = vpop.permute.xlu0 %802
        %v805 = vmul.f32 %v798, %v803
        %807 = vrot.lane.b32.xlu0 %v805, 32
        %v808 = vpop.permute.xlu0 %807
        %v810 = vadd.f32 %v800, %v808
        %v811 = vtanh.pop %v810
        %813 = vrot.lane.b32.xlu0 %v811, 32
        %v814 = vpop.permute.xlu0 %813
        %v816 = vmul.f32 %v798, %v814
        %s817 = scalar_lea.vmem [#allocation3], 28
        %v818 = vld [vmem:[%s817] sm:$0xf]
        %v819 = vunpack.c.l.bf16 %v818
        %v824 = vunpack.c.l.b16 %v730
        %v825 = vunpack.c.l.b16 %v731
        %v826 = vunpack.c.l.b16 %v732
        %v827 = vunpack.c.l.b16 %v733
        %v828 = vpack.c.b16 %v825, %v824
        %v829 = vpack.c.b16 %v827, %v826
        %832 = vmatprep.subr.bf16.mxu0 0
        %833 = vmatpush1.bf16.msra.mxu0 %v828
        %834 = vmatprep.subr.bf16.mxu0 0
        %835 = vmatpush1.bf16.msra.mxu0 %v829
        %836 = vmatprep.subr.bf16.mxu0 0
        %837 = vmatpush1.bf16.msra.mxu0 0
        %838 = vmatprep.subr.bf16.mxu0 0
        %839 = vmatpush1.bf16.msra.mxu0 0
        %840 = vmatprep.subr.bf16.mxu0 0
        %841 = vmatpush1.bf16.msra.mxu0 0
        %842 = vmatprep.subr.bf16.mxu0 0
        %843 = vmatpush1.bf16.msra.mxu0 0
        %844 = vmatprep.subr.bf16.mxu0 0
        %845 = vmatpush1.bf16.msra.mxu0 0
        %846 = vmatprep.subr.bf16.mxu0 0
        %847 = vmatpush1.bf16.msra.mxu0 0
        %848 = vmatprep.subr.bf16.mxu0 0
        %849 = vmatpush1.bf16.msra.mxu0 0
        %850 = vmatprep.subr.bf16.mxu0 0
        %851 = vmatpush1.bf16.msra.mxu0 0
        %852 = vmatprep.subr.bf16.mxu0 0
        %853 = vmatpush1.bf16.msra.mxu0 0
        %854 = vmatprep.subr.bf16.mxu0 0
        %855 = vmatpush1.bf16.msra.mxu0 0
        %856 = vmatprep.subr.bf16.mxu0 0
        %857 = vmatpush1.bf16.msra.mxu0 0
        %858 = vmatprep.subr.bf16.mxu0 0
        %859 = vmatpush1.bf16.msra.mxu0 0
        %860 = vmatprep.subr.bf16.mxu0 0
        %861 = vmatpush1.bf16.msra.mxu0 0
        %862 = vmatprep.subr.bf16.mxu0 0
        %863 = vmatpush1.bf16.msra.mxu0 0
        %864 = vmatprep.mubr.bf16.mxu0 0
        %865 = vmatmul.mubr.bf16.gmra.mrb[0].mxu0 %v750
        %v866 = vpop.f32.mrb[0].mxu0
        %v867 = vadd.f32 0.0, %v866
        %v868 = vpop.f32.mrb[0].mxu0
        %v869 = vpop.f32.mrb[0].mxu0
        %v870 = vpop.f32.mrb[0].mxu0
        %871 = vdwg.mxu0
        %v872 = vadd.f32 %v819, %v867
        %v873 = vxor.u32 %v872, 2147483648
        %v874 = vmul.f32 %v873, 1.442695
        %v875 = vpow.pop %v874
        %v876 = vadd.f32 %v875, 1.0
        %v877 = vrcp.pop %v876
        %v878 = vmul.f32 1.0, %v877
        %v879 = vtanh.pop %v872
        %v880 = vmul.f32 %v878, 0.0
        %882 = vrot.lane.b32.xlu0 %v879, 32
        %v883 = vpop.permute.xlu0 %882
        %v885 = vmul.f32 %v878, %v883
        %887 = vrot.lane.b32.xlu0 %v885, 32
        %v888 = vpop.permute.xlu0 %887
        %v890 = vadd.f32 %v880, %v888
        %v891 = vtanh.pop %v890
        %893 = vrot.lane.b32.xlu0 %v891, 32
        %v894 = vpop.permute.xlu0 %893
        %v896 = vmul.f32 %v878, %v894
        %v897 = vpack.c.bf16 %v816, %v816
        %v899 = vunpack.c.l.b16 %v897
        %v900 = vpack.c.b16 %v899, %v899
        %901 = vrot.lane.b32.xlu0 %v900, 64
        %v902 = vpop.permute.xlu0 %901
        %vm904 = vcmask 257024
        %905 = vst.msk [vmem:[#allocation4] sm:$0xf] %vm904, %v902
        %v906 = vpack.c.bf16 %v896, %v896
        %v908 = vunpack.c.l.b16 %v906
        %v909 = vpack.c.b16 %v908, %v908
        %910 = vrot.lane.b32.xlu0 %v909, 96
        %v911 = vpop.permute.xlu0 %910
        %s913 = scalar_lea.vmem [#allocation4], 28
        %vm914 = vcmask 519424
        %915 = vst.msk [vmem:[%s913] sm:$0xf] %vm914, %v911
        %s916 = scalar_lea.vmem [#allocation2], 4
        %v917 = vld [vmem:[%s916] sm:$0xf]
        %v918 = vunpack.c.l.bf16 %v917
        %919 = vrot.lane.b32.xlu0 %v897, 64
        %v920 = vpop.permute.xlu0 %919
        %v922 = vsel %vm748, %v920, 0
        %924 = vmatprep.subr.bf16.mxu0 0
        %925 = vmatpush1.bf16.msra.mxu0 %v744
        %926 = vmatprep.subr.bf16.mxu0 0
        %927 = vmatpush1.bf16.msra.mxu0 %v745
        %928 = vmatprep.subr.bf16.mxu0 0
        %929 = vmatpush1.bf16.msra.mxu0 0
        %930 = vmatprep.subr.bf16.mxu0 0
        %931 = vmatpush1.bf16.msra.mxu0 0
        %932 = vmatprep.subr.bf16.mxu0 0
        %933 = vmatpush1.bf16.msra.mxu0 0
        %934 = vmatprep.subr.bf16.mxu0 0
        %935 = vmatpush1.bf16.msra.mxu0 0
        %936 = vmatprep.subr.bf16.mxu0 0
        %937 = vmatpush1.bf16.msra.mxu0 0
        %938 = vmatprep.subr.bf16.mxu0 0
        %939 = vmatpush1.bf16.msra.mxu0 0
        %940 = vmatprep.subr.bf16.mxu0 0
        %941 = vmatpush1.bf16.msra.mxu0 0
        %942 = vmatprep.subr.bf16.mxu0 0
        %943 = vmatpush1.bf16.msra.mxu0 0
        %944 = vmatprep.subr.bf16.mxu0 0
        %945 = vmatpush1.bf16.msra.mxu0 0
        %946 = vmatprep.subr.bf16.mxu0 0
        %947 = vmatpush1.bf16.msra.mxu0 0
        %948 = vmatprep.subr.bf16.mxu0 0
        %949 = vmatpush1.bf16.msra.mxu0 0
        %950 = vmatprep.subr.bf16.mxu0 0
        %951 = vmatpush1.bf16.msra.mxu0 0
        %952 = vmatprep.subr.bf16.mxu0 0
        %953 = vmatpush1.bf16.msra.mxu0 0
        %954 = vmatprep.subr.bf16.mxu0 0
        %955 = vmatpush1.bf16.msra.mxu0 0
        %956 = vmatprep.mubr.bf16.mxu0 0
        %957 = vmatmul.mubr.bf16.gmra.mrb[0].mxu0 %v922
        %v958 = vpop.f32.mrb[0].mxu0
        %v959 = vadd.f32 0.0, %v958
        %v960 = vpop.f32.mrb[0].mxu0
        %v961 = vpop.f32.mrb[0].mxu0
        %v962 = vpop.f32.mrb[0].mxu0
        %963 = vdwg.mxu0
        %v964 = vadd.f32 %v918, %v959
        %v965 = vxor.u32 %v964, 2147483648
        %v966 = vmul.f32 %v965, 1.442695
        %v967 = vpow.pop %v966
        %v968 = vadd.f32 %v967, 1.0
        %v969 = vrcp.pop %v968
        %v970 = vmul.f32 1.0, %v969
        %v971 = vtanh.pop %v964
        %v972 = vmul.f32 %v970, %v810
        %974 = vrot.lane.b32.xlu0 %v971, 32
        %v975 = vpop.permute.xlu0 %974
        %v977 = vmul.f32 %v970, %v975
        %979 = vrot.lane.b32.xlu0 %v977, 32
        %v980 = vpop.permute.xlu0 %979
        %v982 = vadd.f32 %v972, %v980
        %v983 = vtanh.pop %v982
        %985 = vrot.lane.b32.xlu0 %v983, 32
        %v986 = vpop.permute.xlu0 %985
        %v988 = vmul.f32 %v970, %v986
        %s989 = scalar_lea.vmem [#allocation3], 24
        %v990 = vld [vmem:[%s989] sm:$0xf]
        %v991 = vunpack.c.l.bf16 %v990
        %992 = vrot.lane.b32.xlu0 %v906, 64
        %v993 = vpop.permute.xlu0 %992
        %v995 = vsel %vm748, %v993, 0
        %997 = vmatprep.subr.bf16.mxu0 0
        %998 = vmatpush1.bf16.msra.mxu0 %v828
        %999 = vmatprep.subr.bf16.mxu0 0
        %1000 = vmatpush1.bf16.msra.mxu0 %v829
        %1001 = vmatprep.subr.bf16.mxu0 0
        %1002 = vmatpush1.bf16.msra.mxu0 0
        %1003 = vmatprep.subr.bf16.mxu0 0
        %1004 = vmatpush1.bf16.msra.mxu0 0
        %1005 = vmatprep.subr.bf16.mxu0 0
        %1006 = vmatpush1.bf16.msra.mxu0 0
        %1007 = vmatprep.subr.bf16.mxu0 0
        %1008 = vmatpush1.bf16.msra.mxu0 0
        %1009 = vmatprep.subr.bf16.mxu0 0
        %1010 = vmatpush1.bf16.msra.mxu0 0
        %1011 = vmatprep.subr.bf16.mxu0 0
        %1012 = vmatpush1.bf16.msra.mxu0 0
        %1013 = vmatprep.subr.bf16.mxu0 0
        %1014 = vmatpush1.bf16.msra.mxu0 0
        %1015 = vmatprep.subr.bf16.mxu0 0
        %1016 = vmatpush1.bf16.msra.mxu0 0
        %1017 = vmatprep.subr.bf16.mxu0 0
        %1018 = vmatpush1.bf16.msra.mxu0 0
        %1019 = vmatprep.subr.bf16.mxu0 0
        %1020 = vmatpush1.bf16.msra.mxu0 0
        %1021 = vmatprep.subr.bf16.mxu0 0
        %1022 = vmatpush1.bf16.msra.mxu0 0
        %1023 = vmatprep.subr.bf16.mxu0 0
        %1024 = vmatpush1.bf16.msra.mxu0 0
        %1025 = vmatprep.subr.bf16.mxu0 0
        %1026 = vmatpush1.bf16.msra.mxu0 0
        %1027 = vmatprep.subr.bf16.mxu0 0
        %1028 = vmatpush1.bf16.msra.mxu0 0
        %1029 = vmatprep.mubr.bf16.mxu0 0
        %1030 = vmatmul.mubr.bf16.gmra.mrb[0].mxu0 %v995
        %v1031 = vpop.f32.mrb[0].mxu0
        %v1032 = vadd.f32 0.0, %v1031
        %v1033 = vpop.f32.mrb[0].mxu0
        %v1034 = vpop.f32.mrb[0].mxu0
        %v1035 = vpop.f32.mrb[0].mxu0
        %1036 = vdwg.mxu0
        %v1037 = vadd.f32 %v991, %v1032
        %v1038 = vxor.u32 %v1037, 2147483648
        %v1039 = vmul.f32 %v1038, 1.442695
        %v1040 = vpow.pop %v1039
        %v1041 = vadd.f32 %v1040, 1.0
        %v1042 = vrcp.pop %v1041
        %v1043 = vmul.f32 1.0, %v1042
        %v1044 = vtanh.pop %v1037
        %v1045 = vmul.f32 %v1043, %v890
        %1047 = vrot.lane.b32.xlu0 %v1044, 32
        %v1048 = vpop.permute.xlu0 %1047
        %v1050 = vmul.f32 %v1043, %v1048
        %1052 = vrot.lane.b32.xlu0 %v1050, 32
        %v1053 = vpop.permute.xlu0 %1052
        %v1055 = vadd.f32 %v1045, %v1053
        %v1056 = vtanh.pop %v1055
        %1058 = vrot.lane.b32.xlu0 %v1056, 32
        %v1059 = vpop.permute.xlu0 %1058
        %v1061 = vmul.f32 %v1043, %v1059
        %v1062 = vpack.c.bf16 %v988, %v988
        %v1064 = vunpack.c.l.b16 %v1062
        %v1065 = vpack.c.b16 %v1064, %v1064
        %1066 = vrot.lane.b32.xlu0 %v1065, 64
        %v1067 = vpop.permute.xlu0 %1066
        %s1069 = scalar_lea.vmem [#allocation4], 4
        %1070 = vst.msk [vmem:[%s1069] sm:$0xf] %vm904, %v1067
        %v1071 = vpack.c.bf16 %v1061, %v1061
        %v1073 = vunpack.c.l.b16 %v1071
        %v1074 = vpack.c.b16 %v1073, %v1073
        %1075 = vrot.lane.b32.xlu0 %v1074, 96
        %v1076 = vpop.permute.xlu0 %1075
        %s1078 = scalar_lea.vmem [#allocation4], 24
        %1079 = vst.msk [vmem:[%s1078] sm:$0xf] %vm914, %v1076
        %s1080 = scalar_lea.vmem [#allocation2], 8
        %v1081 = vld [vmem:[%s1080] sm:$0xf]
        %v1082 = vunpack.c.l.bf16 %v1081
        %1083 = vrot.lane.b32.xlu0 %v1062, 64
        %v1084 = vpop.permute.xlu0 %1083
        %v1086 = vsel %vm748, %v1084, 0
        %1088 = vmatprep.subr.bf16.mxu0 0
        %1089 = vmatpush1.bf16.msra.mxu0 %v744
        %1090 = vmatprep.subr.bf16.mxu0 0
        %1091 = vmatpush1.bf16.msra.mxu0 %v745
        %1092 = vmatprep.subr.bf16.mxu0 0
        %1093 = vmatpush1.bf16.msra.mxu0 0
        %1094 = vmatprep.subr.bf16.mxu0 0
        %1095 = vmatpush1.bf16.msra.mxu0 0
        %1096 = vmatprep.subr.bf16.mxu0 0
        %1097 = vmatpush1.bf16.msra.mxu0 0
        %1098 = vmatprep.subr.bf16.mxu0 0
        %1099 = vmatpush1.bf16.msra.mxu0 0
        %1100 = vmatprep.subr.bf16.mxu0 0
        %1101 = vmatpush1.bf16.msra.mxu0 0
        %1102 = vmatprep.subr.bf16.mxu0 0
        %1103 = vmatpush1.bf16.msra.mxu0 0
        %1104 = vmatprep.subr.bf16.mxu0 0
        %1105 = vmatpush1.bf16.msra.mxu0 0
        %1106 = vmatprep.subr.bf16.mxu0 0
        %1107 = vmatpush1.bf16.msra.mxu0 0
        %1108 = vmatprep.subr.bf16.mxu0 0
        %1109 = vmatpush1.bf16.msra.mxu0 0
        %1110 = vmatprep.subr.bf16.mxu0 0
        %1111 = vmatpush1.bf16.msra.mxu0 0
        %1112 = vmatprep.subr.bf16.mxu0 0
        %1113 = vmatpush1.bf16.msra.mxu0 0
        %1114 = vmatprep.subr.bf16.mxu0 0
        %1115 = vmatpush1.bf16.msra.mxu0 0
        %1116 = vmatprep.subr.bf16.mxu0 0
        %1117 = vmatpush1.bf16.msra.mxu0 0
        %1118 = vmatprep.subr.bf16.mxu0 0
        %1119 = vmatpush1.bf16.msra.mxu0 0
        %1120 = vmatprep.mubr.bf16.mxu0 0
        %1121 = vmatmul.mubr.bf16.gmra.mrb[0].mxu0 %v1086
        %v1122 = vpop.f32.mrb[0].mxu0
        %v1123 = vadd.f32 0.0, %v1122
        %v1124 = vpop.f32.mrb[0].mxu0
        %v1125 = vpop.f32.mrb[0].mxu0
        %v1126 = vpop.f32.mrb[0].mxu0
        %1127 = vdwg.mxu0
        %v1128 = vadd.f32 %v1082, %v1123
        %v1129 = vxor.u32 %v1128, 2147483648
        %v1130 = vmul.f32 %v1129, 1.442695
        %v1131 = vpow.pop %v1130
        %v1132 = vadd.f32 %v1131, 1.0
        %v1133 = vrcp.pop %v1132
        %v1134 = vmul.f32 1.0, %v1133
        %v1135 = vtanh.pop %v1128
        %v1136 = vmul.f32 %v1134, %v982
        %1138 = vrot.lane.b32.xlu0 %v1135, 32
        %v1139 = vpop.permute.xlu0 %1138
        %v1141 = vmul.f32 %v1134, %v1139
        %1143 = vrot.lane.b32.xlu0 %v1141, 32
        %v1144 = vpop.permute.xlu0 %1143
        %v1146 = vadd.f32 %v1136, %v1144
        %v1147 = vtanh.pop %v1146
        %1149 = vrot.lane.b32.xlu0 %v1147, 32
        %v1150 = vpop.permute.xlu0 %1149
        %v1152 = vmul.f32 %v1134, %v1150
        %s1153 = scalar_lea.vmem [#allocation3], 20
        %v1154 = vld [vmem:[%s1153] sm:$0xf]
        %v1155 = vunpack.c.l.bf16 %v1154
        %1156 = vrot.lane.b32.xlu0 %v1071, 64
        %v1157 = vpop.permute.xlu0 %1156
        %v1159 = vsel %vm748, %v1157, 0
        %1161 = vmatprep.subr.bf16.mxu0 0
        %1162 = vmatpush1.bf16.msra.mxu0 %v828
        %1163 = vmatprep.subr.bf16.mxu0 0
        %1164 = vmatpush1.bf16.msra.mxu0 %v829
        %1165 = vmatprep.subr.bf16.mxu0 0
        %1166 = vmatpush1.bf16.msra.mxu0 0
        %1167 = vmatprep.subr.bf16.mxu0 0
        %1168 = vmatpush1.bf16.msra.mxu0 0
        %1169 = vmatprep.subr.bf16.mxu0 0
        %1170 = vmatpush1.bf16.msra.mxu0 0
        %1171 = vmatprep.subr.bf16.mxu0 0
        %1172 = vmatpush1.bf16.msra.mxu0 0
        %1173 = vmatprep.subr.bf16.mxu0 0
        %1174 = vmatpush1.bf16.msra.mxu0 0
        %1175 = vmatprep.subr.bf16.mxu0 0
        %1176 = vmatpush1.bf16.msra.mxu0 0
        %1177 = vmatprep.subr.bf16.mxu0 0
        %1178 = vmatpush1.bf16.msra.mxu0 0
        %1179 = vmatprep.subr.bf16.mxu0 0
        %1180 = vmatpush1.bf16.msra.mxu0 0
        %1181 = vmatprep.subr.bf16.mxu0 0
        %1182 = vmatpush1.bf16.msra.mxu0 0
        %1183 = vmatprep.subr.bf16.mxu0 0
        %1184 = vmatpush1.bf16.msra.mxu0 0
        %1185 = vmatprep.subr.bf16.mxu0 0
        %1186 = vmatpush1.bf16.msra.mxu0 0
        %1187 = vmatprep.subr.bf16.mxu0 0
        %1188 = vmatpush1.bf16.msra.mxu0 0
        %1189 = vmatprep.subr.bf16.mxu0 0
        %1190 = vmatpush1.bf16.msra.mxu0 0
        %1191 = vmatprep.subr.bf16.mxu0 0
        %1192 = vmatpush1.bf16.msra.mxu0 0
        %1193 = vmatprep.mubr.bf16.mxu0 0
        %1194 = vmatmul.mubr.bf16.gmra.mrb[0].mxu0 %v1159
        %v1195 = vpop.f32.mrb[0].mxu0
        %v1196 = vadd.f32 0.0, %v1195
        %v1197 = vpop.f32.mrb[0].mxu0
        %v1198 = vpop.f32.mrb[0].mxu0
        %v1199 = vpop.f32.mrb[0].mxu0
        %1200 = vdwg.mxu0
        %v1201 = vadd.f32 %v1155, %v1196
        %v1202 = vxor.u32 %v1201, 2147483648
        %v1203 = vmul.f32 %v1202, 1.442695
        %v1204 = vpow.pop %v1203
        %v1205 = vadd.f32 %v1204, 1.0
        %v1206 = vrcp.pop %v1205
        %v1207 = vmul.f32 1.0, %v1206
        %v1208 = vtanh.pop %v1201
        %v1209 = vmul.f32 %v1207, %v1055
        %1211 = vrot.lane.b32.xlu0 %v1208, 32
        %v1212 = vpop.permute.xlu0 %1211
        %v1214 = vmul.f32 %v1207, %v1212
        %1216 = vrot.lane.b32.xlu0 %v1214, 32
        %v1217 = vpop.permute.xlu0 %1216
        %v1219 = vadd.f32 %v1209, %v1217
        %v1220 = vtanh.pop %v1219
        %1222 = vrot.lane.b32.xlu0 %v1220, 32
        %v1223 = vpop.permute.xlu0 %1222
        %v1225 = vmul.f32 %v1207, %v1223
        %v1226 = vpack.c.bf16 %v1152, %v1152
        %v1228 = vunpack.c.l.b16 %v1226
        %v1229 = vpack.c.b16 %v1228, %v1228
        %1230 = vrot.lane.b32.xlu0 %v1229, 64
        %v1231 = vpop.permute.xlu0 %1230
        %s1233 = scalar_lea.vmem [#allocation4], 8
        %1234 = vst.msk [vmem:[%s1233] sm:$0xf] %vm904, %v1231
        %v1235 = vpack.c.bf16 %v1225, %v1225
        %v1237 = vunpack.c.l.b16 %v1235
        %v1238 = vpack.c.b16 %v1237, %v1237
        %1239 = vrot.lane.b32.xlu0 %v1238, 96
        %v1240 = vpop.permute.xlu0 %1239
        %s1242 = scalar_lea.vmem [#allocation4], 20
        %1243 = vst.msk [vmem:[%s1242] sm:$0xf] %vm914, %v1240
        %s1244 = scalar_lea.vmem [#allocation2], 12
        %v1245 = vld [vmem:[%s1244] sm:$0xf]
        %v1246 = vunpack.c.l.bf16 %v1245
        %1247 = vrot.lane.b32.xlu0 %v1226, 64
        %v1248 = vpop.permute.xlu0 %1247
        %v1250 = vsel %vm748, %v1248, 0
        %1252 = vmatprep.subr.bf16.mxu0 0
        %1253 = vmatpush1.bf16.msra.mxu0 %v744
        %1254 = vmatprep.subr.bf16.mxu0 0
        %1255 = vmatpush1.bf16.msra.mxu0 %v745
        %1256 = vmatprep.subr.bf16.mxu0 0
        %1257 = vmatpush1.bf16.msra.mxu0 0
        %1258 = vmatprep.subr.bf16.mxu0 0
        %1259 = vmatpush1.bf16.msra.mxu0 0
        %1260 = vmatprep.subr.bf16.mxu0 0
        %1261 = vmatpush1.bf16.msra.mxu0 0
        %1262 = vmatprep.subr.bf16.mxu0 0
        %1263 = vmatpush1.bf16.msra.mxu0 0
        %1264 = vmatprep.subr.bf16.mxu0 0
        %1265 = vmatpush1.bf16.msra.mxu0 0
        %1266 = vmatprep.subr.bf16.mxu0 0
        %1267 = vmatpush1.bf16.msra.mxu0 0
        %1268 = vmatprep.subr.bf16.mxu0 0
        %1269 = vmatpush1.bf16.msra.mxu0 0
        %1270 = vmatprep.subr.bf16.mxu0 0
        %1271 = vmatpush1.bf16.msra.mxu0 0
        %1272 = vmatprep.subr.bf16.mxu0 0
        %1273 = vmatpush1.bf16.msra.mxu0 0
        %1274 = vmatprep.subr.bf16.mxu0 0
        %1275 = vmatpush1.bf16.msra.mxu0 0
        %1276 = vmatprep.subr.bf16.mxu0 0
        %1277 = vmatpush1.bf16.msra.mxu0 0
        %1278 = vmatprep.subr.bf16.mxu0 0
        %1279 = vmatpush1.bf16.msra.mxu0 0
        %1280 = vmatprep.subr.bf16.mxu0 0
        %1281 = vmatpush1.bf16.msra.mxu0 0
        %1282 = vmatprep.subr.bf16.mxu0 0
        %1283 = vmatpush1.bf16.msra.mxu0 0
        %1284 = vmatprep.mubr.bf16.mxu0 0
        %1285 = vmatmul.mubr.bf16.gmra.mrb[0].mxu0 %v1250
        %v1286 = vpop.f32.mrb[0].mxu0
        %v1287 = vadd.f32 0.0, %v1286
        %v1288 = vpop.f32.mrb[0].mxu0
        %v1289 = vpop.f32.mrb[0].mxu0
        %v1290 = vpop.f32.mrb[0].mxu0
        %1291 = vdwg.mxu0
        %v1292 = vadd.f32 %v1246, %v1287
        %v1293 = vxor.u32 %v1292, 2147483648
        %v1294 = vmul.f32 %v1293, 1.442695
        %v1295 = vpow.pop %v1294
        %v1296 = vadd.f32 %v1295, 1.0
        %v1297 = vrcp.pop %v1296
        %v1298 = vmul.f32 1.0, %v1297
        %v1299 = vtanh.pop %v1292
        %v1300 = vmul.f32 %v1298, %v1146
        %1302 = vrot.lane.b32.xlu0 %v1299, 32
        %v1303 = vpop.permute.xlu0 %1302
        %v1305 = vmul.f32 %v1298, %v1303
        %1307 = vrot.lane.b32.xlu0 %v1305, 32
        %v1308 = vpop.permute.xlu0 %1307
        %v1310 = vadd.f32 %v1300, %v1308
        %v1311 = vtanh.pop %v1310
        %1313 = vrot.lane.b32.xlu0 %v1311, 32
        %v1314 = vpop.permute.xlu0 %1313
        %v1316 = vmul.f32 %v1298, %v1314
        %s1317 = scalar_lea.vmem [#allocation3], 16
        %v1318 = vld [vmem:[%s1317] sm:$0xf]
        %v1319 = vunpack.c.l.bf16 %v1318
        %1320 = vrot.lane.b32.xlu0 %v1235, 64
        %v1321 = vpop.permute.xlu0 %1320
        %v1323 = vsel %vm748, %v1321, 0
        %1325 = vmatprep.subr.bf16.mxu0 0
        %1326 = vmatpush1.bf16.msra.mxu0 %v828
        %1327 = vmatprep.subr.bf16.mxu0 0
        %1328 = vmatpush1.bf16.msra.mxu0 %v829
        %1329 = vmatprep.subr.bf16.mxu0 0
        %1330 = vmatpush1.bf16.msra.mxu0 0
        %1331 = vmatprep.subr.bf16.mxu0 0
        %1332 = vmatpush1.bf16.msra.mxu0 0
        %1333 = vmatprep.subr.bf16.mxu0 0
        %1334 = vmatpush1.bf16.msra.mxu0 0
        %1335 = vmatprep.subr.bf16.mxu0 0
        %1336 = vmatpush1.bf16.msra.mxu0 0
        %1337 = vmatprep.subr.bf16.mxu0 0
        %1338 = vmatpush1.bf16.msra.mxu0 0
        %1339 = vmatprep.subr.bf16.mxu0 0
        %1340 = vmatpush1.bf16.msra.mxu0 0
        %1341 = vmatprep.subr.bf16.mxu0 0
        %1342 = vmatpush1.bf16.msra.mxu0 0
        %1343 = vmatprep.subr.bf16.mxu0 0
        %1344 = vmatpush1.bf16.msra.mxu0 0
        %1345 = vmatprep.subr.bf16.mxu0 0
        %1346 = vmatpush1.bf16.msra.mxu0 0
        %1347 = vmatprep.subr.bf16.mxu0 0
        %1348 = vmatpush1.bf16.msra.mxu0 0
        %1349 = vmatprep.subr.bf16.mxu0 0
        %1350 = vmatpush1.bf16.msra.mxu0 0
        %1351 = vmatprep.subr.bf16.mxu0 0
        %1352 = vmatpush1.bf16.msra.mxu0 0
        %1353 = vmatprep.subr.bf16.mxu0 0
        %1354 = vmatpush1.bf16.msra.mxu0 0
        %1355 = vmatprep.subr.bf16.mxu0 0
        %1356 = vmatpush1.bf16.msra.mxu0 0
        %1357 = vmatprep.mubr.bf16.mxu0 0
        %1358 = vmatmul.mubr.bf16.gmra.mrb[0].mxu0 %v1323
        %v1359 = vpop.f32.mrb[0].mxu0
        %v1360 = vadd.f32 0.0, %v1359
        %v1361 = vpop.f32.mrb[0].mxu0
        %v1362 = vpop.f32.mrb[0].mxu0
        %v1363 = vpop.f32.mrb[0].mxu0
        %1364 = vdwg.mxu0
        %v1365 = vadd.f32 %v1319, %v1360
        %v1366 = vxor.u32 %v1365, 2147483648
        %v1367 = vmul.f32 %v1366, 1.442695
        %v1368 = vpow.pop %v1367
        %v1369 = vadd.f32 %v1368, 1.0
        %v1370 = vrcp.pop %v1369
        %v1371 = vmul.f32 1.0, %v1370
        %v1372 = vtanh.pop %v1365
        %v1373 = vmul.f32 %v1371, %v1219
        %1375 = vrot.lane.b32.xlu0 %v1372, 32
        %v1376 = vpop.permute.xlu0 %1375
        %v1378 = vmul.f32 %v1371, %v1376
        %1380 = vrot.lane.b32.xlu0 %v1378, 32
        %v1381 = vpop.permute.xlu0 %1380
        %v1383 = vadd.f32 %v1373, %v1381
        %v1384 = vtanh.pop %v1383
        %1386 = vrot.lane.b32.xlu0 %v1384, 32
        %v1387 = vpop.permute.xlu0 %1386
        %v1389 = vmul.f32 %v1371, %v1387
        %v1390 = vpack.c.bf16 %v1316, %v1316
        %v1392 = vunpack.c.l.b16 %v1390
        %v1393 = vpack.c.b16 %v1392, %v1392
        %1394 = vrot.lane.b32.xlu0 %v1393, 64
        %v1395 = vpop.permute.xlu0 %1394
        %s1397 = scalar_lea.vmem [#allocation4], 12
        %1398 = vst.msk [vmem:[%s1397] sm:$0xf] %vm904, %v1395
        %v1399 = vpack.c.bf16 %v1389, %v1389
        %v1401 = vunpack.c.l.b16 %v1399
        %v1402 = vpack.c.b16 %v1401, %v1401
        %1403 = vrot.lane.b32.xlu0 %v1402, 96
        %v1404 = vpop.permute.xlu0 %1403
        %s1406 = scalar_lea.vmem [#allocation4], 16
        %1407 = vst.msk [vmem:[%s1406] sm:$0xf] %vm914, %v1404
        %s1408 = scalar_lea.vmem [#allocation2], 16
        %v1409 = vld [vmem:[%s1408] sm:$0xf]
        %v1410 = vunpack.c.l.bf16 %v1409
        %1411 = vrot.lane.b32.xlu0 %v1390, 64
        %v1412 = vpop.permute.xlu0 %1411
        %v1414 = vsel %vm748, %v1412, 0
        %1416 = vmatprep.subr.bf16.mxu0 0
        %1417 = vmatpush1.bf16.msra.mxu0 %v744
        %1418 = vmatprep.subr.bf16.mxu0 0
        %1419 = vmatpush1.bf16.msra.mxu0 %v745
        %1420 = vmatprep.subr.bf16.mxu0 0
        %1421 = vmatpush1.bf16.msra.mxu0 0
        %1422 = vmatprep.subr.bf16.mxu0 0
        %1423 = vmatpush1.bf16.msra.mxu0 0
        %1424 = vmatprep.subr.bf16.mxu0 0
        %1425 = vmatpush1.bf16.msra.mxu0 0
        %1426 = vmatprep.subr.bf16.mxu0 0
        %1427 = vmatpush1.bf16.msra.mxu0 0
        %1428 = vmatprep.subr.bf16.mxu0 0
        %1429 = vmatpush1.bf16.msra.mxu0 0
        %1430 = vmatprep.subr.bf16.mxu0 0
        %1431 = vmatpush1.bf16.msra.mxu0 0
        %1432 = vmatprep.subr.bf16.mxu0 0
        %1433 = vmatpush1.bf16.msra.mxu0 0
        %1434 = vmatprep.subr.bf16.mxu0 0
        %1435 = vmatpush1.bf16.msra.mxu0 0
        %1436 = vmatprep.subr.bf16.mxu0 0
        %1437 = vmatpush1.bf16.msra.mxu0 0
        %1438 = vmatprep.subr.bf16.mxu0 0
        %1439 = vmatpush1.bf16.msra.mxu0 0
        %1440 = vmatprep.subr.bf16.mxu0 0
        %1441 = vmatpush1.bf16.msra.mxu0 0
        %1442 = vmatprep.subr.bf16.mxu0 0
        %1443 = vmatpush1.bf16.msra.mxu0 0
        %1444 = vmatprep.subr.bf16.mxu0 0
        %1445 = vmatpush1.bf16.msra.mxu0 0
        %1446 = vmatprep.subr.bf16.mxu0 0
        %1447 = vmatpush1.bf16.msra.mxu0 0
        %1448 = vmatprep.mubr.bf16.mxu0 0
        %1449 = vmatmul.mubr.bf16.gmra.mrb[0].mxu0 %v1414
        %v1450 = vpop.f32.mrb[0].mxu0
        %v1451 = vadd.f32 0.0, %v1450
        %v1452 = vpop.f32.mrb[0].mxu0
        %v1453 = vpop.f32.mrb[0].mxu0
        %v1454 = vpop.f32.mrb[0].mxu0
        %1455 = vdwg.mxu0
        %v1456 = vadd.f32 %v1410, %v1451
        %v1457 = vxor.u32 %v1456, 2147483648
        %v1458 = vmul.f32 %v1457, 1.442695
        %v1459 = vpow.pop %v1458
        %v1460 = vadd.f32 %v1459, 1.0
        %v1461 = vrcp.pop %v1460
        %v1462 = vmul.f32 1.0, %v1461
        %v1463 = vtanh.pop %v1456
        %v1464 = vmul.f32 %v1462, %v1310
        %1466 = vrot.lane.b32.xlu0 %v1463, 32
        %v1467 = vpop.permute.xlu0 %1466
        %v1469 = vmul.f32 %v1462, %v1467
        %1471 = vrot.lane.b32.xlu0 %v1469, 32
        %v1472 = vpop.permute.xlu0 %1471
        %v1474 = vadd.f32 %v1464, %v1472
        %v1475 = vtanh.pop %v1474
        %1477 = vrot.lane.b32.xlu0 %v1475, 32
        %v1478 = vpop.permute.xlu0 %1477
        %v1480 = vmul.f32 %v1462, %v1478
        %s1481 = scalar_lea.vmem [#allocation3], 12
        %v1482 = vld [vmem:[%s1481] sm:$0xf]
        %v1483 = vunpack.c.l.bf16 %v1482
        %1484 = vrot.lane.b32.xlu0 %v1399, 64
        %v1485 = vpop.permute.xlu0 %1484
        %v1487 = vsel %vm748, %v1485, 0
        %1489 = vmatprep.subr.bf16.mxu0 0
        %1490 = vmatpush1.bf16.msra.mxu0 %v828
        %1491 = vmatprep.subr.bf16.mxu0 0
        %1492 = vmatpush1.bf16.msra.mxu0 %v829
        %1493 = vmatprep.subr.bf16.mxu0 0
        %1494 = vmatpush1.bf16.msra.mxu0 0
        %1495 = vmatprep.subr.bf16.mxu0 0
        %1496 = vmatpush1.bf16.msra.mxu0 0
        %1497 = vmatprep.subr.bf16.mxu0 0
        %1498 = vmatpush1.bf16.msra.mxu0 0
        %1499 = vmatprep.subr.bf16.mxu0 0
        %1500 = vmatpush1.bf16.msra.mxu0 0
        %1501 = vmatprep.subr.bf16.mxu0 0
        %1502 = vmatpush1.bf16.msra.mxu0 0
        %1503 = vmatprep.subr.bf16.mxu0 0
        %1504 = vmatpush1.bf16.msra.mxu0 0
        %1505 = vmatprep.subr.bf16.mxu0 0
        %1506 = vmatpush1.bf16.msra.mxu0 0
        %1507 = vmatprep.subr.bf16.mxu0 0
        %1508 = vmatpush1.bf16.msra.mxu0 0
        %1509 = vmatprep.subr.bf16.mxu0 0
        %1510 = vmatpush1.bf16.msra.mxu0 0
        %1511 = vmatprep.subr.bf16.mxu0 0
        %1512 = vmatpush1.bf16.msra.mxu0 0
        %1513 = vmatprep.subr.bf16.mxu0 0
        %1514 = vmatpush1.bf16.msra.mxu0 0
        %1515 = vmatprep.subr.bf16.mxu0 0
        %1516 = vmatpush1.bf16.msra.mxu0 0
        %1517 = vmatprep.subr.bf16.mxu0 0
        %1518 = vmatpush1.bf16.msra.mxu0 0
        %1519 = vmatprep.subr.bf16.mxu0 0
        %1520 = vmatpush1.bf16.msra.mxu0 0
        %1521 = vmatprep.mubr.bf16.mxu0 0
        %1522 = vmatmul.mubr.bf16.gmra.mrb[0].mxu0 %v1487
        %v1523 = vpop.f32.mrb[0].mxu0
        %v1524 = vadd.f32 0.0, %v1523
        %v1525 = vpop.f32.mrb[0].mxu0
        %v1526 = vpop.f32.mrb[0].mxu0
        %v1527 = vpop.f32.mrb[0].mxu0
        %1528 = vdwg.mxu0
        %v1529 = vadd.f32 %v1483, %v1524
        %v1530 = vxor.u32 %v1529, 2147483648
        %v1531 = vmul.f32 %v1530, 1.442695
        %v1532 = vpow.pop %v1531
        %v1533 = vadd.f32 %v1532, 1.0
        %v1534 = vrcp.pop %v1533
        %v1535 = vmul.f32 1.0, %v1534
        %v1536 = vtanh.pop %v1529
        %v1537 = vmul.f32 %v1535, %v1383
        %1539 = vrot.lane.b32.xlu0 %v1536, 32
        %v1540 = vpop.permute.xlu0 %1539
        %v1542 = vmul.f32 %v1535, %v1540
        %1544 = vrot.lane.b32.xlu0 %v1542, 32
        %v1545 = vpop.permute.xlu0 %1544
        %v1547 = vadd.f32 %v1537, %v1545
        %v1548 = vtanh.pop %v1547
        %1550 = vrot.lane.b32.xlu0 %v1548, 32
        %v1551 = vpop.permute.xlu0 %1550
        %v1553 = vmul.f32 %v1535, %v1551
        %v1554 = vpack.c.bf16 %v1480, %v1480
        %v1556 = vunpack.c.l.b16 %v1554
        %v1557 = vpack.c.b16 %v1556, %v1556
        %1558 = vrot.lane.b32.xlu0 %v1557, 64
        %v1559 = vpop.permute.xlu0 %1558
        %1561 = vst.msk [vmem:[%s1406] sm:$0xf] %vm904, %v1559
        %v1562 = vpack.c.bf16 %v1553, %v1553
        %v1564 = vunpack.c.l.b16 %v1562
        %v1565 = vpack.c.b16 %v1564, %v1564
        %1566 = vrot.lane.b32.xlu0 %v1565, 96
        %v1567 = vpop.permute.xlu0 %1566
        %1569 = vst.msk [vmem:[%s1397] sm:$0xf] %vm914, %v1567
        %s1570 = scalar_lea.vmem [#allocation2], 20
        %v1571 = vld [vmem:[%s1570] sm:$0xf]
        %v1572 = vunpack.c.l.bf16 %v1571
        %1573 = vrot.lane.b32.xlu0 %v1554, 64
        %v1574 = vpop.permute.xlu0 %1573
        %v1576 = vsel %vm748, %v1574, 0
        %1578 = vmatprep.subr.bf16.mxu0 0
        %1579 = vmatpush1.bf16.msra.mxu0 %v744
        %1580 = vmatprep.subr.bf16.mxu0 0
        %1581 = vmatpush1.bf16.msra.mxu0 %v745
        %1582 = vmatprep.subr.bf16.mxu0 0
        %1583 = vmatpush1.bf16.msra.mxu0 0
        %1584 = vmatprep.subr.bf16.mxu0 0
        %1585 = vmatpush1.bf16.msra.mxu0 0
        %1586 = vmatprep.subr.bf16.mxu0 0
        %1587 = vmatpush1.bf16.msra.mxu0 0
        %1588 = vmatprep.subr.bf16.mxu0 0
        %1589 = vmatpush1.bf16.msra.mxu0 0
        %1590 = vmatprep.subr.bf16.mxu0 0
        %1591 = vmatpush1.bf16.msra.mxu0 0
        %1592 = vmatprep.subr.bf16.mxu0 0
        %1593 = vmatpush1.bf16.msra.mxu0 0
        %1594 = vmatprep.subr.bf16.mxu0 0
        %1595 = vmatpush1.bf16.msra.mxu0 0
        %1596 = vmatprep.subr.bf16.mxu0 0
        %1597 = vmatpush1.bf16.msra.mxu0 0
        %1598 = vmatprep.subr.bf16.mxu0 0
        %1599 = vmatpush1.bf16.msra.mxu0 0
        %1600 = vmatprep.subr.bf16.mxu0 0
        %1601 = vmatpush1.bf16.msra.mxu0 0
        %1602 = vmatprep.subr.bf16.mxu0 0
        %1603 = vmatpush1.bf16.msra.mxu0 0
        %1604 = vmatprep.subr.bf16.mxu0 0
        %1605 = vmatpush1.bf16.msra.mxu0 0
        %1606 = vmatprep.subr.bf16.mxu0 0
        %1607 = vmatpush1.bf16.msra.mxu0 0
        %1608 = vmatprep.subr.bf16.mxu0 0
        %1609 = vmatpush1.bf16.msra.mxu0 0
        %1610 = vmatprep.mubr.bf16.mxu0 0
        %1611 = vmatmul.mubr.bf16.gmra.mrb[0].mxu0 %v1576
        %v1612 = vpop.f32.mrb[0].mxu0
        %v1613 = vadd.f32 0.0, %v1612
        %v1614 = vpop.f32.mrb[0].mxu0
        %v1615 = vpop.f32.mrb[0].mxu0
        %v1616 = vpop.f32.mrb[0].mxu0
        %1617 = vdwg.mxu0
        %v1618 = vadd.f32 %v1572, %v1613
        %v1619 = vxor.u32 %v1618, 2147483648
        %v1620 = vmul.f32 %v1619, 1.442695
        %v1621 = vpow.pop %v1620
        %v1622 = vadd.f32 %v1621, 1.0
        %v1623 = vrcp.pop %v1622
        %v1624 = vmul.f32 1.0, %v1623
        %v1625 = vtanh.pop %v1618
        %v1626 = vmul.f32 %v1624, %v1474
        %1628 = vrot.lane.b32.xlu0 %v1625, 32
        %v1629 = vpop.permute.xlu0 %1628
        %v1631 = vmul.f32 %v1624, %v1629
        %1633 = vrot.lane.b32.xlu0 %v1631, 32
        %v1634 = vpop.permute.xlu0 %1633
        %v1636 = vadd.f32 %v1626, %v1634
        %v1637 = vtanh.pop %v1636
        %1639 = vrot.lane.b32.xlu0 %v1637, 32
        %v1640 = vpop.permute.xlu0 %1639
        %v1642 = vmul.f32 %v1624, %v1640
        %s1643 = scalar_lea.vmem [#allocation3], 8
        %v1644 = vld [vmem:[%s1643] sm:$0xf]
        %v1645 = vunpack.c.l.bf16 %v1644
        %1646 = vrot.lane.b32.xlu0 %v1562, 64
        %v1647 = vpop.permute.xlu0 %1646
        %v1649 = vsel %vm748, %v1647, 0
        %1651 = vmatprep.subr.bf16.mxu0 0
        %1652 = vmatpush1.bf16.msra.mxu0 %v828
        %1653 = vmatprep.subr.bf16.mxu0 0
        %1654 = vmatpush1.bf16.msra.mxu0 %v829
        %1655 = vmatprep.subr.bf16.mxu0 0
        %1656 = vmatpush1.bf16.msra.mxu0 0
        %1657 = vmatprep.subr.bf16.mxu0 0
        %1658 = vmatpush1.bf16.msra.mxu0 0
        %1659 = vmatprep.subr.bf16.mxu0 0
        %1660 = vmatpush1.bf16.msra.mxu0 0
        %1661 = vmatprep.subr.bf16.mxu0 0
        %1662 = vmatpush1.bf16.msra.mxu0 0
        %1663 = vmatprep.subr.bf16.mxu0 0
        %1664 = vmatpush1.bf16.msra.mxu0 0
        %1665 = vmatprep.subr.bf16.mxu0 0
        %1666 = vmatpush1.bf16.msra.mxu0 0
        %1667 = vmatprep.subr.bf16.mxu0 0
        %1668 = vmatpush1.bf16.msra.mxu0 0
        %1669 = vmatprep.subr.bf16.mxu0 0
        %1670 = vmatpush1.bf16.msra.mxu0 0
        %1671 = vmatprep.subr.bf16.mxu0 0
        %1672 = vmatpush1.bf16.msra.mxu0 0
        %1673 = vmatprep.subr.bf16.mxu0 0
        %1674 = vmatpush1.bf16.msra.mxu0 0
        %1675 = vmatprep.subr.bf16.mxu0 0
        %1676 = vmatpush1.bf16.msra.mxu0 0
        %1677 = vmatprep.subr.bf16.mxu0 0
        %1678 = vmatpush1.bf16.msra.mxu0 0
        %1679 = vmatprep.subr.bf16.mxu0 0
        %1680 = vmatpush1.bf16.msra.mxu0 0
        %1681 = vmatprep.subr.bf16.mxu0 0
        %1682 = vmatpush1.bf16.msra.mxu0 0
        %1683 = vmatprep.mubr.bf16.mxu0 0
        %1684 = vmatmul.mubr.bf16.gmra.mrb[0].mxu0 %v1649
        %v1685 = vpop.f32.mrb[0].mxu0
        %v1686 = vadd.f32 0.0, %v1685
        %v1687 = vpop.f32.mrb[0].mxu0
        %v1688 = vpop.f32.mrb[0].mxu0
        %v1689 = vpop.f32.mrb[0].mxu0
        %1690 = vdwg.mxu0
        %v1691 = vadd.f32 %v1645, %v1686
        %v1692 = vxor.u32 %v1691, 2147483648
        %v1693 = vmul.f32 %v1692, 1.442695
        %v1694 = vpow.pop %v1693
        %v1695 = vadd.f32 %v1694, 1.0
        %v1696 = vrcp.pop %v1695
        %v1697 = vmul.f32 1.0, %v1696
        %v1698 = vtanh.pop %v1691
        %v1699 = vmul.f32 %v1697, %v1547
        %1701 = vrot.lane.b32.xlu0 %v1698, 32
        %v1702 = vpop.permute.xlu0 %1701
        %v1704 = vmul.f32 %v1697, %v1702
        %1706 = vrot.lane.b32.xlu0 %v1704, 32
        %v1707 = vpop.permute.xlu0 %1706
        %v1709 = vadd.f32 %v1699, %v1707
        %v1710 = vtanh.pop %v1709
        %1712 = vrot.lane.b32.xlu0 %v1710, 32
        %v1713 = vpop.permute.xlu0 %1712
        %v1715 = vmul.f32 %v1697, %v1713
        %v1716 = vpack.c.bf16 %v1642, %v1642
        %v1718 = vunpack.c.l.b16 %v1716
        %v1719 = vpack.c.b16 %v1718, %v1718
        %1720 = vrot.lane.b32.xlu0 %v1719, 64
        %v1721 = vpop.permute.xlu0 %1720
        %1723 = vst.msk [vmem:[%s1242] sm:$0xf] %vm904, %v1721
        %v1724 = vpack.c.bf16 %v1715, %v1715
        %v1726 = vunpack.c.l.b16 %v1724
        %v1727 = vpack.c.b16 %v1726, %v1726
        %1728 = vrot.lane.b32.xlu0 %v1727, 96
        %v1729 = vpop.permute.xlu0 %1728
        %1731 = vst.msk [vmem:[%s1233] sm:$0xf] %vm914, %v1729
        %s1732 = scalar_lea.vmem [#allocation2], 24
        %v1733 = vld [vmem:[%s1732] sm:$0xf]
        %v1734 = vunpack.c.l.bf16 %v1733
        %1735 = vrot.lane.b32.xlu0 %v1716, 64
        %v1736 = vpop.permute.xlu0 %1735
        %v1738 = vsel %vm748, %v1736, 0
        %1740 = vmatprep.subr.bf16.mxu0 0
        %1741 = vmatpush1.bf16.msra.mxu0 %v744
        %1742 = vmatprep.subr.bf16.mxu0 0
        %1743 = vmatpush1.bf16.msra.mxu0 %v745
        %1744 = vmatprep.subr.bf16.mxu0 0
        %1745 = vmatpush1.bf16.msra.mxu0 0
        %1746 = vmatprep.subr.bf16.mxu0 0
        %1747 = vmatpush1.bf16.msra.mxu0 0
        %1748 = vmatprep.subr.bf16.mxu0 0
        %1749 = vmatpush1.bf16.msra.mxu0 0
        %1750 = vmatprep.subr.bf16.mxu0 0
        %1751 = vmatpush1.bf16.msra.mxu0 0
        %1752 = vmatprep.subr.bf16.mxu0 0
        %1753 = vmatpush1.bf16.msra.mxu0 0
        %1754 = vmatprep.subr.bf16.mxu0 0
        %1755 = vmatpush1.bf16.msra.mxu0 0
        %1756 = vmatprep.subr.bf16.mxu0 0
        %1757 = vmatpush1.bf16.msra.mxu0 0
        %1758 = vmatprep.subr.bf16.mxu0 0
        %1759 = vmatpush1.bf16.msra.mxu0 0
        %1760 = vmatprep.subr.bf16.mxu0 0
        %1761 = vmatpush1.bf16.msra.mxu0 0
        %1762 = vmatprep.subr.bf16.mxu0 0
        %1763 = vmatpush1.bf16.msra.mxu0 0
        %1764 = vmatprep.subr.bf16.mxu0 0
        %1765 = vmatpush1.bf16.msra.mxu0 0
        %1766 = vmatprep.subr.bf16.mxu0 0
        %1767 = vmatpush1.bf16.msra.mxu0 0
        %1768 = vmatprep.subr.bf16.mxu0 0
        %1769 = vmatpush1.bf16.msra.mxu0 0
        %1770 = vmatprep.subr.bf16.mxu0 0
        %1771 = vmatpush1.bf16.msra.mxu0 0
        %1772 = vmatprep.mubr.bf16.mxu0 0
        %1773 = vmatmul.mubr.bf16.gmra.mrb[0].mxu0 %v1738
        %v1774 = vpop.f32.mrb[0].mxu0
        %v1775 = vadd.f32 0.0, %v1774
        %v1776 = vpop.f32.mrb[0].mxu0
        %v1777 = vpop.f32.mrb[0].mxu0
        %v1778 = vpop.f32.mrb[0].mxu0
        %1779 = vdwg.mxu0
        %v1780 = vadd.f32 %v1734, %v1775
        %v1781 = vxor.u32 %v1780, 2147483648
        %v1782 = vmul.f32 %v1781, 1.442695
        %v1783 = vpow.pop %v1782
        %v1784 = vadd.f32 %v1783, 1.0
        %v1785 = vrcp.pop %v1784
        %v1786 = vmul.f32 1.0, %v1785
        %v1787 = vtanh.pop %v1780
        %v1788 = vmul.f32 %v1786, %v1636
        %1790 = vrot.lane.b32.xlu0 %v1787, 32
        %v1791 = vpop.permute.xlu0 %1790
        %v1793 = vmul.f32 %v1786, %v1791
        %1795 = vrot.lane.b32.xlu0 %v1793, 32
        %v1796 = vpop.permute.xlu0 %1795
        %v1798 = vadd.f32 %v1788, %v1796
        %v1799 = vtanh.pop %v1798
        %1801 = vrot.lane.b32.xlu0 %v1799, 32
        %v1802 = vpop.permute.xlu0 %1801
        %v1804 = vmul.f32 %v1786, %v1802
        %s1805 = scalar_lea.vmem [#allocation3], 4
        %v1806 = vld [vmem:[%s1805] sm:$0xf]
        %v1807 = vunpack.c.l.bf16 %v1806
        %1808 = vrot.lane.b32.xlu0 %v1724, 64
        %v1809 = vpop.permute.xlu0 %1808
        %v1811 = vsel %vm748, %v1809, 0
        %1813 = vmatprep.subr.bf16.mxu0 0
        %1814 = vmatpush1.bf16.msra.mxu0 %v828
        %1815 = vmatprep.subr.bf16.mxu0 0
        %1816 = vmatpush1.bf16.msra.mxu0 %v829
        %1817 = vmatprep.subr.bf16.mxu0 0
        %1818 = vmatpush1.bf16.msra.mxu0 0
        %1819 = vmatprep.subr.bf16.mxu0 0
        %1820 = vmatpush1.bf16.msra.mxu0 0
        %1821 = vmatprep.subr.bf16.mxu0 0
        %1822 = vmatpush1.bf16.msra.mxu0 0
        %1823 = vmatprep.subr.bf16.mxu0 0
        %1824 = vmatpush1.bf16.msra.mxu0 0
        %1825 = vmatprep.subr.bf16.mxu0 0
        %1826 = vmatpush1.bf16.msra.mxu0 0
        %1827 = vmatprep.subr.bf16.mxu0 0
        %1828 = vmatpush1.bf16.msra.mxu0 0
        %1829 = vmatprep.subr.bf16.mxu0 0
        %1830 = vmatpush1.bf16.msra.mxu0 0
        %1831 = vmatprep.subr.bf16.mxu0 0
        %1832 = vmatpush1.bf16.msra.mxu0 0
        %1833 = vmatprep.subr.bf16.mxu0 0
        %1834 = vmatpush1.bf16.msra.mxu0 0
        %1835 = vmatprep.subr.bf16.mxu0 0
        %1836 = vmatpush1.bf16.msra.mxu0 0
        %1837 = vmatprep.subr.bf16.mxu0 0
        %1838 = vmatpush1.bf16.msra.mxu0 0
        %1839 = vmatprep.subr.bf16.mxu0 0
        %1840 = vmatpush1.bf16.msra.mxu0 0
        %1841 = vmatprep.subr.bf16.mxu0 0
        %1842 = vmatpush1.bf16.msra.mxu0 0
        %1843 = vmatprep.subr.bf16.mxu0 0
        %1844 = vmatpush1.bf16.msra.mxu0 0
        %1845 = vmatprep.mubr.bf16.mxu0 0
        %1846 = vmatmul.mubr.bf16.gmra.mrb[0].mxu0 %v1811
        %v1847 = vpop.f32.mrb[0].mxu0
        %v1848 = vadd.f32 0.0, %v1847
        %v1849 = vpop.f32.mrb[0].mxu0
        %v1850 = vpop.f32.mrb[0].mxu0
        %v1851 = vpop.f32.mrb[0].mxu0
        %1852 = vdwg.mxu0
        %v1853 = vadd.f32 %v1807, %v1848
        %v1854 = vxor.u32 %v1853, 2147483648
        %v1855 = vmul.f32 %v1854, 1.442695
        %v1856 = vpow.pop %v1855
        %v1857 = vadd.f32 %v1856, 1.0
        %v1858 = vrcp.pop %v1857
        %v1859 = vmul.f32 1.0, %v1858
        %v1860 = vtanh.pop %v1853
        %v1861 = vmul.f32 %v1859, %v1709
        %1863 = vrot.lane.b32.xlu0 %v1860, 32
        %v1864 = vpop.permute.xlu0 %1863
        %v1866 = vmul.f32 %v1859, %v1864
        %1868 = vrot.lane.b32.xlu0 %v1866, 32
        %v1869 = vpop.permute.xlu0 %1868
        %v1871 = vadd.f32 %v1861, %v1869
        %v1872 = vtanh.pop %v1871
        %1874 = vrot.lane.b32.xlu0 %v1872, 32
        %v1875 = vpop.permute.xlu0 %1874
        %v1877 = vmul.f32 %v1859, %v1875
        %v1878 = vpack.c.bf16 %v1804, %v1804
        %v1880 = vunpack.c.l.b16 %v1878
        %v1881 = vpack.c.b16 %v1880, %v1880
        %1882 = vrot.lane.b32.xlu0 %v1881, 64
        %v1883 = vpop.permute.xlu0 %1882
        %1885 = vst.msk [vmem:[%s1078] sm:$0xf] %vm904, %v1883
        %v1886 = vpack.c.bf16 %v1877, %v1877
        %v1888 = vunpack.c.l.b16 %v1886
        %v1889 = vpack.c.b16 %v1888, %v1888
        %1890 = vrot.lane.b32.xlu0 %v1889, 96
        %v1891 = vpop.permute.xlu0 %1890
        %1893 = vst.msk [vmem:[%s1069] sm:$0xf] %vm914, %v1891
        %s1894 = scalar_lea.vmem [#allocation2], 28
        %v1895 = vld [vmem:[%s1894] sm:$0xf]
        %v1896 = vunpack.c.l.bf16 %v1895
        %1897 = vrot.lane.b32.xlu0 %v1878, 64
        %v1898 = vpop.permute.xlu0 %1897
        %v1900 = vsel %vm748, %v1898, 0
        %1902 = vmatprep.subr.bf16.mxu0 0
        %1903 = vmatpush1.bf16.msra.mxu0 %v744
        %1904 = vmatprep.subr.bf16.mxu0 0
        %1905 = vmatpush1.bf16.msra.mxu0 %v745
        %1906 = vmatprep.subr.bf16.mxu0 0
        %1907 = vmatpush1.bf16.msra.mxu0 0
        %1908 = vmatprep.subr.bf16.mxu0 0
        %1909 = vmatpush1.bf16.msra.mxu0 0
        %1910 = vmatprep.subr.bf16.mxu0 0
        %1911 = vmatpush1.bf16.msra.mxu0 0
        %1912 = vmatprep.subr.bf16.mxu0 0
        %1913 = vmatpush1.bf16.msra.mxu0 0
        %1914 = vmatprep.subr.bf16.mxu0 0
        %1915 = vmatpush1.bf16.msra.mxu0 0
        %1916 = vmatprep.subr.bf16.mxu0 0
        %1917 = vmatpush1.bf16.msra.mxu0 0
        %1918 = vmatprep.subr.bf16.mxu0 0
        %1919 = vmatpush1.bf16.msra.mxu0 0
        %1920 = vmatprep.subr.bf16.mxu0 0
        %1921 = vmatpush1.bf16.msra.mxu0 0
        %1922 = vmatprep.subr.bf16.mxu0 0
        %1923 = vmatpush1.bf16.msra.mxu0 0
        %1924 = vmatprep.subr.bf16.mxu0 0
        %1925 = vmatpush1.bf16.msra.mxu0 0
        %1926 = vmatprep.subr.bf16.mxu0 0
        %1927 = vmatpush1.bf16.msra.mxu0 0
        %1928 = vmatprep.subr.bf16.mxu0 0
        %1929 = vmatpush1.bf16.msra.mxu0 0
        %1930 = vmatprep.subr.bf16.mxu0 0
        %1931 = vmatpush1.bf16.msra.mxu0 0
        %1932 = vmatprep.subr.bf16.mxu0 0
        %1933 = vmatpush1.bf16.msra.mxu0 0
        %1934 = vmatprep.mubr.bf16.mxu0 0
        %1935 = vmatmul.mubr.bf16.gmra.mrb[0].mxu0 %v1900
        %v1936 = vpop.f32.mrb[0].mxu0
        %v1937 = vadd.f32 0.0, %v1936
        %v1938 = vpop.f32.mrb[0].mxu0
        %v1939 = vpop.f32.mrb[0].mxu0
        %v1940 = vpop.f32.mrb[0].mxu0
        %1941 = vdwg.mxu0
        %v1942 = vadd.f32 %v1896, %v1937
        %v1943 = vxor.u32 %v1942, 2147483648
        %v1944 = vmul.f32 %v1943, 1.442695
        %v1945 = vpow.pop %v1944
        %v1946 = vadd.f32 %v1945, 1.0
        %v1947 = vrcp.pop %v1946
        %v1948 = vmul.f32 1.0, %v1947
        %v1949 = vtanh.pop %v1942
        %v1950 = vmul.f32 %v1948, %v1798
        %1952 = vrot.lane.b32.xlu0 %v1949, 32
        %v1953 = vpop.permute.xlu0 %1952
        %v1955 = vmul.f32 %v1948, %v1953
        %1957 = vrot.lane.b32.xlu0 %v1955, 32
        %v1958 = vpop.permute.xlu0 %1957
        %v1960 = vadd.f32 %v1950, %v1958
        %v1961 = vtanh.pop %v1960
        %1963 = vrot.lane.b32.xlu0 %v1961, 32
        %v1964 = vpop.permute.xlu0 %1963
        %v1966 = vmul.f32 %v1948, %v1964
        %v1967 = vld [vmem:[#allocation3] sm:$0xf]
        %v1968 = vunpack.c.l.bf16 %v1967
        %1969 = vrot.lane.b32.xlu0 %v1886, 64
        %v1970 = vpop.permute.xlu0 %1969
        %v1972 = vsel %vm748, %v1970, 0
        %1974 = vmatprep.subr.bf16.mxu0 0
        %1975 = vmatpush1.bf16.msra.mxu0 %v828
        %1976 = vmatprep.subr.bf16.mxu0 0
        %1977 = vmatpush1.bf16.msra.mxu0 %v829
        %1978 = vmatprep.subr.bf16.mxu0 0
        %1979 = vmatpush1.bf16.msra.mxu0 0
        %1980 = vmatprep.subr.bf16.mxu0 0
        %1981 = vmatpush1.bf16.msra.mxu0 0
        %1982 = vmatprep.subr.bf16.mxu0 0
        %1983 = vmatpush1.bf16.msra.mxu0 0
        %1984 = vmatprep.subr.bf16.mxu0 0
        %1985 = vmatpush1.bf16.msra.mxu0 0
        %1986 = vmatprep.subr.bf16.mxu0 0
        %1987 = vmatpush1.bf16.msra.mxu0 0
        %1988 = vmatprep.subr.bf16.mxu0 0
        %1989 = vmatpush1.bf16.msra.mxu0 0
        %1990 = vmatprep.subr.bf16.mxu0 0
        %1991 = vmatpush1.bf16.msra.mxu0 0
        %1992 = vmatprep.subr.bf16.mxu0 0
        %1993 = vmatpush1.bf16.msra.mxu0 0
        %1994 = vmatprep.subr.bf16.mxu0 0
        %1995 = vmatpush1.bf16.msra.mxu0 0
        %1996 = vmatprep.subr.bf16.mxu0 0
        %1997 = vmatpush1.bf16.msra.mxu0 0
        %1998 = vmatprep.subr.bf16.mxu0 0
        %1999 = vmatpush1.bf16.msra.mxu0 0
        %2000 = vmatprep.subr.bf16.mxu0 0
        %2001 = vmatpush1.bf16.msra.mxu0 0
        %2002 = vmatprep.subr.bf16.mxu0 0
        %2003 = vmatpush1.bf16.msra.mxu0 0
        %2004 = vmatprep.subr.bf16.mxu0 0
        %2005 = vmatpush1.bf16.msra.mxu0 0
        %2006 = vmatprep.mubr.bf16.mxu0 0
        %2007 = vmatmul.mubr.bf16.gmra.mrb[0].mxu0 %v1972
        %v2008 = vpop.f32.mrb[0].mxu0
        %v2009 = vadd.f32 0.0, %v2008
        %v2010 = vpop.f32.mrb[0].mxu0
        %v2011 = vpop.f32.mrb[0].mxu0
        %v2012 = vpop.f32.mrb[0].mxu0
        %2013 = vdwg.mxu0
        %v2014 = vadd.f32 %v1968, %v2009
        %v2015 = vxor.u32 %v2014, 2147483648
        %v2016 = vmul.f32 %v2015, 1.442695
        %v2017 = vpow.pop %v2016
        %v2018 = vadd.f32 %v2017, 1.0
        %v2019 = vrcp.pop %v2018
        %v2020 = vmul.f32 1.0, %v2019
        %v2021 = vtanh.pop %v2014
        %v2022 = vmul.f32 %v2020, %v1871
        %2024 = vrot.lane.b32.xlu0 %v2021, 32
        %v2025 = vpop.permute.xlu0 %2024
        %v2027 = vmul.f32 %v2020, %v2025
        %2029 = vrot.lane.b32.xlu0 %v2027, 32
        %v2030 = vpop.permute.xlu0 %2029
        %v2032 = vadd.f32 %v2022, %v2030
        %v2033 = vtanh.pop %v2032
        %2035 = vrot.lane.b32.xlu0 %v2033, 32
        %v2036 = vpop.permute.xlu0 %2035
        %v2038 = vmul.f32 %v2020, %v2036
        %v2039 = vpack.c.bf16 %v1966, %v1966
        %v2041 = vunpack.c.l.b16 %v2039
        %v2042 = vpack.c.b16 %v2041, %v2041
        %2043 = vrot.lane.b32.xlu0 %v2042, 64
        %v2044 = vpop.permute.xlu0 %2043
        %2046 = vst.msk [vmem:[%s913] sm:$0xf] %vm904, %v2044
        %v2047 = vpack.c.bf16 %v2038, %v2038
        %v2049 = vunpack.c.l.b16 %v2047
        %v2050 = vpack.c.b16 %v2049, %v2049
        %2051 = vrot.lane.b32.xlu0 %v2050, 96
        %v2052 = vpop.permute.xlu0 %2051
        %2054 = vst.msk [vmem:[#allocation4] sm:$0xf] %vm914, %v2052
        %v2055 = vld [vmem:[#allocation4] sm:$0xf]
        %v2056 = vld [vmem:[#allocation4 + $0x4] sm:$0xf]
        %v2057 = vld [vmem:[#allocation4 + $0x8] sm:$0xf]
        %v2058 = vld [vmem:[#allocation4 + $0xc] sm:$0xf]
        %v2059 = vld [vmem:[#allocation4 + $0x10] sm:$0xf]
        %v2060 = vld [vmem:[#allocation4 + $0x14] sm:$0xf]
        %v2061 = vld [vmem:[#allocation4 + $0x18] sm:$0xf]
        %v2062 = vld [vmem:[#allocation4 + $0x1c] sm:$0xf]
        %v2063 = vld [vmem:[%s7] sm:$0xf]
        %v2064 = vld [vmem:[%s7 + $0x4] sm:$0xf]
        %v2065 = vld [vmem:[%s7 + $0x8] sm:$0xf]
        %v2066 = vld [vmem:[%s7 + $0xc] sm:$0xf]
        %v2067 = vld [vmem:[%s7 + $0x10] sm:$0xf]
        %v2068 = vld [vmem:[%s7 + $0x14] sm:$0xf]
        %v2069 = vld [vmem:[%s7 + $0x18] sm:$0xf]
        %v2070 = vld [vmem:[%s7 + $0x1c] sm:$0xf]
        %v2071 = vld [vmem:[%s8] sm:$0x1]
        %v2073 = vlaneseq
        %v2074 = vshrl.u32 %v2073, 7
        %v2075 = vsub.s32 0, %v2074
        %v2076 = vrot.slane %v2071, %v2075
        %v2086 = vunpack.c.l.b16 %v2055
        %v2087 = vunpack.c.l.b16 %v2056
        %v2088 = vunpack.c.l.b16 %v2057
        %v2089 = vunpack.c.l.b16 %v2058
        %v2090 = vunpack.c.l.b16 %v2059
        %v2091 = vunpack.c.l.b16 %v2060
        %v2092 = vunpack.c.l.b16 %v2061
        %v2093 = vunpack.c.l.b16 %v2062
        %v2094 = vpack.c.b16 %v2087, %v2086
        %v2095 = vpack.c.b16 %v2089, %v2088
        %v2096 = vpack.c.b16 %v2091, %v2090
        %v2097 = vpack.c.b16 %v2093, %v2092
        %v2106 = vunpack.c.l.b16 %v2063
        %v2107 = vunpack.c.l.b16 %v2064
        %v2108 = vunpack.c.l.b16 %v2065
        %v2109 = vunpack.c.l.b16 %v2066
        %v2110 = vunpack.c.l.b16 %v2067
        %v2111 = vunpack.c.l.b16 %v2068
        %v2112 = vunpack.c.l.b16 %v2069
        %v2113 = vunpack.c.l.b16 %v2070
        %v2114 = vpack.c.b16 %v2107, %v2106
        %v2115 = vpack.c.b16 %v2109, %v2108
        %v2116 = vpack.c.b16 %v2111, %v2110
        %v2117 = vpack.c.b16 %v2113, %v2112
        %v2123 = vsel %vm464, %v2094, 0
        %v2126 = vsel %vm464, %v2095, 0
        %v2129 = vsel %vm464, %v2096, 0
        %v2132 = vsel %vm464, %v2097, 0
        %2134 = vmatprep.subr.bf16.mxu0 0
        %2135 = vmatpush1.bf16.msra.mxu0 %v2114
        %2136 = vmatprep.subr.bf16.mxu0 0
        %2137 = vmatpush1.bf16.msra.mxu0 %v2115
        %2138 = vmatprep.subr.bf16.mxu0 0
        %2139 = vmatpush1.bf16.msra.mxu0 %v2116
        %2140 = vmatprep.subr.bf16.mxu0 0
        %2141 = vmatpush1.bf16.msra.mxu0 %v2117
        %2142 = vmatprep.subr.bf16.mxu0 0
        %2143 = vmatpush1.bf16.msra.mxu0 0
        %2144 = vmatprep.subr.bf16.mxu0 0
        %2145 = vmatpush1.bf16.msra.mxu0 0
        %2146 = vmatprep.subr.bf16.mxu0 0
        %2147 = vmatpush1.bf16.msra.mxu0 0
        %2148 = vmatprep.subr.bf16.mxu0 0
        %2149 = vmatpush1.bf16.msra.mxu0 0
        %2150 = vmatprep.subr.bf16.mxu0 0
        %2151 = vmatpush1.bf16.msra.mxu0 0
        %2152 = vmatprep.subr.bf16.mxu0 0
        %2153 = vmatpush1.bf16.msra.mxu0 0
        %2154 = vmatprep.subr.bf16.mxu0 0
        %2155 = vmatpush1.bf16.msra.mxu0 0
        %2156 = vmatprep.subr.bf16.mxu0 0
        %2157 = vmatpush1.bf16.msra.mxu0 0
        %2158 = vmatprep.subr.bf16.mxu0 0
        %2159 = vmatpush1.bf16.msra.mxu0 0
        %2160 = vmatprep.subr.bf16.mxu0 0
        %2161 = vmatpush1.bf16.msra.mxu0 0
        %2162 = vmatprep.subr.bf16.mxu0 0
        %2163 = vmatpush1.bf16.msra.mxu0 0
        %2164 = vmatprep.subr.bf16.mxu0 0
        %2165 = vmatpush1.bf16.msra.mxu0 0
        %2166 = vmatprep.mubr.bf16.mxu0 0
        %2167 = vmatmul.mubr.bf16.gmra.mrb[0].mxu0 %v2123
        %v2168 = vpop.f32.mrb[0].mxu0
        %v2169 = vadd.f32 %v2076, %v2168
        %v2170 = vpop.f32.mrb[0].mxu0
        %v2171 = vpop.f32.mrb[0].mxu0
        %v2172 = vadd.f32 %v2076, %v2171
        %v2173 = vpop.f32.mrb[0].mxu0
        %2174 = vmatprep.mubr.bf16.mxu0 0
        %2175 = vmatmul.mubr.bf16.gmra.mrb[0].mxu0 %v2126
        %v2176 = vpop.f32.mrb[0].mxu0
        %v2177 = vadd.f32 %v2076, %v2176
        %v2178 = vpop.f32.mrb[0].mxu0
        %v2179 = vpop.f32.mrb[0].mxu0
        %v2180 = vadd.f32 %v2076, %v2179
        %v2181 = vpop.f32.mrb[0].mxu0
        %2182 = vmatprep.mubr.bf16.mxu0 0
        %2183 = vmatmul.mubr.bf16.gmra.mrb[0].mxu0 %v2129
        %v2184 = vpop.f32.mrb[0].mxu0
        %v2185 = vadd.f32 %v2076, %v2184
        %v2186 = vpop.f32.mrb[0].mxu0
        %v2187 = vpop.f32.mrb[0].mxu0
        %v2188 = vadd.f32 %v2076, %v2187
        %v2189 = vpop.f32.mrb[0].mxu0
        %2190 = vmatprep.mubr.bf16.mxu0 0
        %2191 = vmatmul.mubr.bf16.gmra.mrb[0].mxu0 %v2132
        %v2192 = vpop.f32.mrb[0].mxu0
        %v2193 = vadd.f32 %v2076, %v2192
        %v2194 = vpop.f32.mrb[0].mxu0
        %v2195 = vpop.f32.mrb[0].mxu0
        %v2196 = vadd.f32 %v2076, %v2195
        %v2197 = vpop.f32.mrb[0].mxu0
        %2198 = vdwg.mxu0
        %2199 = vst [vmem:[%s395] sm:$0xff] %v2169
        %2200 = vst [vmem:[%s395 + $0x8] sm:$0xff] %v2172
        %2201 = vst [vmem:[%s395 + $0x10] sm:$0xff] %v2177
        %2202 = vst [vmem:[%s395 + $0x18] sm:$0xff] %v2180
        %2203 = vst [vmem:[%s395 + $0x20] sm:$0xff] %v2185
        %2204 = vst [vmem:[%s395 + $0x28] sm:$0xff] %v2188
        %2205 = vst [vmem:[%s395 + $0x30] sm:$0xff] %v2193
        %2206 = vst [vmem:[%s395 + $0x38] sm:$0xff] %v2196
        %s2207 = sand.u32 %s222, 1
        %s2208 = sand.u32 %s222, 1
        %s2209 = smul.addr %s2208, 64
        %s2210 = scalar_lea.vmem [#allocation6], %s2209
        // Predicated region
        $region98: #{classifier_forward.1} parent=92 // pred_check
          %p2211 = pneg %p232
        $region99: #{classifier_forward.1} parent=92 // pred_check_branch
          %2213 = sbr.rel (%p2211) target = $region101
        $region100: #{classifier_forward.1} parent=92 // pred_region
          %s2214 = smul.addr %s20, 8
          %s2215 = scalar_lea.vmem %s9, %s2214
          // Predicated region
          $region102: #{classifier_forward.1} parent=100 // pred_check
            _
          $region103: #{classifier_forward.1} parent=100 // pred_check_branch
            %2217 = sbr.rel (0) target = $region105
          $region104: #{classifier_forward.1} parent=100 // pred_region
            // Predicated region
            $region106: #{classifier_forward.1} parent=104 // pred_check
              _
            $region107: #{classifier_forward.1} parent=104 // pred_check_branch
              %2219 = sbr.rel (0) target = $region109
            $region108: #{classifier_forward.1} parent=104 // pred_region
              // Predicated region
              $region121: #{classifier_forward.1} parent=108 // pred_check
                _
              $region122: #{classifier_forward.1} parent=108 // pred_check_branch
                %2248 = sbr.rel (0) target = $region124
              $region123: #{classifier_forward.1} parent=108 // pred_region
                loop: start=0, step=1, limit=1
                $region125: #{classifier_forward.1} parent=123 // loop_pre_header
                  _
                $region126: #{classifier_forward.1} parent=123 // loop_header
                  %s2250 = sphi 0, %s2254
                  %p2251 = scmp.ge.s32.totalorder %s2250, 1
                  %s2255 = sphi %s2210, %s2210
                  %s2256 = sphi %s2215, %s2215
                $region127: #{classifier_forward.1} parent=123 // loop_header_branch
                  %2253 = sbr.rel (%p2251) target = $region131
                $region128: #{classifier_forward.1} parent=123 // loop_body
                  %v2257 = vld [vmem:[%s2255] sm:$0xff]
                  %2258 = vst [vmem:[%s2256] sm:$0xff] %v2257
                  %v2259 = vld [vmem:[%s2255 + $0x8] sm:$0xff]
                  %2260 = vst [vmem:[%s2256 + $0x10] sm:$0xff] %v2259
                  %v2261 = vld [vmem:[%s2255 + $0x10] sm:$0xff]
                  %2262 = vst [vmem:[%s2256 + $0x20] sm:$0xff] %v2261
                  %v2263 = vld [vmem:[%s2255 + $0x18] sm:$0xff]
                  %2264 = vst [vmem:[%s2256 + $0x30] sm:$0xff] %v2263
                  %v2265 = vld [vmem:[%s2255 + $0x20] sm:$0xff]
                  %2266 = vst [vmem:[%s2256 + $0x40] sm:$0xff] %v2265
                  %v2267 = vld [vmem:[%s2255 + $0x28] sm:$0xff]
                  %2268 = vst [vmem:[%s2256 + $0x50] sm:$0xff] %v2267
                  %v2269 = vld [vmem:[%s2255 + $0x30] sm:$0xff]
                  %2270 = vst [vmem:[%s2256 + $0x60] sm:$0xff] %v2269
                  %v2271 = vld [vmem:[%s2255 + $0x38] sm:$0xff]
                  %2272 = vst [vmem:[%s2256 + $0x70] sm:$0xff] %v2271
                $region129: #{classifier_forward.1} parent=123 // loop_footer
                  %s2254 = sadd.s32 1, %s2250
                $region130: #{classifier_forward.1} parent=123 // loop_footer_branch
                  %2249 = sbr.rel target = $region126
                $region131: #{classifier_forward.1} parent=123 // loop_exit
                  _
              $region124: #{classifier_forward.1} parent=108 // pred_fallthru
                _
              // Predicated region
              $region132: #{classifier_forward.1} parent=108 // pred_check
                _
              $region133: #{classifier_forward.1} parent=108 // pred_check_branch
                %2274 = sbr.rel target = $region135
              $region134: #{classifier_forward.1} parent=108 // pred_region
                _
              $region135: #{classifier_forward.1} parent=108 // pred_fallthru
                _
            $region109: #{classifier_forward.1} parent=104 // pred_fallthru
              _
            // Predicated region
            $region110: #{classifier_forward.1} parent=104 // pred_check
              _
            $region111: #{classifier_forward.1} parent=104 // pred_check_branch
              %2221 = sbr.rel target = $region113
            $region112: #{classifier_forward.1} parent=104 // pred_region
              loop: start=0, step=1, limit=1
              $region114: #{classifier_forward.1} parent=112 // loop_pre_header
                _
              $region115: #{classifier_forward.1} parent=112 // loop_header
                %s2224 = sphi 0, %s2228
                %p2225 = scmp.ge.s32.totalorder %s2224, 1
                %s2229 = sphi %s2210, %s2210
                %s2230 = sphi %s2215, %s2215
              $region116: #{classifier_forward.1} parent=112 // loop_header_branch
                %2227 = sbr.rel (%p2225) target = $region120
              $region117: #{classifier_forward.1} parent=112 // loop_body
                %v2231 = vld [vmem:[%s2229] sm:$0xff]
                %2232 = vst [vmem:[%s2230] sm:$0xff] %v2231
                %v2233 = vld [vmem:[%s2229 + $0x8] sm:$0xff]
                %2234 = vst [vmem:[%s2230 + $0x10] sm:$0xff] %v2233
                %v2235 = vld [vmem:[%s2229 + $0x10] sm:$0xff]
                %2236 = vst [vmem:[%s2230 + $0x20] sm:$0xff] %v2235
                %v2237 = vld [vmem:[%s2229 + $0x18] sm:$0xff]
                %2238 = vst [vmem:[%s2230 + $0x30] sm:$0xff] %v2237
                %v2239 = vld [vmem:[%s2229 + $0x20] sm:$0xff]
                %2240 = vst [vmem:[%s2230 + $0x40] sm:$0xff] %v2239
                %v2241 = vld [vmem:[%s2229 + $0x28] sm:$0xff]
                %2242 = vst [vmem:[%s2230 + $0x50] sm:$0xff] %v2241
                %v2243 = vld [vmem:[%s2229 + $0x30] sm:$0xff]
                %2244 = vst [vmem:[%s2230 + $0x60] sm:$0xff] %v2243
                %v2245 = vld [vmem:[%s2229 + $0x38] sm:$0xff]
                %2246 = vst [vmem:[%s2230 + $0x70] sm:$0xff] %v2245
              $region118: #{classifier_forward.1} parent=112 // loop_footer
                %s2228 = sadd.s32 1, %s2224
              $region119: #{classifier_forward.1} parent=112 // loop_footer_branch
                %2223 = sbr.rel target = $region115
              $region120: #{classifier_forward.1} parent=112 // loop_exit
                _
            $region113: #{classifier_forward.1} parent=104 // pred_fallthru
              _
          $region105: #{classifier_forward.1} parent=100 // pred_fallthru
            _
          %2275 = vnop
        $region101: #{classifier_forward.1} parent=92 // pred_fallthru
          _
      $region93: #{classifier_forward.1} parent=5 // pred_fallthru
        _
      %p2276 = scmp.le.s32.totalorder 2, %s15
      // Predicated region
      $region136: #{classifier_forward.1} parent=5 // pred_check
        %p2277 = pneg %p2276
      $region137: #{classifier_forward.1} parent=5 // pred_check_branch
        %2279 = sbr.rel (%p2277) target = $region139
      $region138: #{classifier_forward.1} parent=5 // pred_region
        %s2280 = ssub.s32 %s15, 2
        // Predicated region
        $region140: #{classifier_forward.1} parent=138 // pred_check
          %p2281 = pneg %p238
        $region141: #{classifier_forward.1} parent=138 // pred_check_branch
          %2283 = sbr.rel (%p2281) target = $region143
        $region142: #{classifier_forward.1} parent=138 // pred_region
          %s2284 = sand.u32 %s223, 1
          %s2285 = sand.u32 %s223, 1
          %s2286 = smul.addr %s2285, 64
          %s2287 = scalar_lea.vmem [#allocation6], %s2286
        $region143: #{classifier_forward.1} parent=138 // pred_fallthru
          _
      $region139: #{classifier_forward.1} parent=5 // pred_fallthru
        _
    $region6: #{classifier_forward.1} parent=1 // loop_footer
      %s19 = sadd.s32 1, %s15
    $region7: #{classifier_forward.1} parent=1 // loop_footer_branch
      %14 = sbr.rel target = $region3
    $region8: #{classifier_forward.1} parent=1 // loop_exit
      _

</llo_original>
